<compile_context>
chip_gen: v6e
topology: v6e:2x2x1
jax: 0.10.0
libtpu: 0.0.40
codegen_flags: <defaults>
</compile_context>

<pallas_src>
import functools

import numpy as np

import jax
import jax.numpy as jnp
from jax.experimental import pallas as pl
from jax.experimental.pallas import tpu as pltpu

N_PAD = 128  # lane-dense padded width of the final logits (sliced to 10 outside)
BB_CAP = 16  # batch-block cap: keeps O(bb^2) pool selectors / VMEM modest


# ----------------------------------------------------------------------------
# Host-side parameter packing (done once, outside the jitted forward)
# ----------------------------------------------------------------------------
def _banded_conv_mats(w_oihw, w_in):
    """Per-kernel-row matrices M[kh] of shape (W_in*Cin, W_out*Cout).

    With activations laid out as rows=(b, h) and cols=(w*Cin + c),
    slab(kh) @ M[kh] accumulates the valid-conv contribution of kernel row kh.
    """
    w = np.asarray(w_oihw, dtype=np.float32)
    o_ch, c_ch, kh_sz, kw_sz = w.shape
    w_out = w_in - kw_sz + 1
    mats = np.zeros((kh_sz, w_in * c_ch, w_out * o_ch), dtype=np.float32)
    for kh in range(kh_sz):
        for kw in range(kw_sz):
            blk = w[:, :, kh, kw].T                      # (Cin, Cout)
            for wq in range(w_out):
                r0 = (wq + kw) * c_ch
                c0 = wq * o_ch
                mats[kh, r0:r0 + c_ch, c0:c0 + o_ch] = blk
    return jnp.asarray(mats)


def _col_pool_selectors(w_in, c):
    """0/1 matrices implementing the column half of a 2x2/stride-2 max-pool."""
    w_out = w_in // 2
    ew = np.zeros((w_in * c, w_out * c), np.float32)
    ow = np.zeros((w_in * c, w_out * c), np.float32)
    for wq in range(w_out):
        for ch in range(c):
            ew[(2 * wq) * c + ch, wq * c + ch] = 1.0
            ow[(2 * wq + 1) * c + ch, wq * c + ch] = 1.0
    return jnp.asarray(ew), jnp.asarray(ow)


@functools.lru_cache(maxsize=None)
def _row_pool_selectors(bb, h_in, h_out, h_major):
    """Block-diagonal 0/1 selectors (bb*h_out, bb*h_in): pick even/odd valid
    conv rows per image (also discarding invalid rows h >= 2*h_out).

    Output row order is b*h_out + q if not h_major, else q*bb + b (the latter
    makes each pooled-row group contiguous, which fc1 consumes directly).
    """
    eh = np.zeros((bb * h_out, bb * h_in), np.float32)
    oh = np.zeros((bb * h_out, bb * h_in), np.float32)
    for b in range(bb):
        for q in range(h_out):
            r = q * bb + b if h_major else b * h_out + q
            eh[r, b * h_in + 2 * q] = 1.0
            oh[r, b * h_in + 2 * q + 1] = 1.0
    return jnp.asarray(eh), jnp.asarray(oh)


def pack_params(params):
    """Precompute the batch-independent kernel-friendly weight forms (exact)."""
    p = {}
    # conv1: 3->6, input W=32 -> conv width 28
    p["m1"] = _banded_conv_mats(params["conv1_w"], 32)            # (5, 96, 168)
    p["b1"] = jnp.tile(params["conv1_b"], 28).reshape(1, 28 * 6)  # cols = w*6+o
    p["ew1"], p["ow1"] = _col_pool_selectors(28, 6)               # (168, 84)
    # conv2: 6->16, input W=14 -> conv width 10
    p["m2"] = _banded_conv_mats(params["conv2_w"], 14)            # (5, 84, 160)
    p["b2"] = jnp.tile(params["conv2_b"], 10).reshape(1, 10 * 16)
    p["ew2"], p["ow2"] = _col_pool_selectors(10, 16)              # (160, 80)
    # fc1: permute rows so it consumes the in-kernel (w*16 + c) layout per
    # pooled row h; matches PyTorch x.view(-1, 400) flat index c*25 + h*5 + w.
    w1 = np.asarray(params["fc1_w"], np.float32)                  # (120, 400)
    w1p = w1.reshape(120, 16, 5, 5).transpose(2, 3, 1, 0).reshape(5, 80, 120)
    p["w1p"] = jnp.asarray(w1p)                                   # (5, 80, 120)
    p["fb1"] = params["fc1_b"].reshape(1, 120)
    # fc2
    p["w2"] = params["fc2_w"].T                                    # (120, 84)
    p["fb2"] = params["fc2_b"].reshape(1, 84)
    # fc3: zero-pad N 10 -> 128 so the only HBM store is lane-dense.
    w3 = np.zeros((84, N_PAD), np.float32)
    w3[:, :10] = np.asarray(params["fc3_w"], np.float32).T
    b3 = np.zeros((1, N_PAD), np.float32)
    b3[0, :10] = np.asarray(params["fc3_b"], np.float32)
    p["w3p"] = jnp.asarray(w3)
    p["fb3"] = jnp.asarray(b3)
    return p


# ----------------------------------------------------------------------------
# The single fused Pallas kernel (one whole batch block per grid step)
# ----------------------------------------------------------------------------
def _lenet_kernel(x_ref, m1_ref, b1_ref, eh1_ref, oh1_ref, ew1_ref, ow1_ref,
                  m2_ref, b2_ref, eh2_ref, oh2_ref, ew2_ref, ow2_ref,
                  w1p_ref, fb1_ref, w2_ref, fb2_ref, w3_ref, fb3_ref,
                  out_ref, xs_ref, p1s_ref, p2_ref, *, bb):
    f32 = jnp.float32
    r1 = bb * 32          # conv1 slab rows (per-image H=32)
    r2 = bb * 14          # conv2 slab rows (per-image H=14)

    # Stage the input block into a zero-padded scratch so all 5 kh-shifted
    # slabs are in-bounds reads (never OOB; pad rows are finite zeros and the
    # block-diagonal row selectors give them zero weight).
    xs_ref[pl.ds(0, r1), :] = x_ref[...]
    xs_ref[pl.ds(r1, 8), :] = jnp.zeros((8, 96), f32)

    # ---- conv1 (3->6, 5x5, valid) over the whole batch block: 5 banded matmuls
    acc1 = jnp.dot(xs_ref[pl.ds(0, r1), :], m1_ref[0], preferred_element_type=f32)
    for kh in range(1, 5):
        acc1 += jnp.dot(xs_ref[pl.ds(kh, r1), :], m1_ref[kh],
                        preferred_element_type=f32)
    acc1 = jnp.maximum(acc1 + b1_ref[...], 0.0)                    # (bb*32, 168)
    # fused 2x2 max-pool: block-diagonal row selection+pool, then column pool
    hm1 = jnp.maximum(jnp.dot(eh1_ref[...], acc1, preferred_element_type=f32),
                      jnp.dot(oh1_ref[...], acc1, preferred_element_type=f32))
    p1 = jnp.maximum(jnp.dot(hm1, ew1_ref[...], preferred_element_type=f32),
                     jnp.dot(hm1, ow1_ref[...], preferred_element_type=f32))
    # p1: (bb*14, 84), rows = b*14 + h, cols = w*6 + c

    # ---- conv2 (6->16, 5x5) + relu + pool, same batched scheme
    p1s_ref[pl.ds(0, r2), :] = p1
    p1s_ref[pl.ds(r2, 8), :] = jnp.zeros((8, 84), f32)
    acc2 = jnp.dot(p1s_ref[pl.ds(0, r2), :], m2_ref[0], preferred_element_type=f32)
    for kh in range(1, 5):
        acc2 += jnp.dot(p1s_ref[pl.ds(kh, r2), :], m2_ref[kh],
                        preferred_element_type=f32)
    acc2 = jnp.maximum(acc2 + b2_ref[...], 0.0)                    # (bb*14, 160)
    hm2 = jnp.maximum(jnp.dot(eh2_ref[...], acc2, preferred_element_type=f32),
                      jnp.dot(oh2_ref[...], acc2, preferred_element_type=f32))
    p2 = jnp.maximum(jnp.dot(hm2, ew2_ref[...], preferred_element_type=f32),
                     jnp.dot(hm2, ow2_ref[...], preferred_element_type=f32))
    p2_ref[...] = p2          # (bb*5, 80), rows = h*bb + b, cols = w*16 + c

    # ---- fc1 (400 -> 120): 5 batched matmuls (M = bb), one per pooled row h
    y1 = jnp.dot(p2_ref[pl.ds(0, bb), :], w1p_ref[0], preferred_element_type=f32)
    for h in range(1, 5):
        y1 += jnp.dot(p2_ref[pl.ds(h * bb, bb), :], w1p_ref[h],
                      preferred_element_type=f32)
    y1 = jnp.maximum(y1 + fb1_ref[...], 0.0)                       # (bb, 120)

    # ---- fc2 -> fc3 on the whole batch block; single lane-dense store
    y2 = jnp.maximum(jnp.dot(y1, w2_ref[...], preferred_element_type=f32)
                     + fb2_ref[...], 0.0)                          # (bb, 84)
    out_ref[0] = (jnp.dot(y2, w3_ref[...], preferred_element_type=f32)
                  + fb3_ref[...])                                  # (bb, 128)


def _full_spec(arr):
    nd = arr.ndim
    return pl.BlockSpec(arr.shape, lambda i: (0,) * nd)


def _pick_bb(batch):
    """Largest divisor of `batch` <= BB_CAP, preferring >= 2 grid steps
    (so the 'parallel' batch axis can shard across v7x's two TensorCores)."""
    divs = [d for d in range(1, min(batch, BB_CAP) + 1) if batch % d == 0]
    two_step = [d for d in divs if batch // d >= 2]
    return max(two_step) if two_step else max(divs)


def net_forward_pallas(packed, x_nchw):
    B = x_nchw.shape[0]
    bb = _pick_bb(B)
    G = B // bb

    # Batch-dependent block-diagonal pool/row selectors (trace-time constants).
    eh1, oh1 = _row_pool_selectors(bb, 32, 14, False)   # conv1: rows b*14 + h
    eh2, oh2 = _row_pool_selectors(bb, 14, 5, True)     # conv2: rows h*bb + b

    # NHWC then flatten to the (b*h, w*c) 2-D layout (input plumbing only).
    # TODO(synk): for large B accept NHWC upstream to skip this extra HBM pass.
    x2d = jnp.transpose(x_nchw, (0, 2, 3, 1)).reshape(B * 32, 32 * 3)
    x2d = x2d.astype(jnp.float32)

    weights = [packed["m1"], packed["b1"], eh1, oh1, packed["ew1"], packed["ow1"],
               packed["m2"], packed["b2"], eh2, oh2, packed["ew2"], packed["ow2"],
               packed["w1p"], packed["fb1"], packed["w2"], packed["fb2"],
               packed["w3p"], packed["fb3"]]

    in_specs = [pl.BlockSpec((bb * 32, 96), lambda i: (i, 0))]
    in_specs += [_full_spec(w) for w in weights]

    out = pl.pallas_call(
        functools.partial(_lenet_kernel, bb=bb),
        out_shape=jax.ShapeDtypeStruct((G, bb, N_PAD), jnp.float32),
        grid=(G,),
        in_specs=in_specs,
        out_specs=pl.BlockSpec((1, bb, N_PAD), lambda i: (i, 0, 0)),
        scratch_shapes=[
            pltpu.VMEM((bb * 32 + 8, 96), jnp.float32),   # zero-padded input slab
            pltpu.VMEM((bb * 14 + 8, 84), jnp.float32),   # zero-padded pool1 slab
            pltpu.VMEM((bb * 5, 80), jnp.float32),        # pool2 activations
        ],
        compiler_params=pltpu.CompilerParams(
            dimension_semantics=("parallel",)),
    )(x2d, *weights)
    return out.reshape(B, N_PAD)[:, :10]


# ----------------------------------------------------------------------------
# Pure-JAX reference (matches the PyTorch module) and parameter init
# ----------------------------------------------------------------------------
def net_forward_ref(params, x_nchw):
    def conv(x, w, b):
        y = jax.lax.conv_general_dilated(
            x, w, window_strides=(1, 1), padding="VALID",
            dimension_numbers=("NCHW", "OIHW", "NCHW"))
        return jax.nn.relu(y + b[None, :, None, None])

    def pool(x):
        return jax.lax.reduce_window(
            x, -jnp.inf, jax.lax.max, (1, 1, 2, 2), (1, 1, 2, 2), "VALID")

    x = pool(conv(x_nchw, params["conv1_w"], params["conv1_b"]))
    x = pool(conv(x, params["conv2_w"], params["conv2_b"]))
    x = x.reshape(x.shape[0], -1)
    x = jax.nn.relu(x @ params["fc1_w"].T + params["fc1_b"])
    x = jax.nn.relu(x @ params["fc2_w"].T + params["fc2_b"])
    return x @ params["fc3_w"].T + params["fc3_b"]


def init_params(key):
    ks = jax.random.split(key, 10)
    s = 0.1
    return {
        "conv1_w": s * jax.random.normal(ks[0], (6, 3, 5, 5), jnp.float32),
        "conv1_b": s * jax.random.normal(ks[1], (6,), jnp.float32),
        "conv2_w": s * jax.random.normal(ks[2], (16, 6, 5, 5), jnp.float32),
        "conv2_b": s * jax.random.normal(ks[3], (16,), jnp.float32),
        "fc1_w": s * jax.random.normal(ks[4], (120, 400), jnp.float32),
        "fc1_b": s * jax.random.normal(ks[5], (120,), jnp.float32),
        "fc2_w": s * jax.random.normal(ks[6], (84, 120), jnp.float32),
        "fc2_b": s * jax.random.normal(ks[7], (84,), jnp.float32),
        "fc3_w": s * jax.random.normal(ks[8], (10, 84), jnp.float32),
        "fc3_b": s * jax.random.normal(ks[9], (10,), jnp.float32),
    }


if __name__ == "__main__":
    key = jax.random.PRNGKey(0)
    kx, kp = jax.random.split(key)
    params = init_params(kp)
    packed = pack_params(params)          # one-time host-side weight packing

    # Spatial size 32 is dictated by the fc1 = Linear(16*5*5, 120) layer.
    B = 8                                  # small; gives bb=4, grid=(2,)
    x = jax.random.normal(kx, (B, 3, 32, 32), jnp.float32)

    fwd = jax.jit(net_forward_pallas)
    out = jax.block_until_ready(fwd(packed, x))

    ref = jax.block_until_ready(net_forward_ref(params, x))
    assert out.shape == (B, 10), out.shape
    assert jnp.allclose(out, ref, atol=1e-3, rtol=1e-3), (
        f"max abs diff {jnp.max(jnp.abs(out - ref))}")

    print("KERNEL_OK")
</pallas_src>

<mosaic_0001>
module attributes {stable_mosaic.version = 11 : i64} {
  func.func @_lenet_kernel(%arg0: i32, %arg1: memref<128x96xf32, #tpu.memory_space<vmem>>, %arg2: memref<5x96x168xf32, #tpu.memory_space<vmem>>, %arg3: memref<1x168xf32, #tpu.memory_space<vmem>>, %arg4: memref<56x128xf32, #tpu.memory_space<vmem>>, %arg5: memref<56x128xf32, #tpu.memory_space<vmem>>, %arg6: memref<168x84xf32, #tpu.memory_space<vmem>>, %arg7: memref<168x84xf32, #tpu.memory_space<vmem>>, %arg8: memref<5x84x160xf32, #tpu.memory_space<vmem>>, %arg9: memref<1x160xf32, #tpu.memory_space<vmem>>, %arg10: memref<20x56xf32, #tpu.memory_space<vmem>>, %arg11: memref<20x56xf32, #tpu.memory_space<vmem>>, %arg12: memref<160x80xf32, #tpu.memory_space<vmem>>, %arg13: memref<160x80xf32, #tpu.memory_space<vmem>>, %arg14: memref<5x80x120xf32, #tpu.memory_space<vmem>>, %arg15: memref<1x120xf32, #tpu.memory_space<vmem>>, %arg16: memref<120x84xf32, #tpu.memory_space<vmem>>, %arg17: memref<1x84xf32, #tpu.memory_space<vmem>>, %arg18: memref<84x128xf32, #tpu.memory_space<vmem>>, %arg19: memref<1x128xf32, #tpu.memory_space<vmem>>, %arg20: memref<1x4x128xf32, #tpu.memory_space<vmem>>, %arg21: memref<136x96xf32, #tpu.memory_space<vmem>>, %arg22: memref<64x84xf32, #tpu.memory_space<vmem>>, %arg23: memref<20x80xf32, #tpu.memory_space<vmem>>) attributes {dimension_semantics = [#tpu.dimension_semantics<parallel>], iteration_bounds = array<i64: 2>, scalar_prefetch = 0 : i64, scratch_operands = 3 : i64, tpu.core_type = #tpu.core_type<tc>, window_params = [{transform_indices = @transform_0, window_bounds = array<i64: 128, 96>}, {pipeline_mode = #tpu.pipeline_mode<synchronous>, transform_indices = @transform_1, window_bounds = array<i64: 5, 96, 168>}, {pipeline_mode = #tpu.pipeline_mode<synchronous>, transform_indices = @transform_2, window_bounds = array<i64: 1, 168>}, {pipeline_mode = #tpu.pipeline_mode<synchronous>, transform_indices = @transform_3, window_bounds = array<i64: 56, 128>}, {pipeline_mode = #tpu.pipeline_mode<synchronous>, transform_indices = @transform_4, window_bounds = array<i64: 56, 128>}, {pipeline_mode = #tpu.pipeline_mode<synchronous>, transform_indices = @transform_5, window_bounds = array<i64: 168, 84>}, {pipeline_mode = #tpu.pipeline_mode<synchronous>, transform_indices = @transform_6, window_bounds = array<i64: 168, 84>}, {pipeline_mode = #tpu.pipeline_mode<synchronous>, transform_indices = @transform_7, window_bounds = array<i64: 5, 84, 160>}, {pipeline_mode = #tpu.pipeline_mode<synchronous>, transform_indices = @transform_8, window_bounds = array<i64: 1, 160>}, {pipeline_mode = #tpu.pipeline_mode<synchronous>, transform_indices = @transform_9, window_bounds = array<i64: 20, 56>}, {pipeline_mode = #tpu.pipeline_mode<synchronous>, transform_indices = @transform_10, window_bounds = array<i64: 20, 56>}, {pipeline_mode = #tpu.pipeline_mode<synchronous>, transform_indices = @transform_11, window_bounds = array<i64: 160, 80>}, {pipeline_mode = #tpu.pipeline_mode<synchronous>, transform_indices = @transform_12, window_bounds = array<i64: 160, 80>}, {pipeline_mode = #tpu.pipeline_mode<synchronous>, transform_indices = @transform_13, window_bounds = array<i64: 5, 80, 120>}, {pipeline_mode = #tpu.pipeline_mode<synchronous>, transform_indices = @transform_14, window_bounds = array<i64: 1, 120>}, {pipeline_mode = #tpu.pipeline_mode<synchronous>, transform_indices = @transform_15, window_bounds = array<i64: 120, 84>}, {pipeline_mode = #tpu.pipeline_mode<synchronous>, transform_indices = @transform_16, window_bounds = array<i64: 1, 84>}, {pipeline_mode = #tpu.pipeline_mode<synchronous>, transform_indices = @transform_17, window_bounds = array<i64: 84, 128>}, {pipeline_mode = #tpu.pipeline_mode<synchronous>, transform_indices = @transform_18, window_bounds = array<i64: 1, 128>}, {transform_indices = @transform_19, window_bounds = array<i64: 1, 4, 128>}]} {
    %c0 = arith.constant 0 : index
    %c0_0 = arith.constant 0 : index
    %0 = vector.load %arg1[%c0, %c0_0] : memref<128x96xf32, #tpu.memory_space<vmem>>, vector<128x96xf32>
    %c0_1 = arith.constant 0 : index
    %c0_2 = arith.constant 0 : index
    %1 = vector.load %arg21[%c0_1, %c0_2] : memref<136x96xf32, #tpu.memory_space<vmem>>, vector<128x96xf32>
    tpu.vector_store %arg21[%c0_1, %c0_2], %0 {strides = array<i32>} : memref<136x96xf32, #tpu.memory_space<vmem>>, vector<128x96xf32>,
    %cst = arith.constant 0.000000e+00 : f32
    %2 = vector.broadcast %cst : f32 to vector<8x96xf32>
    %c128 = arith.constant 128 : index
    %c0_3 = arith.constant 0 : index
    %3 = vector.load %arg21[%c128, %c0_3] : memref<136x96xf32, #tpu.memory_space<vmem>>, vector<8x96xf32>
    tpu.vector_store %arg21[%c128, %c0_3], %2 {strides = array<i32>} : memref<136x96xf32, #tpu.memory_space<vmem>>, vector<8x96xf32>,
    %c0_4 = arith.constant 0 : index
    %c0_5 = arith.constant 0 : index
    %4 = vector.load %arg21[%c0_4, %c0_5] : memref<136x96xf32, #tpu.memory_space<vmem>>, vector<128x96xf32>
    %c0_6 = arith.constant 0 : index
    %c0_7 = arith.constant 0 : index
    %c0_8 = arith.constant 0 : index
    %5 = vector.load %arg2[%c0_6, %c0_7, %c0_8] : memref<5x96x168xf32, #tpu.memory_space<vmem>>, vector<1x96x168xf32>
    %6 = vector.shape_cast %5 : vector<1x96x168xf32> to vector<96x168xf32>
    %cst_9 = arith.constant dense<0.000000e+00> : vector<128x168xf32>
    %7 = tpu.matmul %4, %6, %cst_9 {dimension_numbers = #tpu.dot_dimension_numbers<[1], [0], [0], [1], [0, 0, 1, 1], [], []>} : vector<128x96xf32>, vector<96x168xf32>, vector<128x168xf32> -> vector<128x168xf32>
    %c1 = arith.constant 1 : index
    %c0_10 = arith.constant 0 : index
    %8 = vector.load %arg21[%c1, %c0_10] : memref<136x96xf32, #tpu.memory_space<vmem>>, vector<128x96xf32>
    %c1_11 = arith.constant 1 : index
    %c0_12 = arith.constant 0 : index
    %c0_13 = arith.constant 0 : index
    %9 = vector.load %arg2[%c1_11, %c0_12, %c0_13] : memref<5x96x168xf32, #tpu.memory_space<vmem>>, vector<1x96x168xf32>
    %10 = vector.shape_cast %9 : vector<1x96x168xf32> to vector<96x168xf32>
    %cst_14 = arith.constant dense<0.000000e+00> : vector<128x168xf32>
    %11 = tpu.matmul %8, %10, %cst_14 {dimension_numbers = #tpu.dot_dimension_numbers<[1], [0], [0], [1], [0, 0, 1, 1], [], []>} : vector<128x96xf32>, vector<96x168xf32>, vector<128x168xf32> -> vector<128x168xf32>
    %12 = arith.addf %7, %11 : vector<128x168xf32>
    %c2 = arith.constant 2 : index
    %c0_15 = arith.constant 0 : index
    %13 = vector.load %arg21[%c2, %c0_15] : memref<136x96xf32, #tpu.memory_space<vmem>>, vector<128x96xf32>
    %c2_16 = arith.constant 2 : index
    %c0_17 = arith.constant 0 : index
    %c0_18 = arith.constant 0 : index
    %14 = vector.load %arg2[%c2_16, %c0_17, %c0_18] : memref<5x96x168xf32, #tpu.memory_space<vmem>>, vector<1x96x168xf32>
    %15 = vector.shape_cast %14 : vector<1x96x168xf32> to vector<96x168xf32>
    %cst_19 = arith.constant dense<0.000000e+00> : vector<128x168xf32>
    %16 = tpu.matmul %13, %15, %cst_19 {dimension_numbers = #tpu.dot_dimension_numbers<[1], [0], [0], [1], [0, 0, 1, 1], [], []>} : vector<128x96xf32>, vector<96x168xf32>, vector<128x168xf32> -> vector<128x168xf32>
    %17 = arith.addf %12, %16 : vector<128x168xf32>
    %c3 = arith.constant 3 : index
    %c0_20 = arith.constant 0 : index
    %18 = vector.load %arg21[%c3, %c0_20] : memref<136x96xf32, #tpu.memory_space<vmem>>, vector<128x96xf32>
    %c3_21 = arith.constant 3 : index
    %c0_22 = arith.constant 0 : index
    %c0_23 = arith.constant 0 : index
    %19 = vector.load %arg2[%c3_21, %c0_22, %c0_23] : memref<5x96x168xf32, #tpu.memory_space<vmem>>, vector<1x96x168xf32>
    %20 = vector.shape_cast %19 : vector<1x96x168xf32> to vector<96x168xf32>
    %cst_24 = arith.constant dense<0.000000e+00> : vector<128x168xf32>
    %21 = tpu.matmul %18, %20, %cst_24 {dimension_numbers = #tpu.dot_dimension_numbers<[1], [0], [0], [1], [0, 0, 1, 1], [], []>} : vector<128x96xf32>, vector<96x168xf32>, vector<128x168xf32> -> vector<128x168xf32>
    %22 = arith.addf %17, %21 : vector<128x168xf32>
    %c4 = arith.constant 4 : index
    %c0_25 = arith.constant 0 : index
    %23 = vector.load %arg21[%c4, %c0_25] : memref<136x96xf32, #tpu.memory_space<vmem>>, vector<128x96xf32>
    %c4_26 = arith.constant 4 : index
    %c0_27 = arith.constant 0 : index
    %c0_28 = arith.constant 0 : index
    %24 = vector.load %arg2[%c4_26, %c0_27, %c0_28] : memref<5x96x168xf32, #tpu.memory_space<vmem>>, vector<1x96x168xf32>
    %25 = vector.shape_cast %24 : vector<1x96x168xf32> to vector<96x168xf32>
    %cst_29 = arith.constant dense<0.000000e+00> : vector<128x168xf32>
    %26 = tpu.matmul %23, %25, %cst_29 {dimension_numbers = #tpu.dot_dimension_numbers<[1], [0], [0], [1], [0, 0, 1, 1], [], []>} : vector<128x96xf32>, vector<96x168xf32>, vector<128x168xf32> -> vector<128x168xf32>
    %27 = arith.addf %22, %26 : vector<128x168xf32>
    %c0_30 = arith.constant 0 : index
    %c0_31 = arith.constant 0 : index
    %28 = vector.load %arg3[%c0_30, %c0_31] : memref<1x168xf32, #tpu.memory_space<vmem>>, vector<1x168xf32>
    %29 = vector.broadcast %28 : vector<1x168xf32> to vector<128x168xf32>
    %30 = arith.addf %27, %29 : vector<128x168xf32>
    %cst_32 = arith.constant 0.000000e+00 : f32
    %31 = vector.broadcast %cst_32 : f32 to vector<128x168xf32>
    %32 = arith.maximumf %30, %31 : vector<128x168xf32>
    %c0_33 = arith.constant 0 : index
    %c0_34 = arith.constant 0 : index
    %33 = vector.load %arg4[%c0_33, %c0_34] : memref<56x128xf32, #tpu.memory_space<vmem>>, vector<56x128xf32>
    %cst_35 = arith.constant dense<0.000000e+00> : vector<56x168xf32>
    %34 = tpu.matmul %33, %32, %cst_35 {dimension_numbers = #tpu.dot_dimension_numbers<[1], [0], [0], [1], [0, 0, 1, 1], [], []>} : vector<56x128xf32>, vector<128x168xf32>, vector<56x168xf32> -> vector<56x168xf32>
    %c0_36 = arith.constant 0 : index
    %c0_37 = arith.constant 0 : index
    %35 = vector.load %arg5[%c0_36, %c0_37] : memref<56x128xf32, #tpu.memory_space<vmem>>, vector<56x128xf32>
    %cst_38 = arith.constant dense<0.000000e+00> : vector<56x168xf32>
    %36 = tpu.matmul %35, %32, %cst_38 {dimension_numbers = #tpu.dot_dimension_numbers<[1], [0], [0], [1], [0, 0, 1, 1], [], []>} : vector<56x128xf32>, vector<128x168xf32>, vector<56x168xf32> -> vector<56x168xf32>
    %37 = arith.maximumf %34, %36 : vector<56x168xf32>
    %c0_39 = arith.constant 0 : index
    %c0_40 = arith.constant 0 : index
    %38 = vector.load %arg6[%c0_39, %c0_40] : memref<168x84xf32, #tpu.memory_space<vmem>>, vector<168x84xf32>
    %cst_41 = arith.constant dense<0.000000e+00> : vector<56x84xf32>
    %39 = tpu.matmul %37, %38, %cst_41 {dimension_numbers = #tpu.dot_dimension_numbers<[1], [0], [0], [1], [0, 0, 1, 1], [], []>} : vector<56x168xf32>, vector<168x84xf32>, vector<56x84xf32> -> vector<56x84xf32>
    %c0_42 = arith.constant 0 : index
    %c0_43 = arith.constant 0 : index
    %40 = vector.load %arg7[%c0_42, %c0_43] : memref<168x84xf32, #tpu.memory_space<vmem>>, vector<168x84xf32>
    %cst_44 = arith.constant dense<0.000000e+00> : vector<56x84xf32>
    %41 = tpu.matmul %37, %40, %cst_44 {dimension_numbers = #tpu.dot_dimension_numbers<[1], [0], [0], [1], [0, 0, 1, 1], [], []>} : vector<56x168xf32>, vector<168x84xf32>, vector<56x84xf32> -> vector<56x84xf32>
    %42 = arith.maximumf %39, %41 : vector<56x84xf32>
    %c0_45 = arith.constant 0 : index
    %c0_46 = arith.constant 0 : index
    %43 = vector.load %arg22[%c0_45, %c0_46] : memref<64x84xf32, #tpu.memory_space<vmem>>, vector<56x84xf32>
    tpu.vector_store %arg22[%c0_45, %c0_46], %42 {strides = array<i32>} : memref<64x84xf32, #tpu.memory_space<vmem>>, vector<56x84xf32>,
    %cst_47 = arith.constant 0.000000e+00 : f32
    %44 = vector.broadcast %cst_47 : f32 to vector<8x84xf32>
    %c56 = arith.constant 56 : index
    %c0_48 = arith.constant 0 : index
    %45 = vector.load %arg22[%c56, %c0_48] : memref<64x84xf32, #tpu.memory_space<vmem>>, vector<8x84xf32>
    tpu.vector_store %arg22[%c56, %c0_48], %44 {strides = array<i32>} : memref<64x84xf32, #tpu.memory_space<vmem>>, vector<8x84xf32>,
    %c0_49 = arith.constant 0 : index
    %c0_50 = arith.constant 0 : index
    %46 = vector.load %arg22[%c0_49, %c0_50] : memref<64x84xf32, #tpu.memory_space<vmem>>, vector<56x84xf32>
    %c0_51 = arith.constant 0 : index
    %c0_52 = arith.constant 0 : index
    %c0_53 = arith.constant 0 : index
    %47 = vector.load %arg8[%c0_51, %c0_52, %c0_53] : memref<5x84x160xf32, #tpu.memory_space<vmem>>, vector<1x84x160xf32>
    %48 = vector.shape_cast %47 : vector<1x84x160xf32> to vector<84x160xf32>
    %cst_54 = arith.constant dense<0.000000e+00> : vector<56x160xf32>
    %49 = tpu.matmul %46, %48, %cst_54 {dimension_numbers = #tpu.dot_dimension_numbers<[1], [0], [0], [1], [0, 0, 1, 1], [], []>} : vector<56x84xf32>, vector<84x160xf32>, vector<56x160xf32> -> vector<56x160xf32>
    %c1_55 = arith.constant 1 : index
    %c0_56 = arith.constant 0 : index
    %50 = vector.load %arg22[%c1_55, %c0_56] : memref<64x84xf32, #tpu.memory_space<vmem>>, vector<56x84xf32>
    %c1_57 = arith.constant 1 : index
    %c0_58 = arith.constant 0 : index
    %c0_59 = arith.constant 0 : index
    %51 = vector.load %arg8[%c1_57, %c0_58, %c0_59] : memref<5x84x160xf32, #tpu.memory_space<vmem>>, vector<1x84x160xf32>
    %52 = vector.shape_cast %51 : vector<1x84x160xf32> to vector<84x160xf32>
    %cst_60 = arith.constant dense<0.000000e+00> : vector<56x160xf32>
    %53 = tpu.matmul %50, %52, %cst_60 {dimension_numbers = #tpu.dot_dimension_numbers<[1], [0], [0], [1], [0, 0, 1, 1], [], []>} : vector<56x84xf32>, vector<84x160xf32>, vector<56x160xf32> -> vector<56x160xf32>
    %54 = arith.addf %49, %53 : vector<56x160xf32>
    %c2_61 = arith.constant 2 : index
    %c0_62 = arith.constant 0 : index
    %55 = vector.load %arg22[%c2_61, %c0_62] : memref<64x84xf32, #tpu.memory_space<vmem>>, vector<56x84xf32>
    %c2_63 = arith.constant 2 : index
    %c0_64 = arith.constant 0 : index
    %c0_65 = arith.constant 0 : index
    %56 = vector.load %arg8[%c2_63, %c0_64, %c0_65] : memref<5x84x160xf32, #tpu.memory_space<vmem>>, vector<1x84x160xf32>
    %57 = vector.shape_cast %56 : vector<1x84x160xf32> to vector<84x160xf32>
    %cst_66 = arith.constant dense<0.000000e+00> : vector<56x160xf32>
    %58 = tpu.matmul %55, %57, %cst_66 {dimension_numbers = #tpu.dot_dimension_numbers<[1], [0], [0], [1], [0, 0, 1, 1], [], []>} : vector<56x84xf32>, vector<84x160xf32>, vector<56x160xf32> -> vector<56x160xf32>
    %59 = arith.addf %54, %58 : vector<56x160xf32>
    %c3_67 = arith.constant 3 : index
    %c0_68 = arith.constant 0 : index
    %60 = vector.load %arg22[%c3_67, %c0_68] : memref<64x84xf32, #tpu.memory_space<vmem>>, vector<56x84xf32>
    %c3_69 = arith.constant 3 : index
    %c0_70 = arith.constant 0 : index
    %c0_71 = arith.constant 0 : index
    %61 = vector.load %arg8[%c3_69, %c0_70, %c0_71] : memref<5x84x160xf32, #tpu.memory_space<vmem>>, vector<1x84x160xf32>
    %62 = vector.shape_cast %61 : vector<1x84x160xf32> to vector<84x160xf32>
    %cst_72 = arith.constant dense<0.000000e+00> : vector<56x160xf32>
    %63 = tpu.matmul %60, %62, %cst_72 {dimension_numbers = #tpu.dot_dimension_numbers<[1], [0], [0], [1], [0, 0, 1, 1], [], []>} : vector<56x84xf32>, vector<84x160xf32>, vector<56x160xf32> -> vector<56x160xf32>
    %64 = arith.addf %59, %63 : vector<56x160xf32>
    %c4_73 = arith.constant 4 : index
    %c0_74 = arith.constant 0 : index
    %65 = vector.load %arg22[%c4_73, %c0_74] : memref<64x84xf32, #tpu.memory_space<vmem>>, vector<56x84xf32>
    %c4_75 = arith.constant 4 : index
    %c0_76 = arith.constant 0 : index
    %c0_77 = arith.constant 0 : index
    %66 = vector.load %arg8[%c4_75, %c0_76, %c0_77] : memref<5x84x160xf32, #tpu.memory_space<vmem>>, vector<1x84x160xf32>
    %67 = vector.shape_cast %66 : vector<1x84x160xf32> to vector<84x160xf32>
    %cst_78 = arith.constant dense<0.000000e+00> : vector<56x160xf32>
    %68 = tpu.matmul %65, %67, %cst_78 {dimension_numbers = #tpu.dot_dimension_numbers<[1], [0], [0], [1], [0, 0, 1, 1], [], []>} : vector<56x84xf32>, vector<84x160xf32>, vector<56x160xf32> -> vector<56x160xf32>
    %69 = arith.addf %64, %68 : vector<56x160xf32>
    %c0_79 = arith.constant 0 : index
    %c0_80 = arith.constant 0 : index
    %70 = vector.load %arg9[%c0_79, %c0_80] : memref<1x160xf32, #tpu.memory_space<vmem>>, vector<1x160xf32>
    %71 = vector.broadcast %70 : vector<1x160xf32> to vector<56x160xf32>
    %72 = arith.addf %69, %71 : vector<56x160xf32>
    %cst_81 = arith.constant 0.000000e+00 : f32
    %73 = vector.broadcast %cst_81 : f32 to vector<56x160xf32>
    %74 = arith.maximumf %72, %73 : vector<56x160xf32>
    %c0_82 = arith.constant 0 : index
    %c0_83 = arith.constant 0 : index
    %75 = vector.load %arg10[%c0_82, %c0_83] : memref<20x56xf32, #tpu.memory_space<vmem>>, vector<20x56xf32>
    %cst_84 = arith.constant dense<0.000000e+00> : vector<20x160xf32>
    %76 = tpu.matmul %75, %74, %cst_84 {dimension_numbers = #tpu.dot_dimension_numbers<[1], [0], [0], [1], [0, 0, 1, 1], [], []>} : vector<20x56xf32>, vector<56x160xf32>, vector<20x160xf32> -> vector<20x160xf32>
    %c0_85 = arith.constant 0 : index
    %c0_86 = arith.constant 0 : index
    %77 = vector.load %arg11[%c0_85, %c0_86] : memref<20x56xf32, #tpu.memory_space<vmem>>, vector<20x56xf32>
    %cst_87 = arith.constant dense<0.000000e+00> : vector<20x160xf32>
    %78 = tpu.matmul %77, %74, %cst_87 {dimension_numbers = #tpu.dot_dimension_numbers<[1], [0], [0], [1], [0, 0, 1, 1], [], []>} : vector<20x56xf32>, vector<56x160xf32>, vector<20x160xf32> -> vector<20x160xf32>
    %79 = arith.maximumf %76, %78 : vector<20x160xf32>
    %c0_88 = arith.constant 0 : index
    %c0_89 = arith.constant 0 : index
    %80 = vector.load %arg12[%c0_88, %c0_89] : memref<160x80xf32, #tpu.memory_space<vmem>>, vector<160x80xf32>
    %cst_90 = arith.constant dense<0.000000e+00> : vector<20x80xf32>
    %81 = tpu.matmul %79, %80, %cst_90 {dimension_numbers = #tpu.dot_dimension_numbers<[1], [0], [0], [1], [0, 0, 1, 1], [], []>} : vector<20x160xf32>, vector<160x80xf32>, vector<20x80xf32> -> vector<20x80xf32>
    %c0_91 = arith.constant 0 : index
    %c0_92 = arith.constant 0 : index
    %82 = vector.load %arg13[%c0_91, %c0_92] : memref<160x80xf32, #tpu.memory_space<vmem>>, vector<160x80xf32>
    %cst_93 = arith.constant dense<0.000000e+00> : vector<20x80xf32>
    %83 = tpu.matmul %79, %82, %cst_93 {dimension_numbers = #tpu.dot_dimension_numbers<[1], [0], [0], [1], [0, 0, 1, 1], [], []>} : vector<20x160xf32>, vector<160x80xf32>, vector<20x80xf32> -> vector<20x80xf32>
    %84 = arith.maximumf %81, %83 : vector<20x80xf32>
    %c0_94 = arith.constant 0 : index
    %c0_95 = arith.constant 0 : index
    %85 = vector.load %arg23[%c0_94, %c0_95] : memref<20x80xf32, #tpu.memory_space<vmem>>, vector<20x80xf32>
    tpu.vector_store %arg23[%c0_94, %c0_95], %84 {strides = array<i32>} : memref<20x80xf32, #tpu.memory_space<vmem>>, vector<20x80xf32>,
    %c0_96 = arith.constant 0 : index
    %c0_97 = arith.constant 0 : index
    %86 = vector.load %arg23[%c0_96, %c0_97] : memref<20x80xf32, #tpu.memory_space<vmem>>, vector<4x80xf32>
    %c0_98 = arith.constant 0 : index
    %c0_99 = arith.constant 0 : index
    %c0_100 = arith.constant 0 : index
    %87 = vector.load %arg14[%c0_98, %c0_99, %c0_100] : memref<5x80x120xf32, #tpu.memory_space<vmem>>, vector<1x80x120xf32>
    %88 = vector.shape_cast %87 : vector<1x80x120xf32> to vector<80x120xf32>
    %cst_101 = arith.constant dense<0.000000e+00> : vector<4x120xf32>
    %89 = tpu.matmul %86, %88, %cst_101 {dimension_numbers = #tpu.dot_dimension_numbers<[1], [0], [0], [1], [0, 0, 1, 1], [], []>} : vector<4x80xf32>, vector<80x120xf32>, vector<4x120xf32> -> vector<4x120xf32>
    %c4_102 = arith.constant 4 : index
    %c0_103 = arith.constant 0 : index
    %90 = vector.load %arg23[%c4_102, %c0_103] : memref<20x80xf32, #tpu.memory_space<vmem>>, vector<4x80xf32>
    %c1_104 = arith.constant 1 : index
    %c0_105 = arith.constant 0 : index
    %c0_106 = arith.constant 0 : index
    %91 = vector.load %arg14[%c1_104, %c0_105, %c0_106] : memref<5x80x120xf32, #tpu.memory_space<vmem>>, vector<1x80x120xf32>
    %92 = vector.shape_cast %91 : vector<1x80x120xf32> to vector<80x120xf32>
    %cst_107 = arith.constant dense<0.000000e+00> : vector<4x120xf32>
    %93 = tpu.matmul %90, %92, %cst_107 {dimension_numbers = #tpu.dot_dimension_numbers<[1], [0], [0], [1], [0, 0, 1, 1], [], []>} : vector<4x80xf32>, vector<80x120xf32>, vector<4x120xf32> -> vector<4x120xf32>
    %94 = arith.addf %89, %93 : vector<4x120xf32>
    %c8 = arith.constant 8 : index
    %c0_108 = arith.constant 0 : index
    %95 = vector.load %arg23[%c8, %c0_108] : memref<20x80xf32, #tpu.memory_space<vmem>>, vector<4x80xf32>
    %c2_109 = arith.constant 2 : index
    %c0_110 = arith.constant 0 : index
    %c0_111 = arith.constant 0 : index
    %96 = vector.load %arg14[%c2_109, %c0_110, %c0_111] : memref<5x80x120xf32, #tpu.memory_space<vmem>>, vector<1x80x120xf32>
    %97 = vector.shape_cast %96 : vector<1x80x120xf32> to vector<80x120xf32>
    %cst_112 = arith.constant dense<0.000000e+00> : vector<4x120xf32>
    %98 = tpu.matmul %95, %97, %cst_112 {dimension_numbers = #tpu.dot_dimension_numbers<[1], [0], [0], [1], [0, 0, 1, 1], [], []>} : vector<4x80xf32>, vector<80x120xf32>, vector<4x120xf32> -> vector<4x120xf32>
    %99 = arith.addf %94, %98 : vector<4x120xf32>
    %c12 = arith.constant 12 : index
    %c0_113 = arith.constant 0 : index
    %100 = vector.load %arg23[%c12, %c0_113] : memref<20x80xf32, #tpu.memory_space<vmem>>, vector<4x80xf32>
    %c3_114 = arith.constant 3 : index
    %c0_115 = arith.constant 0 : index
    %c0_116 = arith.constant 0 : index
    %101 = vector.load %arg14[%c3_114, %c0_115, %c0_116] : memref<5x80x120xf32, #tpu.memory_space<vmem>>, vector<1x80x120xf32>
    %102 = vector.shape_cast %101 : vector<1x80x120xf32> to vector<80x120xf32>
    %cst_117 = arith.constant dense<0.000000e+00> : vector<4x120xf32>
    %103 = tpu.matmul %100, %102, %cst_117 {dimension_numbers = #tpu.dot_dimension_numbers<[1], [0], [0], [1], [0, 0, 1, 1], [], []>} : vector<4x80xf32>, vector<80x120xf32>, vector<4x120xf32> -> vector<4x120xf32>
    %104 = arith.addf %99, %103 : vector<4x120xf32>
    %c16 = arith.constant 16 : index
    %c0_118 = arith.constant 0 : index
    %105 = vector.load %arg23[%c16, %c0_118] : memref<20x80xf32, #tpu.memory_space<vmem>>, vector<4x80xf32>
    %c4_119 = arith.constant 4 : index
    %c0_120 = arith.constant 0 : index
    %c0_121 = arith.constant 0 : index
    %106 = vector.load %arg14[%c4_119, %c0_120, %c0_121] : memref<5x80x120xf32, #tpu.memory_space<vmem>>, vector<1x80x120xf32>
    %107 = vector.shape_cast %106 : vector<1x80x120xf32> to vector<80x120xf32>
    %cst_122 = arith.constant dense<0.000000e+00> : vector<4x120xf32>
    %108 = tpu.matmul %105, %107, %cst_122 {dimension_numbers = #tpu.dot_dimension_numbers<[1], [0], [0], [1], [0, 0, 1, 1], [], []>} : vector<4x80xf32>, vector<80x120xf32>, vector<4x120xf32> -> vector<4x120xf32>
    %109 = arith.addf %104, %108 : vector<4x120xf32>
    %c0_123 = arith.constant 0 : index
    %c0_124 = arith.constant 0 : index
    %110 = vector.load %arg15[%c0_123, %c0_124] : memref<1x120xf32, #tpu.memory_space<vmem>>, vector<1x120xf32>
    %111 = vector.broadcast %110 : vector<1x120xf32> to vector<4x120xf32>
    %112 = arith.addf %109, %111 : vector<4x120xf32>
    %cst_125 = arith.constant 0.000000e+00 : f32
    %113 = vector.broadcast %cst_125 : f32 to vector<4x120xf32>
    %114 = arith.maximumf %112, %113 : vector<4x120xf32>
    %c0_126 = arith.constant 0 : index
    %c0_127 = arith.constant 0 : index
    %115 = vector.load %arg16[%c0_126, %c0_127] : memref<120x84xf32, #tpu.memory_space<vmem>>, vector<120x84xf32>
    %cst_128 = arith.constant dense<0.000000e+00> : vector<4x84xf32>
    %116 = tpu.matmul %114, %115, %cst_128 {dimension_numbers = #tpu.dot_dimension_numbers<[1], [0], [0], [1], [0, 0, 1, 1], [], []>} : vector<4x120xf32>, vector<120x84xf32>, vector<4x84xf32> -> vector<4x84xf32>
    %c0_129 = arith.constant 0 : index
    %c0_130 = arith.constant 0 : index
    %117 = vector.load %arg17[%c0_129, %c0_130] : memref<1x84xf32, #tpu.memory_space<vmem>>, vector<1x84xf32>
    %118 = vector.broadcast %117 : vector<1x84xf32> to vector<4x84xf32>
    %119 = arith.addf %116, %118 : vector<4x84xf32>
    %cst_131 = arith.constant 0.000000e+00 : f32
    %120 = vector.broadcast %cst_131 : f32 to vector<4x84xf32>
    %121 = arith.maximumf %119, %120 : vector<4x84xf32>
    %c0_132 = arith.constant 0 : index
    %c0_133 = arith.constant 0 : index
    %122 = vector.load %arg18[%c0_132, %c0_133] : memref<84x128xf32, #tpu.memory_space<vmem>>, vector<84x128xf32>
    %cst_134 = arith.constant dense<0.000000e+00> : vector<4x128xf32>
    %123 = tpu.matmul %121, %122, %cst_134 {dimension_numbers = #tpu.dot_dimension_numbers<[1], [0], [0], [1], [0, 0, 1, 1], [], []>} : vector<4x84xf32>, vector<84x128xf32>, vector<4x128xf32> -> vector<4x128xf32>
    %c0_135 = arith.constant 0 : index
    %c0_136 = arith.constant 0 : index
    %124 = vector.load %arg19[%c0_135, %c0_136] : memref<1x128xf32, #tpu.memory_space<vmem>>, vector<1x128xf32>
    %125 = vector.broadcast %124 : vector<1x128xf32> to vector<4x128xf32>
    %126 = arith.addf %123, %125 : vector<4x128xf32>
    %c0_137 = arith.constant 0 : index
    %c0_138 = arith.constant 0 : index
    %c0_139 = arith.constant 0 : index
    %127 = vector.load %arg20[%c0_137, %c0_138, %c0_139] : memref<1x4x128xf32, #tpu.memory_space<vmem>>, vector<1x4x128xf32>
    %128 = vector.shape_cast %127 : vector<1x4x128xf32> to vector<4x128xf32>
    %129 = vector.shape_cast %126 : vector<4x128xf32> to vector<1x4x128xf32>
    tpu.vector_store %arg20[%c0_137, %c0_138, %c0_139], %129 {strides = array<i32>} : memref<1x4x128xf32, #tpu.memory_space<vmem>>, vector<1x4x128xf32>,
    return
  }
  func.func @transform_0(%arg0: i32) -> (i32, i32) {
    %c0_i32 = arith.constant 0 : i32
    %c0_i32_0 = arith.constant 0 : i32
    return %arg0, %c0_i32 : i32, i32
  }
  func.func @transform_1(%arg0: i32) -> (i32, i32, i32) {
    %c0_i32 = arith.constant 0 : i32
    %c0_i32_0 = arith.constant 0 : i32
    %c0_i32_1 = arith.constant 0 : i32
    %c0_i32_2 = arith.constant 0 : i32
    return %c0_i32, %c0_i32_0, %c0_i32_1 : i32, i32, i32
  }
  func.func @transform_2(%arg0: i32) -> (i32, i32) {
    %c0_i32 = arith.constant 0 : i32
    %c0_i32_0 = arith.constant 0 : i32
    %c0_i32_1 = arith.constant 0 : i32
    return %c0_i32, %c0_i32_0 : i32, i32
  }
  func.func @transform_3(%arg0: i32) -> (i32, i32) {
    %c0_i32 = arith.constant 0 : i32
    %c0_i32_0 = arith.constant 0 : i32
    %c0_i32_1 = arith.constant 0 : i32
    return %c0_i32, %c0_i32_0 : i32, i32
  }
  func.func @transform_4(%arg0: i32) -> (i32, i32) {
    %c0_i32 = arith.constant 0 : i32
    %c0_i32_0 = arith.constant 0 : i32
    %c0_i32_1 = arith.constant 0 : i32
    return %c0_i32, %c0_i32_0 : i32, i32
  }
  func.func @transform_5(%arg0: i32) -> (i32, i32) {
    %c0_i32 = arith.constant 0 : i32
    %c0_i32_0 = arith.constant 0 : i32
    %c0_i32_1 = arith.constant 0 : i32
    return %c0_i32, %c0_i32_0 : i32, i32
  }
  func.func @transform_6(%arg0: i32) -> (i32, i32) {
    %c0_i32 = arith.constant 0 : i32
    %c0_i32_0 = arith.constant 0 : i32
    %c0_i32_1 = arith.constant 0 : i32
    return %c0_i32, %c0_i32_0 : i32, i32
  }
  func.func @transform_7(%arg0: i32) -> (i32, i32, i32) {
    %c0_i32 = arith.constant 0 : i32
    %c0_i32_0 = arith.constant 0 : i32
    %c0_i32_1 = arith.constant 0 : i32
    %c0_i32_2 = arith.constant 0 : i32
    return %c0_i32, %c0_i32_0, %c0_i32_1 : i32, i32, i32
  }
  func.func @transform_8(%arg0: i32) -> (i32, i32) {
    %c0_i32 = arith.constant 0 : i32
    %c0_i32_0 = arith.constant 0 : i32
    %c0_i32_1 = arith.constant 0 : i32
    return %c0_i32, %c0_i32_0 : i32, i32
  }
  func.func @transform_9(%arg0: i32) -> (i32, i32) {
    %c0_i32 = arith.constant 0 : i32
    %c0_i32_0 = arith.constant 0 : i32
    %c0_i32_1 = arith.constant 0 : i32
    return %c0_i32, %c0_i32_0 : i32, i32
  }
  func.func @transform_10(%arg0: i32) -> (i32, i32) {
    %c0_i32 = arith.constant 0 : i32
    %c0_i32_0 = arith.constant 0 : i32
    %c0_i32_1 = arith.constant 0 : i32
    return %c0_i32, %c0_i32_0 : i32, i32
  }
  func.func @transform_11(%arg0: i32) -> (i32, i32) {
    %c0_i32 = arith.constant 0 : i32
    %c0_i32_0 = arith.constant 0 : i32
    %c0_i32_1 = arith.constant 0 : i32
    return %c0_i32, %c0_i32_0 : i32, i32
  }
  func.func @transform_12(%arg0: i32) -> (i32, i32) {
    %c0_i32 = arith.constant 0 : i32
    %c0_i32_0 = arith.constant 0 : i32
    %c0_i32_1 = arith.constant 0 : i32
    return %c0_i32, %c0_i32_0 : i32, i32
  }
  func.func @transform_13(%arg0: i32) -> (i32, i32, i32) {
    %c0_i32 = arith.constant 0 : i32
    %c0_i32_0 = arith.constant 0 : i32
    %c0_i32_1 = arith.constant 0 : i32
    %c0_i32_2 = arith.constant 0 : i32
    return %c0_i32, %c0_i32_0, %c0_i32_1 : i32, i32, i32
  }
  func.func @transform_14(%arg0: i32) -> (i32, i32) {
    %c0_i32 = arith.constant 0 : i32
    %c0_i32_0 = arith.constant 0 : i32
    %c0_i32_1 = arith.constant 0 : i32
    return %c0_i32, %c0_i32_0 : i32, i32
  }
  func.func @transform_15(%arg0: i32) -> (i32, i32) {
    %c0_i32 = arith.constant 0 : i32
    %c0_i32_0 = arith.constant 0 : i32
    %c0_i32_1 = arith.constant 0 : i32
    return %c0_i32, %c0_i32_0 : i32, i32
  }
  func.func @transform_16(%arg0: i32) -> (i32, i32) {
    %c0_i32 = arith.constant 0 : i32
    %c0_i32_0 = arith.constant 0 : i32
    %c0_i32_1 = arith.constant 0 : i32
    return %c0_i32, %c0_i32_0 : i32, i32
  }
  func.func @transform_17(%arg0: i32) -> (i32, i32) {
    %c0_i32 = arith.constant 0 : i32
    %c0_i32_0 = arith.constant 0 : i32
    %c0_i32_1 = arith.constant 0 : i32
    return %c0_i32, %c0_i32_0 : i32, i32
  }
  func.func @transform_18(%arg0: i32) -> (i32, i32) {
    %c0_i32 = arith.constant 0 : i32
    %c0_i32_0 = arith.constant 0 : i32
    %c0_i32_1 = arith.constant 0 : i32
    return %c0_i32, %c0_i32_0 : i32, i32
  }
  func.func @transform_19(%arg0: i32) -> (i32, i32, i32) {
    %c0_i32 = arith.constant 0 : i32
    %c0_i32_0 = arith.constant 0 : i32
    %c0_i32_1 = arith.constant 0 : i32
    return %arg0, %c0_i32, %c0_i32_0 : i32, i32, i32
  }
}

</mosaic_0001>

<llo_original>
// kernel: net_forward_pallas.1
$region0: #{net_forward_pallas.1}
  #allocation0 [shape = 'u32[]', space=smem, size = 0x4, offset = 0x4, fixed_abs, tag = 'smem constant byte address 0x4 - core index']
  #allocation1 [shape = 'u32[144,128]{1,0:T(1,128)}', space=vmem, size = 0x12000, scoped, tag = 'internal scratch']
  #allocation2 [shape = 'f32[136,96]{1,0:T(8,128)}', space=vmem, size = 0x11000, scoped, tag = 'scratch operand']
  #allocation3 [shape = 'f32[64,84]{1,0:T(8,128)}', space=vmem, size = 0x8000, scoped, tag = 'scratch operand']
  #allocation4 [shape = 'f32[20,80]{1,0:T(8,128)}', space=vmem, size = 0x3000, scoped, tag = 'scratch operand']
  %s0 = inlined_call_operand.vmem [shape: f32[256,96], index: 0, kind: input, shape index: {}]
  %s1 = inlined_call_operand.vmem [shape: f32[5,96,168], index: 1, kind: input, shape index: {}]
  %s2 = inlined_call_operand.vmem [shape: f32[1,168], index: 2, kind: input, shape index: {}]
  %s3 = inlined_call_operand.vmem [shape: f32[56,128], index: 3, kind: input, shape index: {}]
  %s4 = inlined_call_operand.vmem [shape: f32[56,128], index: 4, kind: input, shape index: {}]
  %s5 = inlined_call_operand.vmem [shape: f32[168,84], index: 5, kind: input, shape index: {}]
  %s6 = inlined_call_operand.vmem [shape: f32[168,84], index: 6, kind: input, shape index: {}]
  %s7 = inlined_call_operand.vmem [shape: f32[5,84,160], index: 7, kind: input, shape index: {}]
  %s8 = inlined_call_operand.vmem [shape: f32[1,160], index: 8, kind: input, shape index: {}]
  %s9 = inlined_call_operand.vmem [shape: f32[20,56], index: 9, kind: input, shape index: {}]
  %s10 = inlined_call_operand.vmem [shape: f32[20,56], index: 10, kind: input, shape index: {}]
  %s11 = inlined_call_operand.vmem [shape: f32[160,80], index: 11, kind: input, shape index: {}]
  %s12 = inlined_call_operand.vmem [shape: f32[160,80], index: 12, kind: input, shape index: {}]
  %s13 = inlined_call_operand.vmem [shape: f32[5,80,120], index: 13, kind: input, shape index: {}]
  %s14 = inlined_call_operand.vmem [shape: f32[1,120], index: 14, kind: input, shape index: {}]
  %s15 = inlined_call_operand.vmem [shape: f32[120,84], index: 15, kind: input, shape index: {}]
  %s16 = inlined_call_operand.vmem [shape: f32[1,84], index: 16, kind: input, shape index: {}]
  %s17 = inlined_call_operand.vmem [shape: f32[84,128], index: 17, kind: input, shape index: {}]
  %s18 = inlined_call_operand.vmem [shape: f32[1,128], index: 18, kind: input, shape index: {}]
  %s19 = inlined_call_operand.hbm [shape: f32[2,4,128], index: 19, kind: output, shape index: {}]
  %s20 = sld [smem:[#allocation0]]
  $region109: #{net_forward_pallas.1} parent=0
    _
  %s22 = ssub.s32 1, %s20
  %s23 = scalar_select 0, %s22, %s20
  $region1: #{net_forward_pallas.1} parent=0
    #allocation5 [shape = 'u8[4096]{0}', space=vmem, size = 0x1000, scoped, tag = 'output window, operand 0']
    #allocation6 [shape = 's32[2]{0}', space=sflag, size = 0x8, scoped, tag = 'scoped memory for net_forward_pallas.1']
    %24 = vsyncpa [#allocation6], 0
    %s25 = scalar_lea.sflag [#allocation6], 1
    %26 = vsyncpa %s25, 0
    loop: start=0, step=1, limit=4
    $region2: #{net_forward_pallas.1} parent=1 // loop_pre_header
      _
    $region3: #{net_forward_pallas.1} parent=1 // loop_header
      %s28 = sphi 0, %s32
      %p29 = scmp.ge.s32.totalorder %s28, 4
      %s38 = sphi 0, %s40
      %s41 = sphi 0, %s38
      %s42 = sphi 0, %s41
      %s58 = sphi 0, %s42
      %s62 = sphi 0, %s62
      %s64 = sphi 0, %s62
      %s65 = sphi 0, %s64
      %s79 = sphi 0, %s65
      %s83 = sphi 0, %s83
      %s85 = sphi 0, %s83
      %s86 = sphi 0, %s85
      %s100 = sphi 0, %s86
      %s104 = sphi 0, %s104
      %s106 = sphi 0, %s104
      %s107 = sphi 0, %s106
      %s121 = sphi 0, %s107
      %s125 = sphi 0, %s125
      %s127 = sphi 0, %s125
      %s128 = sphi 0, %s127
      %s142 = sphi 0, %s128
      %s146 = sphi 0, %s146
      %s148 = sphi 0, %s146
      %s149 = sphi 0, %s148
      %s163 = sphi 0, %s149
      %s167 = sphi 0, %s167
      %s169 = sphi 0, %s167
      %s170 = sphi 0, %s169
      %s184 = sphi 0, %s170
      %s188 = sphi 0, %s188
      %s190 = sphi 0, %s188
      %s191 = sphi 0, %s190
      %s205 = sphi 0, %s191
      %s209 = sphi 0, %s209
      %s211 = sphi 0, %s209
      %s212 = sphi 0, %s211
      %s226 = sphi 0, %s212
      %s230 = sphi 0, %s230
      %s232 = sphi 0, %s230
      %s233 = sphi 0, %s232
      %s247 = sphi 0, %s233
      %s251 = sphi 0, %s251
      %s253 = sphi 0, %s251
      %s254 = sphi 0, %s253
      %s268 = sphi 0, %s254
      %s272 = sphi 0, %s272
      %s274 = sphi 0, %s272
      %s275 = sphi 0, %s274
      %s289 = sphi 0, %s275
      %s293 = sphi 0, %s293
      %s295 = sphi 0, %s293
      %s296 = sphi 0, %s295
      %s310 = sphi 0, %s296
      %s314 = sphi 0, %s314
      %s316 = sphi 0, %s314
      %s317 = sphi 0, %s316
      %s331 = sphi 0, %s317
      %s335 = sphi 0, %s335
      %s337 = sphi 0, %s335
      %s338 = sphi 0, %s337
      %s352 = sphi 0, %s338
      %s356 = sphi 0, %s356
      %s358 = sphi 0, %s356
      %s359 = sphi 0, %s358
      %s373 = sphi 0, %s359
      %s377 = sphi 0, %s377
      %s379 = sphi 0, %s377
      %s380 = sphi 0, %s379
      %s394 = sphi 0, %s380
      %s398 = sphi 0, %s398
      %s400 = sphi 0, %s398
      %s401 = sphi 0, %s400
      %s415 = sphi 0, %s401
      %s419 = sphi 0, %s419
      %s421 = sphi 0, %s419
      %s422 = sphi 0, %s421
      %s436 = sphi 0, %s422
      %s442 = sphi 0, %s444
      %s445 = sphi 0, %s442
      %s446 = sphi 0, %s445
      %s462 = sphi 0, %s446
    $region4: #{net_forward_pallas.1} parent=1 // loop_header_branch
      %31 = sbr.rel (%p29) target = $region8
    $region5: #{net_forward_pallas.1} parent=1 // loop_body
      %s33 = ssub.s32 %s28, 1
      %s34 = ssub.s32 %s28, 2
      %s35 = sadd.s32 %s28, 1
      %s36 = ssub.s32 %s28, %s35
      %p37 = scmp.eq.s32.totalorder %s36, 0
      %s39 = sadd.s32 %s38, 1
      %s40 = scalar_select %p37, %s38, %s39
      %p43 = pneg %p37
      %p44 = scmp.eq.s32.totalorder %s28, 1
      %p45 = por %p43, %p44
      %p46 = scmp.ne.s32.totalorder %s38, %s41
      %p47 = scmp.eq.s32.totalorder %s28, 0
      %p48 = por %p46, %p47
      %p49 = scmp.ne.s32.totalorder %s38, %s41
      %p50 = scmp.eq.s32.totalorder %s33, 1
      %p51 = por %p49, %p50
      %p52 = scmp.ne.s32.totalorder %s41, %s42
      %p53 = scmp.eq.s32.totalorder %s33, 0
      %p54 = por %p52, %p53
      %p55 = scmp.ne.s32.totalorder %s41, %s42
      %p56 = scmp.eq.s32.totalorder %s34, 1
      %p57 = por %p55, %p56
      %p59 = scmp.ne.s32.totalorder %s42, %s58
      %p60 = scmp.eq.s32.totalorder %s34, 0
      %p61 = por %p59, %p60
      %s63 = sadd.s32 %s62, 1
      %p66 = scmp.eq.s32.totalorder %s28, 1
      %p67 = scmp.ne.s32.totalorder %s62, %s64
      %p68 = scmp.eq.s32.totalorder %s28, 0
      %p69 = por %p67, %p68
      %p70 = scmp.ne.s32.totalorder %s62, %s64
      %p71 = scmp.eq.s32.totalorder %s33, 1
      %p72 = por %p70, %p71
      %p73 = scmp.ne.s32.totalorder %s64, %s65
      %p74 = scmp.eq.s32.totalorder %s33, 0
      %p75 = por %p73, %p74
      %p76 = scmp.ne.s32.totalorder %s64, %s65
      %p77 = scmp.eq.s32.totalorder %s34, 1
      %p78 = por %p76, %p77
      %p80 = scmp.ne.s32.totalorder %s65, %s79
      %p81 = scmp.eq.s32.totalorder %s34, 0
      %p82 = por %p80, %p81
      %s84 = sadd.s32 %s83, 1
      %p87 = scmp.eq.s32.totalorder %s28, 1
      %p88 = scmp.ne.s32.totalorder %s83, %s85
      %p89 = scmp.eq.s32.totalorder %s28, 0
      %p90 = por %p88, %p89
      %p91 = scmp.ne.s32.totalorder %s83, %s85
      %p92 = scmp.eq.s32.totalorder %s33, 1
      %p93 = por %p91, %p92
      %p94 = scmp.ne.s32.totalorder %s85, %s86
      %p95 = scmp.eq.s32.totalorder %s33, 0
      %p96 = por %p94, %p95
      %p97 = scmp.ne.s32.totalorder %s85, %s86
      %p98 = scmp.eq.s32.totalorder %s34, 1
      %p99 = por %p97, %p98
      %p101 = scmp.ne.s32.totalorder %s86, %s100
      %p102 = scmp.eq.s32.totalorder %s34, 0
      %p103 = por %p101, %p102
      %s105 = sadd.s32 %s104, 1
      %p108 = scmp.eq.s32.totalorder %s28, 1
      %p109 = scmp.ne.s32.totalorder %s104, %s106
      %p110 = scmp.eq.s32.totalorder %s28, 0
      %p111 = por %p109, %p110
      %p112 = scmp.ne.s32.totalorder %s104, %s106
      %p113 = scmp.eq.s32.totalorder %s33, 1
      %p114 = por %p112, %p113
      %p115 = scmp.ne.s32.totalorder %s106, %s107
      %p116 = scmp.eq.s32.totalorder %s33, 0
      %p117 = por %p115, %p116
      %p118 = scmp.ne.s32.totalorder %s106, %s107
      %p119 = scmp.eq.s32.totalorder %s34, 1
      %p120 = por %p118, %p119
      %p122 = scmp.ne.s32.totalorder %s107, %s121
      %p123 = scmp.eq.s32.totalorder %s34, 0
      %p124 = por %p122, %p123
      %s126 = sadd.s32 %s125, 1
      %p129 = scmp.eq.s32.totalorder %s28, 1
      %p130 = scmp.ne.s32.totalorder %s125, %s127
      %p131 = scmp.eq.s32.totalorder %s28, 0
      %p132 = por %p130, %p131
      %p133 = scmp.ne.s32.totalorder %s125, %s127
      %p134 = scmp.eq.s32.totalorder %s33, 1
      %p135 = por %p133, %p134
      %p136 = scmp.ne.s32.totalorder %s127, %s128
      %p137 = scmp.eq.s32.totalorder %s33, 0
      %p138 = por %p136, %p137
      %p139 = scmp.ne.s32.totalorder %s127, %s128
      %p140 = scmp.eq.s32.totalorder %s34, 1
      %p141 = por %p139, %p140
      %p143 = scmp.ne.s32.totalorder %s128, %s142
      %p144 = scmp.eq.s32.totalorder %s34, 0
      %p145 = por %p143, %p144
      %s147 = sadd.s32 %s146, 1
      %p150 = scmp.eq.s32.totalorder %s28, 1
      %p151 = scmp.ne.s32.totalorder %s146, %s148
      %p152 = scmp.eq.s32.totalorder %s28, 0
      %p153 = por %p151, %p152
      %p154 = scmp.ne.s32.totalorder %s146, %s148
      %p155 = scmp.eq.s32.totalorder %s33, 1
      %p156 = por %p154, %p155
      %p157 = scmp.ne.s32.totalorder %s148, %s149
      %p158 = scmp.eq.s32.totalorder %s33, 0
      %p159 = por %p157, %p158
      %p160 = scmp.ne.s32.totalorder %s148, %s149
      %p161 = scmp.eq.s32.totalorder %s34, 1
      %p162 = por %p160, %p161
      %p164 = scmp.ne.s32.totalorder %s149, %s163
      %p165 = scmp.eq.s32.totalorder %s34, 0
      %p166 = por %p164, %p165
      %s168 = sadd.s32 %s167, 1
      %p171 = scmp.eq.s32.totalorder %s28, 1
      %p172 = scmp.ne.s32.totalorder %s167, %s169
      %p173 = scmp.eq.s32.totalorder %s28, 0
      %p174 = por %p172, %p173
      %p175 = scmp.ne.s32.totalorder %s167, %s169
      %p176 = scmp.eq.s32.totalorder %s33, 1
      %p177 = por %p175, %p176
      %p178 = scmp.ne.s32.totalorder %s169, %s170
      %p179 = scmp.eq.s32.totalorder %s33, 0
      %p180 = por %p178, %p179
      %p181 = scmp.ne.s32.totalorder %s169, %s170
      %p182 = scmp.eq.s32.totalorder %s34, 1
      %p183 = por %p181, %p182
      %p185 = scmp.ne.s32.totalorder %s170, %s184
      %p186 = scmp.eq.s32.totalorder %s34, 0
      %p187 = por %p185, %p186
      %s189 = sadd.s32 %s188, 1
      %p192 = scmp.eq.s32.totalorder %s28, 1
      %p193 = scmp.ne.s32.totalorder %s188, %s190
      %p194 = scmp.eq.s32.totalorder %s28, 0
      %p195 = por %p193, %p194
      %p196 = scmp.ne.s32.totalorder %s188, %s190
      %p197 = scmp.eq.s32.totalorder %s33, 1
      %p198 = por %p196, %p197
      %p199 = scmp.ne.s32.totalorder %s190, %s191
      %p200 = scmp.eq.s32.totalorder %s33, 0
      %p201 = por %p199, %p200
      %p202 = scmp.ne.s32.totalorder %s190, %s191
      %p203 = scmp.eq.s32.totalorder %s34, 1
      %p204 = por %p202, %p203
      %p206 = scmp.ne.s32.totalorder %s191, %s205
      %p207 = scmp.eq.s32.totalorder %s34, 0
      %p208 = por %p206, %p207
      %s210 = sadd.s32 %s209, 1
      %p213 = scmp.eq.s32.totalorder %s28, 1
      %p214 = scmp.ne.s32.totalorder %s209, %s211
      %p215 = scmp.eq.s32.totalorder %s28, 0
      %p216 = por %p214, %p215
      %p217 = scmp.ne.s32.totalorder %s209, %s211
      %p218 = scmp.eq.s32.totalorder %s33, 1
      %p219 = por %p217, %p218
      %p220 = scmp.ne.s32.totalorder %s211, %s212
      %p221 = scmp.eq.s32.totalorder %s33, 0
      %p222 = por %p220, %p221
      %p223 = scmp.ne.s32.totalorder %s211, %s212
      %p224 = scmp.eq.s32.totalorder %s34, 1
      %p225 = por %p223, %p224
      %p227 = scmp.ne.s32.totalorder %s212, %s226
      %p228 = scmp.eq.s32.totalorder %s34, 0
      %p229 = por %p227, %p228
      %s231 = sadd.s32 %s230, 1
      %p234 = scmp.eq.s32.totalorder %s28, 1
      %p235 = scmp.ne.s32.totalorder %s230, %s232
      %p236 = scmp.eq.s32.totalorder %s28, 0
      %p237 = por %p235, %p236
      %p238 = scmp.ne.s32.totalorder %s230, %s232
      %p239 = scmp.eq.s32.totalorder %s33, 1
      %p240 = por %p238, %p239
      %p241 = scmp.ne.s32.totalorder %s232, %s233
      %p242 = scmp.eq.s32.totalorder %s33, 0
      %p243 = por %p241, %p242
      %p244 = scmp.ne.s32.totalorder %s232, %s233
      %p245 = scmp.eq.s32.totalorder %s34, 1
      %p246 = por %p244, %p245
      %p248 = scmp.ne.s32.totalorder %s233, %s247
      %p249 = scmp.eq.s32.totalorder %s34, 0
      %p250 = por %p248, %p249
      %s252 = sadd.s32 %s251, 1
      %p255 = scmp.eq.s32.totalorder %s28, 1
      %p256 = scmp.ne.s32.totalorder %s251, %s253
      %p257 = scmp.eq.s32.totalorder %s28, 0
      %p258 = por %p256, %p257
      %p259 = scmp.ne.s32.totalorder %s251, %s253
      %p260 = scmp.eq.s32.totalorder %s33, 1
      %p261 = por %p259, %p260
      %p262 = scmp.ne.s32.totalorder %s253, %s254
      %p263 = scmp.eq.s32.totalorder %s33, 0
      %p264 = por %p262, %p263
      %p265 = scmp.ne.s32.totalorder %s253, %s254
      %p266 = scmp.eq.s32.totalorder %s34, 1
      %p267 = por %p265, %p266
      %p269 = scmp.ne.s32.totalorder %s254, %s268
      %p270 = scmp.eq.s32.totalorder %s34, 0
      %p271 = por %p269, %p270
      %s273 = sadd.s32 %s272, 1
      %p276 = scmp.eq.s32.totalorder %s28, 1
      %p277 = scmp.ne.s32.totalorder %s272, %s274
      %p278 = scmp.eq.s32.totalorder %s28, 0
      %p279 = por %p277, %p278
      %p280 = scmp.ne.s32.totalorder %s272, %s274
      %p281 = scmp.eq.s32.totalorder %s33, 1
      %p282 = por %p280, %p281
      %p283 = scmp.ne.s32.totalorder %s274, %s275
      %p284 = scmp.eq.s32.totalorder %s33, 0
      %p285 = por %p283, %p284
      %p286 = scmp.ne.s32.totalorder %s274, %s275
      %p287 = scmp.eq.s32.totalorder %s34, 1
      %p288 = por %p286, %p287
      %p290 = scmp.ne.s32.totalorder %s275, %s289
      %p291 = scmp.eq.s32.totalorder %s34, 0
      %p292 = por %p290, %p291
      %s294 = sadd.s32 %s293, 1
      %p297 = scmp.eq.s32.totalorder %s28, 1
      %p298 = scmp.ne.s32.totalorder %s293, %s295
      %p299 = scmp.eq.s32.totalorder %s28, 0
      %p300 = por %p298, %p299
      %p301 = scmp.ne.s32.totalorder %s293, %s295
      %p302 = scmp.eq.s32.totalorder %s33, 1
      %p303 = por %p301, %p302
      %p304 = scmp.ne.s32.totalorder %s295, %s296
      %p305 = scmp.eq.s32.totalorder %s33, 0
      %p306 = por %p304, %p305
      %p307 = scmp.ne.s32.totalorder %s295, %s296
      %p308 = scmp.eq.s32.totalorder %s34, 1
      %p309 = por %p307, %p308
      %p311 = scmp.ne.s32.totalorder %s296, %s310
      %p312 = scmp.eq.s32.totalorder %s34, 0
      %p313 = por %p311, %p312
      %s315 = sadd.s32 %s314, 1
      %p318 = scmp.eq.s32.totalorder %s28, 1
      %p319 = scmp.ne.s32.totalorder %s314, %s316
      %p320 = scmp.eq.s32.totalorder %s28, 0
      %p321 = por %p319, %p320
      %p322 = scmp.ne.s32.totalorder %s314, %s316
      %p323 = scmp.eq.s32.totalorder %s33, 1
      %p324 = por %p322, %p323
      %p325 = scmp.ne.s32.totalorder %s316, %s317
      %p326 = scmp.eq.s32.totalorder %s33, 0
      %p327 = por %p325, %p326
      %p328 = scmp.ne.s32.totalorder %s316, %s317
      %p329 = scmp.eq.s32.totalorder %s34, 1
      %p330 = por %p328, %p329
      %p332 = scmp.ne.s32.totalorder %s317, %s331
      %p333 = scmp.eq.s32.totalorder %s34, 0
      %p334 = por %p332, %p333
      %s336 = sadd.s32 %s335, 1
      %p339 = scmp.eq.s32.totalorder %s28, 1
      %p340 = scmp.ne.s32.totalorder %s335, %s337
      %p341 = scmp.eq.s32.totalorder %s28, 0
      %p342 = por %p340, %p341
      %p343 = scmp.ne.s32.totalorder %s335, %s337
      %p344 = scmp.eq.s32.totalorder %s33, 1
      %p345 = por %p343, %p344
      %p346 = scmp.ne.s32.totalorder %s337, %s338
      %p347 = scmp.eq.s32.totalorder %s33, 0
      %p348 = por %p346, %p347
      %p349 = scmp.ne.s32.totalorder %s337, %s338
      %p350 = scmp.eq.s32.totalorder %s34, 1
      %p351 = por %p349, %p350
      %p353 = scmp.ne.s32.totalorder %s338, %s352
      %p354 = scmp.eq.s32.totalorder %s34, 0
      %p355 = por %p353, %p354
      %s357 = sadd.s32 %s356, 1
      %p360 = scmp.eq.s32.totalorder %s28, 1
      %p361 = scmp.ne.s32.totalorder %s356, %s358
      %p362 = scmp.eq.s32.totalorder %s28, 0
      %p363 = por %p361, %p362
      %p364 = scmp.ne.s32.totalorder %s356, %s358
      %p365 = scmp.eq.s32.totalorder %s33, 1
      %p366 = por %p364, %p365
      %p367 = scmp.ne.s32.totalorder %s358, %s359
      %p368 = scmp.eq.s32.totalorder %s33, 0
      %p369 = por %p367, %p368
      %p370 = scmp.ne.s32.totalorder %s358, %s359
      %p371 = scmp.eq.s32.totalorder %s34, 1
      %p372 = por %p370, %p371
      %p374 = scmp.ne.s32.totalorder %s359, %s373
      %p375 = scmp.eq.s32.totalorder %s34, 0
      %p376 = por %p374, %p375
      %s378 = sadd.s32 %s377, 1
      %p381 = scmp.eq.s32.totalorder %s28, 1
      %p382 = scmp.ne.s32.totalorder %s377, %s379
      %p383 = scmp.eq.s32.totalorder %s28, 0
      %p384 = por %p382, %p383
      %p385 = scmp.ne.s32.totalorder %s377, %s379
      %p386 = scmp.eq.s32.totalorder %s33, 1
      %p387 = por %p385, %p386
      %p388 = scmp.ne.s32.totalorder %s379, %s380
      %p389 = scmp.eq.s32.totalorder %s33, 0
      %p390 = por %p388, %p389
      %p391 = scmp.ne.s32.totalorder %s379, %s380
      %p392 = scmp.eq.s32.totalorder %s34, 1
      %p393 = por %p391, %p392
      %p395 = scmp.ne.s32.totalorder %s380, %s394
      %p396 = scmp.eq.s32.totalorder %s34, 0
      %p397 = por %p395, %p396
      %s399 = sadd.s32 %s398, 1
      %p402 = scmp.eq.s32.totalorder %s28, 1
      %p403 = scmp.ne.s32.totalorder %s398, %s400
      %p404 = scmp.eq.s32.totalorder %s28, 0
      %p405 = por %p403, %p404
      %p406 = scmp.ne.s32.totalorder %s398, %s400
      %p407 = scmp.eq.s32.totalorder %s33, 1
      %p408 = por %p406, %p407
      %p409 = scmp.ne.s32.totalorder %s400, %s401
      %p410 = scmp.eq.s32.totalorder %s33, 0
      %p411 = por %p409, %p410
      %p412 = scmp.ne.s32.totalorder %s400, %s401
      %p413 = scmp.eq.s32.totalorder %s34, 1
      %p414 = por %p412, %p413
      %p416 = scmp.ne.s32.totalorder %s401, %s415
      %p417 = scmp.eq.s32.totalorder %s34, 0
      %p418 = por %p416, %p417
      %s420 = sadd.s32 %s419, 1
      %p423 = scmp.eq.s32.totalorder %s28, 1
      %p424 = scmp.ne.s32.totalorder %s419, %s421
      %p425 = scmp.eq.s32.totalorder %s28, 0
      %p426 = por %p424, %p425
      %p427 = scmp.ne.s32.totalorder %s419, %s421
      %p428 = scmp.eq.s32.totalorder %s33, 1
      %p429 = por %p427, %p428
      %p430 = scmp.ne.s32.totalorder %s421, %s422
      %p431 = scmp.eq.s32.totalorder %s33, 0
      %p432 = por %p430, %p431
      %p433 = scmp.ne.s32.totalorder %s421, %s422
      %p434 = scmp.eq.s32.totalorder %s34, 1
      %p435 = por %p433, %p434
      %p437 = scmp.ne.s32.totalorder %s422, %s436
      %p438 = scmp.eq.s32.totalorder %s34, 0
      %p439 = por %p437, %p438
      %s440 = ssub.s32 %s28, %s35
      %p441 = scmp.eq.s32.totalorder %s440, 0
      %s443 = sadd.s32 %s442, 1
      %s444 = scalar_select %p441, %s442, %s443
      %p447 = pneg %p441
      %p448 = scmp.eq.s32.totalorder %s28, 1
      %p449 = por %p447, %p448
      %p450 = scmp.ne.s32.totalorder %s442, %s445
      %p451 = scmp.eq.s32.totalorder %s28, 0
      %p452 = por %p450, %p451
      %p453 = scmp.ne.s32.totalorder %s442, %s445
      %p454 = scmp.eq.s32.totalorder %s33, 1
      %p455 = por %p453, %p454
      %p456 = scmp.ne.s32.totalorder %s445, %s446
      %p457 = scmp.eq.s32.totalorder %s33, 0
      %p458 = por %p456, %p457
      %p459 = scmp.ne.s32.totalorder %s445, %s446
      %p460 = scmp.eq.s32.totalorder %s34, 1
      %p461 = por %p459, %p460
      %p463 = scmp.ne.s32.totalorder %s446, %s462
      %p464 = scmp.eq.s32.totalorder %s34, 0
      %p465 = por %p463, %p464
      %p466 = scmp.le.s32.totalorder 1, %s28
      %p467 = scmp.lt.s32.totalorder %s28, 3
      %p468 = pnand %p466, %p467
      %p469 = pneg %p468
      // Predicated region
      $region9: #{net_forward_pallas.1} parent=5 // pred_check
        _
      $region10: #{net_forward_pallas.1} parent=5 // pred_check_branch
        %471 = sbr.rel (%p468) target = $region12
      $region11: #{net_forward_pallas.1} parent=5 // pred_region
        %s472 = ssub.s32 %s28, 1
        // Predicated region
        $region13: #{net_forward_pallas.1} parent=11 // pred_check
          %p473 = pneg %p75
        $region14: #{net_forward_pallas.1} parent=11 // pred_check_branch
          %475 = sbr.rel (%p473) target = $region16
        $region15: #{net_forward_pallas.1} parent=11 // pred_region
          _
        $region16: #{net_forward_pallas.1} parent=11 // pred_fallthru
          _
        // Predicated region
        $region17: #{net_forward_pallas.1} parent=11 // pred_check
          %p476 = pneg %p96
        $region18: #{net_forward_pallas.1} parent=11 // pred_check_branch
          %478 = sbr.rel (%p476) target = $region20
        $region19: #{net_forward_pallas.1} parent=11 // pred_region
          _
        $region20: #{net_forward_pallas.1} parent=11 // pred_fallthru
          _
        // Predicated region
        $region21: #{net_forward_pallas.1} parent=11 // pred_check
          %p479 = pneg %p117
        $region22: #{net_forward_pallas.1} parent=11 // pred_check_branch
          %481 = sbr.rel (%p479) target = $region24
        $region23: #{net_forward_pallas.1} parent=11 // pred_region
          _
        $region24: #{net_forward_pallas.1} parent=11 // pred_fallthru
          _
        // Predicated region
        $region25: #{net_forward_pallas.1} parent=11 // pred_check
          %p482 = pneg %p138
        $region26: #{net_forward_pallas.1} parent=11 // pred_check_branch
          %484 = sbr.rel (%p482) target = $region28
        $region27: #{net_forward_pallas.1} parent=11 // pred_region
          _
        $region28: #{net_forward_pallas.1} parent=11 // pred_fallthru
          _
        // Predicated region
        $region29: #{net_forward_pallas.1} parent=11 // pred_check
          %p485 = pneg %p159
        $region30: #{net_forward_pallas.1} parent=11 // pred_check_branch
          %487 = sbr.rel (%p485) target = $region32
        $region31: #{net_forward_pallas.1} parent=11 // pred_region
          _
        $region32: #{net_forward_pallas.1} parent=11 // pred_fallthru
          _
        // Predicated region
        $region33: #{net_forward_pallas.1} parent=11 // pred_check
          %p488 = pneg %p180
        $region34: #{net_forward_pallas.1} parent=11 // pred_check_branch
          %490 = sbr.rel (%p488) target = $region36
        $region35: #{net_forward_pallas.1} parent=11 // pred_region
          _
        $region36: #{net_forward_pallas.1} parent=11 // pred_fallthru
          _
        // Predicated region
        $region37: #{net_forward_pallas.1} parent=11 // pred_check
          %p491 = pneg %p201
        $region38: #{net_forward_pallas.1} parent=11 // pred_check_branch
          %493 = sbr.rel (%p491) target = $region40
        $region39: #{net_forward_pallas.1} parent=11 // pred_region
          _
        $region40: #{net_forward_pallas.1} parent=11 // pred_fallthru
          _
        // Predicated region
        $region41: #{net_forward_pallas.1} parent=11 // pred_check
          %p494 = pneg %p222
        $region42: #{net_forward_pallas.1} parent=11 // pred_check_branch
          %496 = sbr.rel (%p494) target = $region44
        $region43: #{net_forward_pallas.1} parent=11 // pred_region
          _
        $region44: #{net_forward_pallas.1} parent=11 // pred_fallthru
          _
        // Predicated region
        $region45: #{net_forward_pallas.1} parent=11 // pred_check
          %p497 = pneg %p243
        $region46: #{net_forward_pallas.1} parent=11 // pred_check_branch
          %499 = sbr.rel (%p497) target = $region48
        $region47: #{net_forward_pallas.1} parent=11 // pred_region
          _
        $region48: #{net_forward_pallas.1} parent=11 // pred_fallthru
          _
        // Predicated region
        $region49: #{net_forward_pallas.1} parent=11 // pred_check
          %p500 = pneg %p264
        $region50: #{net_forward_pallas.1} parent=11 // pred_check_branch
          %502 = sbr.rel (%p500) target = $region52
        $region51: #{net_forward_pallas.1} parent=11 // pred_region
          _
        $region52: #{net_forward_pallas.1} parent=11 // pred_fallthru
          _
        // Predicated region
        $region53: #{net_forward_pallas.1} parent=11 // pred_check
          %p503 = pneg %p285
        $region54: #{net_forward_pallas.1} parent=11 // pred_check_branch
          %505 = sbr.rel (%p503) target = $region56
        $region55: #{net_forward_pallas.1} parent=11 // pred_region
          _
        $region56: #{net_forward_pallas.1} parent=11 // pred_fallthru
          _
        // Predicated region
        $region57: #{net_forward_pallas.1} parent=11 // pred_check
          %p506 = pneg %p306
        $region58: #{net_forward_pallas.1} parent=11 // pred_check_branch
          %508 = sbr.rel (%p506) target = $region60
        $region59: #{net_forward_pallas.1} parent=11 // pred_region
          _
        $region60: #{net_forward_pallas.1} parent=11 // pred_fallthru
          _
        // Predicated region
        $region61: #{net_forward_pallas.1} parent=11 // pred_check
          %p509 = pneg %p327
        $region62: #{net_forward_pallas.1} parent=11 // pred_check_branch
          %511 = sbr.rel (%p509) target = $region64
        $region63: #{net_forward_pallas.1} parent=11 // pred_region
          _
        $region64: #{net_forward_pallas.1} parent=11 // pred_fallthru
          _
        // Predicated region
        $region65: #{net_forward_pallas.1} parent=11 // pred_check
          %p512 = pneg %p348
        $region66: #{net_forward_pallas.1} parent=11 // pred_check_branch
          %514 = sbr.rel (%p512) target = $region68
        $region67: #{net_forward_pallas.1} parent=11 // pred_region
          _
        $region68: #{net_forward_pallas.1} parent=11 // pred_fallthru
          _
        // Predicated region
        $region69: #{net_forward_pallas.1} parent=11 // pred_check
          %p515 = pneg %p369
        $region70: #{net_forward_pallas.1} parent=11 // pred_check_branch
          %517 = sbr.rel (%p515) target = $region72
        $region71: #{net_forward_pallas.1} parent=11 // pred_region
          _
        $region72: #{net_forward_pallas.1} parent=11 // pred_fallthru
          _
        // Predicated region
        $region73: #{net_forward_pallas.1} parent=11 // pred_check
          %p518 = pneg %p390
        $region74: #{net_forward_pallas.1} parent=11 // pred_check_branch
          %520 = sbr.rel (%p518) target = $region76
        $region75: #{net_forward_pallas.1} parent=11 // pred_region
          _
        $region76: #{net_forward_pallas.1} parent=11 // pred_fallthru
          _
        // Predicated region
        $region77: #{net_forward_pallas.1} parent=11 // pred_check
          %p521 = pneg %p411
        $region78: #{net_forward_pallas.1} parent=11 // pred_check_branch
          %523 = sbr.rel (%p521) target = $region80
        $region79: #{net_forward_pallas.1} parent=11 // pred_region
          _
        $region80: #{net_forward_pallas.1} parent=11 // pred_fallthru
          _
        // Predicated region
        $region81: #{net_forward_pallas.1} parent=11 // pred_check
          %p524 = pneg %p432
        $region82: #{net_forward_pallas.1} parent=11 // pred_check_branch
          %526 = sbr.rel (%p524) target = $region84
        $region83: #{net_forward_pallas.1} parent=11 // pred_region
          _
        $region84: #{net_forward_pallas.1} parent=11 // pred_fallthru
          _
      $region12: #{net_forward_pallas.1} parent=5 // pred_fallthru
        _
      %p527 = scmp.lt.s32.totalorder %s28, 2
      // Predicated region
      $region85: #{net_forward_pallas.1} parent=5 // pred_check
        %p528 = pneg %p527
      $region86: #{net_forward_pallas.1} parent=5 // pred_check_branch
        %530 = sbr.rel (%p528) target = $region88
      $region87: #{net_forward_pallas.1} parent=5 // pred_region
        // Predicated region
        $region89: #{net_forward_pallas.1} parent=87 // pred_check
          %p531 = pneg %p48
        $region90: #{net_forward_pallas.1} parent=87 // pred_check_branch
          %533 = sbr.rel (%p531) target = $region92
        $region91: #{net_forward_pallas.1} parent=87 // pred_region
          %s534 = smul.u32 16, %s28
          %p535 = scmp.lt.s32.totalorder %s534, 31
          %s536 = scalar_select %p535, %s534, 31
          %s537 = smul.addr %s536, 8
          %s538 = scalar_lea.vmem %s0, %s537
          %s539 = smul.u32 16, %s28
        $region92: #{net_forward_pallas.1} parent=87 // pred_fallthru
          _
      $region88: #{net_forward_pallas.1} parent=5 // pred_fallthru
        _
      %p540 = scmp.le.s32.totalorder 1, %s28
      %p541 = scmp.lt.s32.totalorder %s28, 3
      %p542 = pnand %p540, %p541
      %p543 = pneg %p542
      // Predicated region
      $region93: #{net_forward_pallas.1} parent=5 // pred_check
        _
      $region94: #{net_forward_pallas.1} parent=5 // pred_check_branch
        %545 = sbr.rel (%p542) target = $region96
      $region95: #{net_forward_pallas.1} parent=5 // pred_region
        %s546 = ssub.s32 %s28, 1
        %s547 = smul.u32 16, %s33
        %p548 = scmp.lt.s32.totalorder %s547, 31
        %s549 = scalar_select %p548, %s547, 31
        %s550 = smul.addr %s549, 8
        %s551 = scalar_lea.vmem %s0, %s550
        %p552 = pneg %p54
        %p553 = pneg %p51
        %p554 = pneg %p75
        %p555 = pneg %p72
        %p556 = pneg %p96
        %p557 = pneg %p93
        %p558 = pneg %p117
        %p559 = pneg %p114
        %p560 = pneg %p138
        %p561 = pneg %p135
        %p562 = pneg %p159
        %p563 = pneg %p156
        %p564 = pneg %p180
        %p565 = pneg %p177
        %p566 = pneg %p201
        %p567 = pneg %p198
        %p568 = pneg %p222
        %p569 = pneg %p219
        %p570 = pneg %p243
        %p571 = pneg %p240
        %p572 = pneg %p264
        %p573 = pneg %p261
        %p574 = pneg %p285
        %p575 = pneg %p282
        %p576 = pneg %p306
        %p577 = pneg %p303
        %p578 = pneg %p327
        %p579 = pneg %p324
        %p580 = pneg %p348
        %p581 = pneg %p345
        %p582 = pneg %p369
        %p583 = pneg %p366
        %p584 = pneg %p390
        %p585 = pneg %p387
        %p586 = pneg %p411
        %p587 = pneg %p408
        %p588 = pneg %p432
        %p589 = pneg %p429
        %p590 = pneg %p458
        %p591 = pneg %p455
        %s592 = sand.u32 %s445, 1
        %s593 = scalar_lea.sflag [#allocation6], %s592
        %s594 = sand.u32 %s445, 1
        %s595 = smul.addr %s594, 4
        %s596 = scalar_lea.vmem [#allocation5], %s595
        %s597 = smul.u32 16, %s33
        %p598 = scmp.lt.s32.totalorder %s597, 31
        %s599 = scalar_select %p598, %s597, 31
        %s600 = smul.addr %s599, 8
        %s601 = scalar_lea.vmem %s0, %s600
        %s602 = smul.u32 16, %s33
        %v603 = vld [vmem:[%s601] sm:$0xff]
        %v604 = vld [vmem:[%s601 + $0x8] sm:$0xff]
        %v605 = vld [vmem:[%s601 + $0x10] sm:$0xff]
        %v606 = vld [vmem:[%s601 + $0x18] sm:$0xff]
        %v607 = vld [vmem:[%s601 + $0x20] sm:$0xff]
        %v608 = vld [vmem:[%s601 + $0x28] sm:$0xff]
        %v609 = vld [vmem:[%s601 + $0x30] sm:$0xff]
        %v610 = vld [vmem:[%s601 + $0x38] sm:$0xff]
        %v611 = vld [vmem:[%s601 + $0x40] sm:$0xff]
        %v612 = vld [vmem:[%s601 + $0x48] sm:$0xff]
        %v613 = vld [vmem:[%s601 + $0x50] sm:$0xff]
        %v614 = vld [vmem:[%s601 + $0x58] sm:$0xff]
        %v615 = vld [vmem:[%s601 + $0x60] sm:$0xff]
        %v616 = vld [vmem:[%s601 + $0x68] sm:$0xff]
        %v617 = vld [vmem:[%s601 + $0x70] sm:$0xff]
        %v618 = vld [vmem:[%s601 + $0x78] sm:$0xff]
        %vm619 = vcmask 785408
        %620 = vst.msk [vmem:[#allocation2] sm:$0xff] %vm619, %v603
        %621 = vst.msk [vmem:[#allocation2 + $0x8] sm:$0xff] %vm619, %v604
        %622 = vst.msk [vmem:[#allocation2 + $0x10] sm:$0xff] %vm619, %v605
        %623 = vst.msk [vmem:[#allocation2 + $0x18] sm:$0xff] %vm619, %v606
        %624 = vst.msk [vmem:[#allocation2 + $0x20] sm:$0xff] %vm619, %v607
        %625 = vst.msk [vmem:[#allocation2 + $0x28] sm:$0xff] %vm619, %v608
        %626 = vst.msk [vmem:[#allocation2 + $0x30] sm:$0xff] %vm619, %v609
        %627 = vst.msk [vmem:[#allocation2 + $0x38] sm:$0xff] %vm619, %v610
        %628 = vst.msk [vmem:[#allocation2 + $0x40] sm:$0xff] %vm619, %v611
        %629 = vst.msk [vmem:[#allocation2 + $0x48] sm:$0xff] %vm619, %v612
        %630 = vst.msk [vmem:[#allocation2 + $0x50] sm:$0xff] %vm619, %v613
        %631 = vst.msk [vmem:[#allocation2 + $0x58] sm:$0xff] %vm619, %v614
        %632 = vst.msk [vmem:[#allocation2 + $0x60] sm:$0xff] %vm619, %v615
        %633 = vst.msk [vmem:[#allocation2 + $0x68] sm:$0xff] %vm619, %v616
        %634 = vst.msk [vmem:[#allocation2 + $0x70] sm:$0xff] %vm619, %v617
        %635 = vst.msk [vmem:[#allocation2 + $0x78] sm:$0xff] %vm619, %v618
        %636 = vst.msk [vmem:[#allocation2 + $0x80] sm:$0xff] %vm619, 0.0
        %v637 = vld [vmem:[#allocation2] sm:$0xff]
        %v638 = vld [vmem:[#allocation2 + $0x8] sm:$0xff]
        %v639 = vld [vmem:[#allocation2 + $0x10] sm:$0xff]
        %v640 = vld [vmem:[#allocation2 + $0x18] sm:$0xff]
        %v641 = vld [vmem:[#allocation2 + $0x20] sm:$0xff]
        %v642 = vld [vmem:[#allocation2 + $0x28] sm:$0xff]
        %v643 = vld [vmem:[#allocation2 + $0x30] sm:$0xff]
        %v644 = vld [vmem:[#allocation2 + $0x38] sm:$0xff]
        %v645 = vld [vmem:[#allocation2 + $0x40] sm:$0xff]
        %v646 = vld [vmem:[#allocation2 + $0x48] sm:$0xff]
        %v647 = vld [vmem:[#allocation2 + $0x50] sm:$0xff]
        %v648 = vld [vmem:[#allocation2 + $0x58] sm:$0xff]
        %v649 = vld [vmem:[#allocation2 + $0x60] sm:$0xff]
        %v650 = vld [vmem:[#allocation2 + $0x68] sm:$0xff]
        %v651 = vld [vmem:[#allocation2 + $0x70] sm:$0xff]
        %v652 = vld [vmem:[#allocation2 + $0x78] sm:$0xff]
        %v653 = vld [vmem:[%s1] sm:$0xff]
        %v654 = vld [vmem:[%s1 + $0x8] sm:$0xff]
        %v655 = vld [vmem:[%s1 + $0x10] sm:$0xff]
        %v656 = vld [vmem:[%s1 + $0x18] sm:$0xff]
        %v657 = vld [vmem:[%s1 + $0x20] sm:$0xff]
        %v658 = vld [vmem:[%s1 + $0x28] sm:$0xff]
        %v659 = vld [vmem:[%s1 + $0x30] sm:$0xff]
        %v660 = vld [vmem:[%s1 + $0x38] sm:$0xff]
        %v661 = vld [vmem:[%s1 + $0x40] sm:$0xff]
        %v662 = vld [vmem:[%s1 + $0x48] sm:$0xff]
        %v663 = vld [vmem:[%s1 + $0x50] sm:$0xff]
        %v664 = vld [vmem:[%s1 + $0x58] sm:$0xff]
        %v665 = vld [vmem:[%s1 + $0x60] sm:$0xff]
        %v666 = vld [vmem:[%s1 + $0x68] sm:$0xff]
        %v667 = vld [vmem:[%s1 + $0x70] sm:$0xff]
        %v668 = vld [vmem:[%s1 + $0x78] sm:$0xff]
        %v669 = vld [vmem:[%s1 + $0x80] sm:$0xff]
        %v670 = vld [vmem:[%s1 + $0x88] sm:$0xff]
        %v671 = vld [vmem:[%s1 + $0x90] sm:$0xff]
        %v672 = vld [vmem:[%s1 + $0x98] sm:$0xff]
        %v673 = vld [vmem:[%s1 + $0xa0] sm:$0xff]
        %v674 = vld [vmem:[%s1 + $0xa8] sm:$0xff]
        %v675 = vld [vmem:[%s1 + $0xb0] sm:$0xff]
        %v676 = vld [vmem:[%s1 + $0xb8] sm:$0xff]
        %v677 = vld [vmem:[#allocation2 + $0x1] sm:$0xff]
        %v678 = vld [vmem:[#allocation2 + $0x9] sm:$0xff]
        %v679 = vld [vmem:[#allocation2 + $0x11] sm:$0xff]
        %v680 = vld [vmem:[#allocation2 + $0x19] sm:$0xff]
        %v681 = vld [vmem:[#allocation2 + $0x21] sm:$0xff]
        %v682 = vld [vmem:[#allocation2 + $0x29] sm:$0xff]
        %v683 = vld [vmem:[#allocation2 + $0x31] sm:$0xff]
        %v684 = vld [vmem:[#allocation2 + $0x39] sm:$0xff]
        %v685 = vld [vmem:[#allocation2 + $0x41] sm:$0xff]
        %v686 = vld [vmem:[#allocation2 + $0x49] sm:$0xff]
        %v687 = vld [vmem:[#allocation2 + $0x51] sm:$0xff]
        %v688 = vld [vmem:[#allocation2 + $0x59] sm:$0xff]
        %v689 = vld [vmem:[#allocation2 + $0x61] sm:$0xff]
        %v690 = vld [vmem:[#allocation2 + $0x69] sm:$0xff]
        %v691 = vld [vmem:[#allocation2 + $0x71] sm:$0xff]
        %v692 = vld [vmem:[#allocation2 + $0x79] sm:$0xff]
        %s693 = scalar_lea.vmem %s1, 192
        %v694 = vld [vmem:[%s693] sm:$0xff]
        %v695 = vld [vmem:[%s693 + $0x8] sm:$0xff]
        %v696 = vld [vmem:[%s693 + $0x10] sm:$0xff]
        %v697 = vld [vmem:[%s693 + $0x18] sm:$0xff]
        %v698 = vld [vmem:[%s693 + $0x20] sm:$0xff]
        %v699 = vld [vmem:[%s693 + $0x28] sm:$0xff]
        %v700 = vld [vmem:[%s693 + $0x30] sm:$0xff]
        %v701 = vld [vmem:[%s693 + $0x38] sm:$0xff]
        %v702 = vld [vmem:[%s693 + $0x40] sm:$0xff]
        %v703 = vld [vmem:[%s693 + $0x48] sm:$0xff]
        %v704 = vld [vmem:[%s693 + $0x50] sm:$0xff]
        %v705 = vld [vmem:[%s693 + $0x58] sm:$0xff]
        %v706 = vld [vmem:[%s693 + $0x60] sm:$0xff]
        %v707 = vld [vmem:[%s693 + $0x68] sm:$0xff]
        %v708 = vld [vmem:[%s693 + $0x70] sm:$0xff]
        %v709 = vld [vmem:[%s693 + $0x78] sm:$0xff]
        %v710 = vld [vmem:[%s693 + $0x80] sm:$0xff]
        %v711 = vld [vmem:[%s693 + $0x88] sm:$0xff]
        %v712 = vld [vmem:[%s693 + $0x90] sm:$0xff]
        %v713 = vld [vmem:[%s693 + $0x98] sm:$0xff]
        %v714 = vld [vmem:[%s693 + $0xa0] sm:$0xff]
        %v715 = vld [vmem:[%s693 + $0xa8] sm:$0xff]
        %v716 = vld [vmem:[%s693 + $0xb0] sm:$0xff]
        %v717 = vld [vmem:[%s693 + $0xb8] sm:$0xff]
        %v719 = vsel %vm619, %v677, 0
        %v722 = vsel %vm619, %v678, 0
        %v725 = vsel %vm619, %v679, 0
        %v728 = vsel %vm619, %v680, 0
        %v731 = vsel %vm619, %v681, 0
        %v734 = vsel %vm619, %v682, 0
        %v737 = vsel %vm619, %v683, 0
        %v740 = vsel %vm619, %v684, 0
        %v743 = vsel %vm619, %v685, 0
        %v746 = vsel %vm619, %v686, 0
        %v749 = vsel %vm619, %v687, 0
        %v752 = vsel %vm619, %v688, 0
        %v755 = vsel %vm619, %v689, 0
        %v758 = vsel %vm619, %v690, 0
        %v761 = vsel %vm619, %v691, 0
        %v764 = vsel %vm619, %v692, 0
        %766 = vmatprep.subr.mxu0 0.0
        %767 = vmatpush1.msra.mxu0 0.0
        %768 = vmatprep.subr.mxu0 0.0
        %769 = vmatpush1.msra.mxu0 0.0
        %770 = vmatprep.subr.mxu0 0.0
        %771 = vmatpush1.msra.mxu0 0.0
        %772 = vmatprep.subr.mxu0 0.0
        %773 = vmatpush1.msra.mxu0 0.0
        %774 = vmatprep.subr.mxu0 %v717
        %775 = vmatpush1.msra.mxu0 %v716
        %776 = vmatprep.subr.mxu0 %v715
        %777 = vmatpush1.msra.mxu0 %v714
        %778 = vmatprep.subr.mxu0 %v713
        %779 = vmatpush1.msra.mxu0 %v712
        %780 = vmatprep.subr.mxu0 %v711
        %781 = vmatpush1.msra.mxu0 %v710
        %782 = vmatprep.subr.mxu0 %v709
        %783 = vmatpush1.msra.mxu0 %v708
        %784 = vmatprep.subr.mxu0 %v707
        %785 = vmatpush1.msra.mxu0 %v706
        %786 = vmatprep.subr.mxu0 %v705
        %787 = vmatpush1.msra.mxu0 %v704
        %788 = vmatprep.subr.mxu0 %v703
        %789 = vmatpush1.msra.mxu0 %v702
        %790 = vmatprep.subr.mxu0 %v701
        %791 = vmatpush1.msra.mxu0 %v700
        %792 = vmatprep.subr.mxu0 %v699
        %793 = vmatpush1.msra.mxu0 %v698
        %794 = vmatprep.subr.mxu0 %v697
        %795 = vmatpush1.msra.mxu0 %v696
        %796 = vmatprep.subr.mxu0 %v695
        %797 = vmatpush1.msra.mxu0 %v694
        %798 = vmatprep.subr.mxu0 0.0
        %799 = vmatpush2.msra.mxu0 0.0
        %800 = vmatprep.subr.mxu0 0.0
        %801 = vmatpush2.msra.mxu0 0.0
        %802 = vmatprep.subr.mxu0 0.0
        %803 = vmatpush2.msra.mxu0 0.0
        %804 = vmatprep.subr.mxu0 0.0
        %805 = vmatpush2.msra.mxu0 0.0
        %806 = vmatprep.subr.mxu0 0.0
        %807 = vmatpush2.msra.mxu0 0.0
        %808 = vmatprep.subr.mxu0 0.0
        %809 = vmatpush2.msra.mxu0 0.0
        %810 = vmatprep.subr.mxu0 0.0
        %811 = vmatpush2.msra.mxu0 0.0
        %812 = vmatprep.subr.mxu0 0.0
        %813 = vmatpush2.msra.mxu0 0.0
        %814 = vmatprep.subr.mxu0 0.0
        %815 = vmatpush2.msra.mxu0 0.0
        %816 = vmatprep.subr.mxu0 0.0
        %817 = vmatpush2.msra.mxu0 0.0
        %818 = vmatprep.subr.mxu0 0.0
        %819 = vmatpush2.msra.mxu0 0.0
        %820 = vmatprep.subr.mxu0 0.0
        %821 = vmatpush2.msra.mxu0 0.0
        %822 = vmatprep.subr.mxu0 0.0
        %823 = vmatpush2.msra.mxu0 0.0
        %824 = vmatprep.subr.mxu0 0.0
        %825 = vmatpush2.msra.mxu0 0.0
        %826 = vmatprep.subr.mxu0 0.0
        %827 = vmatpush2.msra.mxu0 0.0
        %828 = vmatprep.subr.mxu0 0.0
        %829 = vmatpush2.msra.mxu0 0.0
        %830 = vmatprep.mubr.f32.mxu0 0.0
        %831 = vmatmul.mubr.f32.gmra.mxu0 %v719
        %v832 = vpop.f32.mrf.mxu0
        %v833 = vadd.f32 0.0, %v832
        %v834 = vpop.f32.mrf.mxu0
        %v835 = vadd.f32 0.0, %v834
        %836 = vmatprep.mubr.f32.mxu0 0.0
        %837 = vmatmul.mubr.f32.gmra.mxu0 %v722
        %v838 = vpop.f32.mrf.mxu0
        %v839 = vadd.f32 0.0, %v838
        %v840 = vpop.f32.mrf.mxu0
        %v841 = vadd.f32 0.0, %v840
        %842 = vmatprep.mubr.f32.mxu0 0.0
        %843 = vmatmul.mubr.f32.gmra.mxu0 %v725
        %v844 = vpop.f32.mrf.mxu0
        %v845 = vadd.f32 0.0, %v844
        %v846 = vpop.f32.mrf.mxu0
        %v847 = vadd.f32 0.0, %v846
        %848 = vmatprep.mubr.f32.mxu0 0.0
        %849 = vmatmul.mubr.f32.gmra.mxu0 %v728
        %v850 = vpop.f32.mrf.mxu0
        %v851 = vadd.f32 0.0, %v850
        %v852 = vpop.f32.mrf.mxu0
        %v853 = vadd.f32 0.0, %v852
        %854 = vmatprep.mubr.f32.mxu0 0.0
        %855 = vmatmul.mubr.f32.gmra.mxu0 %v731
        %v856 = vpop.f32.mrf.mxu0
        %v857 = vadd.f32 0.0, %v856
        %v858 = vpop.f32.mrf.mxu0
        %v859 = vadd.f32 0.0, %v858
        %860 = vmatprep.mubr.f32.mxu0 0.0
        %861 = vmatmul.mubr.f32.gmra.mxu0 %v734
        %v862 = vpop.f32.mrf.mxu0
        %v863 = vadd.f32 0.0, %v862
        %v864 = vpop.f32.mrf.mxu0
        %v865 = vadd.f32 0.0, %v864
        %866 = vmatprep.mubr.f32.mxu0 0.0
        %867 = vmatmul.mubr.f32.gmra.mxu0 %v737
        %v868 = vpop.f32.mrf.mxu0
        %v869 = vadd.f32 0.0, %v868
        %v870 = vpop.f32.mrf.mxu0
        %v871 = vadd.f32 0.0, %v870
        %872 = vmatprep.mubr.f32.mxu0 0.0
        %873 = vmatmul.mubr.f32.gmra.mxu0 %v740
        %v874 = vpop.f32.mrf.mxu0
        %v875 = vadd.f32 0.0, %v874
        %v876 = vpop.f32.mrf.mxu0
        %v877 = vadd.f32 0.0, %v876
        %878 = vmatprep.mubr.f32.mxu0 0.0
        %879 = vmatmul.mubr.f32.gmra.mxu0 %v743
        %v880 = vpop.f32.mrf.mxu0
        %v881 = vadd.f32 0.0, %v880
        %v882 = vpop.f32.mrf.mxu0
        %v883 = vadd.f32 0.0, %v882
        %884 = vmatprep.mubr.f32.mxu0 0.0
        %885 = vmatmul.mubr.f32.gmra.mxu0 %v746
        %v886 = vpop.f32.mrf.mxu0
        %v887 = vadd.f32 0.0, %v886
        %v888 = vpop.f32.mrf.mxu0
        %v889 = vadd.f32 0.0, %v888
        %890 = vmatprep.mubr.f32.mxu0 0.0
        %891 = vmatmul.mubr.f32.gmra.mxu0 %v749
        %v892 = vpop.f32.mrf.mxu0
        %v893 = vadd.f32 0.0, %v892
        %v894 = vpop.f32.mrf.mxu0
        %v895 = vadd.f32 0.0, %v894
        %896 = vmatprep.mubr.f32.mxu0 0.0
        %897 = vmatmul.mubr.f32.gmra.mxu0 %v752
        %v898 = vpop.f32.mrf.mxu0
        %v899 = vadd.f32 0.0, %v898
        %v900 = vpop.f32.mrf.mxu0
        %v901 = vadd.f32 0.0, %v900
        %902 = vmatprep.mubr.f32.mxu0 0.0
        %903 = vmatmul.mubr.f32.gmra.mxu0 %v755
        %v904 = vpop.f32.mrf.mxu0
        %v905 = vadd.f32 0.0, %v904
        %v906 = vpop.f32.mrf.mxu0
        %v907 = vadd.f32 0.0, %v906
        %908 = vmatprep.mubr.f32.mxu0 0.0
        %909 = vmatmul.mubr.f32.gmra.mxu0 %v758
        %v910 = vpop.f32.mrf.mxu0
        %v911 = vadd.f32 0.0, %v910
        %v912 = vpop.f32.mrf.mxu0
        %v913 = vadd.f32 0.0, %v912
        %914 = vmatprep.mubr.f32.mxu0 0.0
        %915 = vmatmul.mubr.f32.gmra.mxu0 %v761
        %v916 = vpop.f32.mrf.mxu0
        %v917 = vadd.f32 0.0, %v916
        %v918 = vpop.f32.mrf.mxu0
        %v919 = vadd.f32 0.0, %v918
        %920 = vmatprep.mubr.f32.mxu0 0.0
        %921 = vmatmul.mubr.f32.gmra.mxu0 %v764
        %v922 = vpop.f32.mrf.mxu0
        %v923 = vadd.f32 0.0, %v922
        %v924 = vpop.f32.mrf.mxu0
        %v925 = vadd.f32 0.0, %v924
        %926 = vdwg.mxu0
        %v928 = vsel %vm619, %v637, 0
        %v931 = vsel %vm619, %v638, 0
        %v934 = vsel %vm619, %v639, 0
        %v937 = vsel %vm619, %v640, 0
        %v940 = vsel %vm619, %v641, 0
        %v943 = vsel %vm619, %v642, 0
        %v946 = vsel %vm619, %v643, 0
        %v949 = vsel %vm619, %v644, 0
        %v952 = vsel %vm619, %v645, 0
        %v955 = vsel %vm619, %v646, 0
        %v958 = vsel %vm619, %v647, 0
        %v961 = vsel %vm619, %v648, 0
        %v964 = vsel %vm619, %v649, 0
        %v967 = vsel %vm619, %v650, 0
        %v970 = vsel %vm619, %v651, 0
        %v973 = vsel %vm619, %v652, 0
        %975 = vmatprep.subr.mxu0 0.0
        %976 = vmatpush1.msra.mxu0 0.0
        %977 = vmatprep.subr.mxu0 0.0
        %978 = vmatpush1.msra.mxu0 0.0
        %979 = vmatprep.subr.mxu0 0.0
        %980 = vmatpush1.msra.mxu0 0.0
        %981 = vmatprep.subr.mxu0 0.0
        %982 = vmatpush1.msra.mxu0 0.0
        %983 = vmatprep.subr.mxu0 %v676
        %984 = vmatpush1.msra.mxu0 %v675
        %985 = vmatprep.subr.mxu0 %v674
        %986 = vmatpush1.msra.mxu0 %v673
        %987 = vmatprep.subr.mxu0 %v672
        %988 = vmatpush1.msra.mxu0 %v671
        %989 = vmatprep.subr.mxu0 %v670
        %990 = vmatpush1.msra.mxu0 %v669
        %991 = vmatprep.subr.mxu0 %v668
        %992 = vmatpush1.msra.mxu0 %v667
        %993 = vmatprep.subr.mxu0 %v666
        %994 = vmatpush1.msra.mxu0 %v665
        %995 = vmatprep.subr.mxu0 %v664
        %996 = vmatpush1.msra.mxu0 %v663
        %997 = vmatprep.subr.mxu0 %v662
        %998 = vmatpush1.msra.mxu0 %v661
        %999 = vmatprep.subr.mxu0 %v660
        %1000 = vmatpush1.msra.mxu0 %v659
        %1001 = vmatprep.subr.mxu0 %v658
        %1002 = vmatpush1.msra.mxu0 %v657
        %1003 = vmatprep.subr.mxu0 %v656
        %1004 = vmatpush1.msra.mxu0 %v655
        %1005 = vmatprep.subr.mxu0 %v654
        %1006 = vmatpush1.msra.mxu0 %v653
        %1007 = vmatprep.subr.mxu0 0.0
        %1008 = vmatpush2.msra.mxu0 0.0
        %1009 = vmatprep.subr.mxu0 0.0
        %1010 = vmatpush2.msra.mxu0 0.0
        %1011 = vmatprep.subr.mxu0 0.0
        %1012 = vmatpush2.msra.mxu0 0.0
        %1013 = vmatprep.subr.mxu0 0.0
        %1014 = vmatpush2.msra.mxu0 0.0
        %1015 = vmatprep.subr.mxu0 0.0
        %1016 = vmatpush2.msra.mxu0 0.0
        %1017 = vmatprep.subr.mxu0 0.0
        %1018 = vmatpush2.msra.mxu0 0.0
        %1019 = vmatprep.subr.mxu0 0.0
        %1020 = vmatpush2.msra.mxu0 0.0
        %1021 = vmatprep.subr.mxu0 0.0
        %1022 = vmatpush2.msra.mxu0 0.0
        %1023 = vmatprep.subr.mxu0 0.0
        %1024 = vmatpush2.msra.mxu0 0.0
        %1025 = vmatprep.subr.mxu0 0.0
        %1026 = vmatpush2.msra.mxu0 0.0
        %1027 = vmatprep.subr.mxu0 0.0
        %1028 = vmatpush2.msra.mxu0 0.0
        %1029 = vmatprep.subr.mxu0 0.0
        %1030 = vmatpush2.msra.mxu0 0.0
        %1031 = vmatprep.subr.mxu0 0.0
        %1032 = vmatpush2.msra.mxu0 0.0
        %1033 = vmatprep.subr.mxu0 0.0
        %1034 = vmatpush2.msra.mxu0 0.0
        %1035 = vmatprep.subr.mxu0 0.0
        %1036 = vmatpush2.msra.mxu0 0.0
        %1037 = vmatprep.subr.mxu0 0.0
        %1038 = vmatpush2.msra.mxu0 0.0
        %1039 = vmatprep.mubr.f32.mxu0 0.0
        %1040 = vmatmul.mubr.f32.gmra.mxu0 %v928
        %v1041 = vpop.f32.mrf.mxu0
        %v1042 = vadd.f32 %v833, %v1041
        %v1043 = vpop.f32.mrf.mxu0
        %v1044 = vadd.f32 %v835, %v1043
        %1045 = vmatprep.mubr.f32.mxu0 0.0
        %1046 = vmatmul.mubr.f32.gmra.mxu0 %v931
        %v1047 = vpop.f32.mrf.mxu0
        %v1048 = vadd.f32 %v839, %v1047
        %v1049 = vpop.f32.mrf.mxu0
        %v1050 = vadd.f32 %v841, %v1049
        %1051 = vmatprep.mubr.f32.mxu0 0.0
        %1052 = vmatmul.mubr.f32.gmra.mxu0 %v934
        %v1053 = vpop.f32.mrf.mxu0
        %v1054 = vadd.f32 %v845, %v1053
        %v1055 = vpop.f32.mrf.mxu0
        %v1056 = vadd.f32 %v847, %v1055
        %1057 = vmatprep.mubr.f32.mxu0 0.0
        %1058 = vmatmul.mubr.f32.gmra.mxu0 %v937
        %v1059 = vpop.f32.mrf.mxu0
        %v1060 = vadd.f32 %v851, %v1059
        %v1061 = vpop.f32.mrf.mxu0
        %v1062 = vadd.f32 %v853, %v1061
        %1063 = vmatprep.mubr.f32.mxu0 0.0
        %1064 = vmatmul.mubr.f32.gmra.mxu0 %v940
        %v1065 = vpop.f32.mrf.mxu0
        %v1066 = vadd.f32 %v857, %v1065
        %v1067 = vpop.f32.mrf.mxu0
        %v1068 = vadd.f32 %v859, %v1067
        %1069 = vmatprep.mubr.f32.mxu0 0.0
        %1070 = vmatmul.mubr.f32.gmra.mxu0 %v943
        %v1071 = vpop.f32.mrf.mxu0
        %v1072 = vadd.f32 %v863, %v1071
        %v1073 = vpop.f32.mrf.mxu0
        %v1074 = vadd.f32 %v865, %v1073
        %1075 = vmatprep.mubr.f32.mxu0 0.0
        %1076 = vmatmul.mubr.f32.gmra.mxu0 %v946
        %v1077 = vpop.f32.mrf.mxu0
        %v1078 = vadd.f32 %v869, %v1077
        %v1079 = vpop.f32.mrf.mxu0
        %v1080 = vadd.f32 %v871, %v1079
        %1081 = vmatprep.mubr.f32.mxu0 0.0
        %1082 = vmatmul.mubr.f32.gmra.mxu0 %v949
        %v1083 = vpop.f32.mrf.mxu0
        %v1084 = vadd.f32 %v875, %v1083
        %v1085 = vpop.f32.mrf.mxu0
        %v1086 = vadd.f32 %v877, %v1085
        %1087 = vmatprep.mubr.f32.mxu0 0.0
        %1088 = vmatmul.mubr.f32.gmra.mxu0 %v952
        %v1089 = vpop.f32.mrf.mxu0
        %v1090 = vadd.f32 %v881, %v1089
        %v1091 = vpop.f32.mrf.mxu0
        %v1092 = vadd.f32 %v883, %v1091
        %1093 = vmatprep.mubr.f32.mxu0 0.0
        %1094 = vmatmul.mubr.f32.gmra.mxu0 %v955
        %v1095 = vpop.f32.mrf.mxu0
        %v1096 = vadd.f32 %v887, %v1095
        %v1097 = vpop.f32.mrf.mxu0
        %v1098 = vadd.f32 %v889, %v1097
        %1099 = vmatprep.mubr.f32.mxu0 0.0
        %1100 = vmatmul.mubr.f32.gmra.mxu0 %v958
        %v1101 = vpop.f32.mrf.mxu0
        %v1102 = vadd.f32 %v893, %v1101
        %v1103 = vpop.f32.mrf.mxu0
        %v1104 = vadd.f32 %v895, %v1103
        %1105 = vmatprep.mubr.f32.mxu0 0.0
        %1106 = vmatmul.mubr.f32.gmra.mxu0 %v961
        %v1107 = vpop.f32.mrf.mxu0
        %v1108 = vadd.f32 %v899, %v1107
        %v1109 = vpop.f32.mrf.mxu0
        %v1110 = vadd.f32 %v901, %v1109
        %1111 = vmatprep.mubr.f32.mxu0 0.0
        %1112 = vmatmul.mubr.f32.gmra.mxu0 %v964
        %v1113 = vpop.f32.mrf.mxu0
        %v1114 = vadd.f32 %v905, %v1113
        %v1115 = vpop.f32.mrf.mxu0
        %v1116 = vadd.f32 %v907, %v1115
        %1117 = vmatprep.mubr.f32.mxu0 0.0
        %1118 = vmatmul.mubr.f32.gmra.mxu0 %v967
        %v1119 = vpop.f32.mrf.mxu0
        %v1120 = vadd.f32 %v911, %v1119
        %v1121 = vpop.f32.mrf.mxu0
        %v1122 = vadd.f32 %v913, %v1121
        %1123 = vmatprep.mubr.f32.mxu0 0.0
        %1124 = vmatmul.mubr.f32.gmra.mxu0 %v970
        %v1125 = vpop.f32.mrf.mxu0
        %v1126 = vadd.f32 %v917, %v1125
        %v1127 = vpop.f32.mrf.mxu0
        %v1128 = vadd.f32 %v919, %v1127
        %1129 = vmatprep.mubr.f32.mxu0 0.0
        %1130 = vmatmul.mubr.f32.gmra.mxu0 %v973
        %v1131 = vpop.f32.mrf.mxu0
        %v1132 = vadd.f32 %v923, %v1131
        %v1133 = vpop.f32.mrf.mxu0
        %v1134 = vadd.f32 %v925, %v1133
        %1135 = vdwg.mxu0
        %v1136 = vld [vmem:[#allocation2 + $0x2] sm:$0xff]
        %v1137 = vld [vmem:[#allocation2 + $0xa] sm:$0xff]
        %v1138 = vld [vmem:[#allocation2 + $0x12] sm:$0xff]
        %v1139 = vld [vmem:[#allocation2 + $0x1a] sm:$0xff]
        %v1140 = vld [vmem:[#allocation2 + $0x22] sm:$0xff]
        %v1141 = vld [vmem:[#allocation2 + $0x2a] sm:$0xff]
        %v1142 = vld [vmem:[#allocation2 + $0x32] sm:$0xff]
        %v1143 = vld [vmem:[#allocation2 + $0x3a] sm:$0xff]
        %v1144 = vld [vmem:[#allocation2 + $0x42] sm:$0xff]
        %v1145 = vld [vmem:[#allocation2 + $0x4a] sm:$0xff]
        %v1146 = vld [vmem:[#allocation2 + $0x52] sm:$0xff]
        %v1147 = vld [vmem:[#allocation2 + $0x5a] sm:$0xff]
        %v1148 = vld [vmem:[#allocation2 + $0x62] sm:$0xff]
        %v1149 = vld [vmem:[#allocation2 + $0x6a] sm:$0xff]
        %v1150 = vld [vmem:[#allocation2 + $0x72] sm:$0xff]
        %v1151 = vld [vmem:[#allocation2 + $0x7a] sm:$0xff]
        %s1152 = scalar_lea.vmem %s1, 384
        %v1153 = vld [vmem:[%s1152] sm:$0xff]
        %v1154 = vld [vmem:[%s1152 + $0x8] sm:$0xff]
        %v1155 = vld [vmem:[%s1152 + $0x10] sm:$0xff]
        %v1156 = vld [vmem:[%s1152 + $0x18] sm:$0xff]
        %v1157 = vld [vmem:[%s1152 + $0x20] sm:$0xff]
        %v1158 = vld [vmem:[%s1152 + $0x28] sm:$0xff]
        %v1159 = vld [vmem:[%s1152 + $0x30] sm:$0xff]
        %v1160 = vld [vmem:[%s1152 + $0x38] sm:$0xff]
        %v1161 = vld [vmem:[%s1152 + $0x40] sm:$0xff]
        %v1162 = vld [vmem:[%s1152 + $0x48] sm:$0xff]
        %v1163 = vld [vmem:[%s1152 + $0x50] sm:$0xff]
        %v1164 = vld [vmem:[%s1152 + $0x58] sm:$0xff]
        %v1165 = vld [vmem:[%s1152 + $0x60] sm:$0xff]
        %v1166 = vld [vmem:[%s1152 + $0x68] sm:$0xff]
        %v1167 = vld [vmem:[%s1152 + $0x70] sm:$0xff]
        %v1168 = vld [vmem:[%s1152 + $0x78] sm:$0xff]
        %v1169 = vld [vmem:[%s1152 + $0x80] sm:$0xff]
        %v1170 = vld [vmem:[%s1152 + $0x88] sm:$0xff]
        %v1171 = vld [vmem:[%s1152 + $0x90] sm:$0xff]
        %v1172 = vld [vmem:[%s1152 + $0x98] sm:$0xff]
        %v1173 = vld [vmem:[%s1152 + $0xa0] sm:$0xff]
        %v1174 = vld [vmem:[%s1152 + $0xa8] sm:$0xff]
        %v1175 = vld [vmem:[%s1152 + $0xb0] sm:$0xff]
        %v1176 = vld [vmem:[%s1152 + $0xb8] sm:$0xff]
        %v1178 = vsel %vm619, %v1136, 0
        %v1181 = vsel %vm619, %v1137, 0
        %v1184 = vsel %vm619, %v1138, 0
        %v1187 = vsel %vm619, %v1139, 0
        %v1190 = vsel %vm619, %v1140, 0
        %v1193 = vsel %vm619, %v1141, 0
        %v1196 = vsel %vm619, %v1142, 0
        %v1199 = vsel %vm619, %v1143, 0
        %v1202 = vsel %vm619, %v1144, 0
        %v1205 = vsel %vm619, %v1145, 0
        %v1208 = vsel %vm619, %v1146, 0
        %v1211 = vsel %vm619, %v1147, 0
        %v1214 = vsel %vm619, %v1148, 0
        %v1217 = vsel %vm619, %v1149, 0
        %v1220 = vsel %vm619, %v1150, 0
        %v1223 = vsel %vm619, %v1151, 0
        %1225 = vmatprep.subr.mxu0 0.0
        %1226 = vmatpush1.msra.mxu0 0.0
        %1227 = vmatprep.subr.mxu0 0.0
        %1228 = vmatpush1.msra.mxu0 0.0
        %1229 = vmatprep.subr.mxu0 0.0
        %1230 = vmatpush1.msra.mxu0 0.0
        %1231 = vmatprep.subr.mxu0 0.0
        %1232 = vmatpush1.msra.mxu0 0.0
        %1233 = vmatprep.subr.mxu0 %v1176
        %1234 = vmatpush1.msra.mxu0 %v1175
        %1235 = vmatprep.subr.mxu0 %v1174
        %1236 = vmatpush1.msra.mxu0 %v1173
        %1237 = vmatprep.subr.mxu0 %v1172
        %1238 = vmatpush1.msra.mxu0 %v1171
        %1239 = vmatprep.subr.mxu0 %v1170
        %1240 = vmatpush1.msra.mxu0 %v1169
        %1241 = vmatprep.subr.mxu0 %v1168
        %1242 = vmatpush1.msra.mxu0 %v1167
        %1243 = vmatprep.subr.mxu0 %v1166
        %1244 = vmatpush1.msra.mxu0 %v1165
        %1245 = vmatprep.subr.mxu0 %v1164
        %1246 = vmatpush1.msra.mxu0 %v1163
        %1247 = vmatprep.subr.mxu0 %v1162
        %1248 = vmatpush1.msra.mxu0 %v1161
        %1249 = vmatprep.subr.mxu0 %v1160
        %1250 = vmatpush1.msra.mxu0 %v1159
        %1251 = vmatprep.subr.mxu0 %v1158
        %1252 = vmatpush1.msra.mxu0 %v1157
        %1253 = vmatprep.subr.mxu0 %v1156
        %1254 = vmatpush1.msra.mxu0 %v1155
        %1255 = vmatprep.subr.mxu0 %v1154
        %1256 = vmatpush1.msra.mxu0 %v1153
        %1257 = vmatprep.subr.mxu0 0.0
        %1258 = vmatpush2.msra.mxu0 0.0
        %1259 = vmatprep.subr.mxu0 0.0
        %1260 = vmatpush2.msra.mxu0 0.0
        %1261 = vmatprep.subr.mxu0 0.0
        %1262 = vmatpush2.msra.mxu0 0.0
        %1263 = vmatprep.subr.mxu0 0.0
        %1264 = vmatpush2.msra.mxu0 0.0
        %1265 = vmatprep.subr.mxu0 0.0
        %1266 = vmatpush2.msra.mxu0 0.0
        %1267 = vmatprep.subr.mxu0 0.0
        %1268 = vmatpush2.msra.mxu0 0.0
        %1269 = vmatprep.subr.mxu0 0.0
        %1270 = vmatpush2.msra.mxu0 0.0
        %1271 = vmatprep.subr.mxu0 0.0
        %1272 = vmatpush2.msra.mxu0 0.0
        %1273 = vmatprep.subr.mxu0 0.0
        %1274 = vmatpush2.msra.mxu0 0.0
        %1275 = vmatprep.subr.mxu0 0.0
        %1276 = vmatpush2.msra.mxu0 0.0
        %1277 = vmatprep.subr.mxu0 0.0
        %1278 = vmatpush2.msra.mxu0 0.0
        %1279 = vmatprep.subr.mxu0 0.0
        %1280 = vmatpush2.msra.mxu0 0.0
        %1281 = vmatprep.subr.mxu0 0.0
        %1282 = vmatpush2.msra.mxu0 0.0
        %1283 = vmatprep.subr.mxu0 0.0
        %1284 = vmatpush2.msra.mxu0 0.0
        %1285 = vmatprep.subr.mxu0 0.0
        %1286 = vmatpush2.msra.mxu0 0.0
        %1287 = vmatprep.subr.mxu0 0.0
        %1288 = vmatpush2.msra.mxu0 0.0
        %1289 = vmatprep.mubr.f32.mxu0 0.0
        %1290 = vmatmul.mubr.f32.gmra.mxu0 %v1178
        %v1291 = vpop.f32.mrf.mxu0
        %v1292 = vadd.f32 0.0, %v1291
        %v1293 = vpop.f32.mrf.mxu0
        %v1294 = vadd.f32 0.0, %v1293
        %1295 = vmatprep.mubr.f32.mxu0 0.0
        %1296 = vmatmul.mubr.f32.gmra.mxu0 %v1181
        %v1297 = vpop.f32.mrf.mxu0
        %v1298 = vadd.f32 0.0, %v1297
        %v1299 = vpop.f32.mrf.mxu0
        %v1300 = vadd.f32 0.0, %v1299
        %1301 = vmatprep.mubr.f32.mxu0 0.0
        %1302 = vmatmul.mubr.f32.gmra.mxu0 %v1184
        %v1303 = vpop.f32.mrf.mxu0
        %v1304 = vadd.f32 0.0, %v1303
        %v1305 = vpop.f32.mrf.mxu0
        %v1306 = vadd.f32 0.0, %v1305
        %1307 = vmatprep.mubr.f32.mxu0 0.0
        %1308 = vmatmul.mubr.f32.gmra.mxu0 %v1187
        %v1309 = vpop.f32.mrf.mxu0
        %v1310 = vadd.f32 0.0, %v1309
        %v1311 = vpop.f32.mrf.mxu0
        %v1312 = vadd.f32 0.0, %v1311
        %1313 = vmatprep.mubr.f32.mxu0 0.0
        %1314 = vmatmul.mubr.f32.gmra.mxu0 %v1190
        %v1315 = vpop.f32.mrf.mxu0
        %v1316 = vadd.f32 0.0, %v1315
        %v1317 = vpop.f32.mrf.mxu0
        %v1318 = vadd.f32 0.0, %v1317
        %1319 = vmatprep.mubr.f32.mxu0 0.0
        %1320 = vmatmul.mubr.f32.gmra.mxu0 %v1193
        %v1321 = vpop.f32.mrf.mxu0
        %v1322 = vadd.f32 0.0, %v1321
        %v1323 = vpop.f32.mrf.mxu0
        %v1324 = vadd.f32 0.0, %v1323
        %1325 = vmatprep.mubr.f32.mxu0 0.0
        %1326 = vmatmul.mubr.f32.gmra.mxu0 %v1196
        %v1327 = vpop.f32.mrf.mxu0
        %v1328 = vadd.f32 0.0, %v1327
        %v1329 = vpop.f32.mrf.mxu0
        %v1330 = vadd.f32 0.0, %v1329
        %1331 = vmatprep.mubr.f32.mxu0 0.0
        %1332 = vmatmul.mubr.f32.gmra.mxu0 %v1199
        %v1333 = vpop.f32.mrf.mxu0
        %v1334 = vadd.f32 0.0, %v1333
        %v1335 = vpop.f32.mrf.mxu0
        %v1336 = vadd.f32 0.0, %v1335
        %1337 = vmatprep.mubr.f32.mxu0 0.0
        %1338 = vmatmul.mubr.f32.gmra.mxu0 %v1202
        %v1339 = vpop.f32.mrf.mxu0
        %v1340 = vadd.f32 0.0, %v1339
        %v1341 = vpop.f32.mrf.mxu0
        %v1342 = vadd.f32 0.0, %v1341
        %1343 = vmatprep.mubr.f32.mxu0 0.0
        %1344 = vmatmul.mubr.f32.gmra.mxu0 %v1205
        %v1345 = vpop.f32.mrf.mxu0
        %v1346 = vadd.f32 0.0, %v1345
        %v1347 = vpop.f32.mrf.mxu0
        %v1348 = vadd.f32 0.0, %v1347
        %1349 = vmatprep.mubr.f32.mxu0 0.0
        %1350 = vmatmul.mubr.f32.gmra.mxu0 %v1208
        %v1351 = vpop.f32.mrf.mxu0
        %v1352 = vadd.f32 0.0, %v1351
        %v1353 = vpop.f32.mrf.mxu0
        %v1354 = vadd.f32 0.0, %v1353
        %1355 = vmatprep.mubr.f32.mxu0 0.0
        %1356 = vmatmul.mubr.f32.gmra.mxu0 %v1211
        %v1357 = vpop.f32.mrf.mxu0
        %v1358 = vadd.f32 0.0, %v1357
        %v1359 = vpop.f32.mrf.mxu0
        %v1360 = vadd.f32 0.0, %v1359
        %1361 = vmatprep.mubr.f32.mxu0 0.0
        %1362 = vmatmul.mubr.f32.gmra.mxu0 %v1214
        %v1363 = vpop.f32.mrf.mxu0
        %v1364 = vadd.f32 0.0, %v1363
        %v1365 = vpop.f32.mrf.mxu0
        %v1366 = vadd.f32 0.0, %v1365
        %1367 = vmatprep.mubr.f32.mxu0 0.0
        %1368 = vmatmul.mubr.f32.gmra.mxu0 %v1217
        %v1369 = vpop.f32.mrf.mxu0
        %v1370 = vadd.f32 0.0, %v1369
        %v1371 = vpop.f32.mrf.mxu0
        %v1372 = vadd.f32 0.0, %v1371
        %1373 = vmatprep.mubr.f32.mxu0 0.0
        %1374 = vmatmul.mubr.f32.gmra.mxu0 %v1220
        %v1375 = vpop.f32.mrf.mxu0
        %v1376 = vadd.f32 0.0, %v1375
        %v1377 = vpop.f32.mrf.mxu0
        %v1378 = vadd.f32 0.0, %v1377
        %1379 = vmatprep.mubr.f32.mxu0 0.0
        %1380 = vmatmul.mubr.f32.gmra.mxu0 %v1223
        %v1381 = vpop.f32.mrf.mxu0
        %v1382 = vadd.f32 0.0, %v1381
        %v1383 = vpop.f32.mrf.mxu0
        %v1384 = vadd.f32 0.0, %v1383
        %1385 = vdwg.mxu0
        %v1386 = vadd.f32 %v1042, %v1292
        %v1387 = vadd.f32 %v1044, %v1294
        %v1388 = vadd.f32 %v1048, %v1298
        %v1389 = vadd.f32 %v1050, %v1300
        %v1390 = vadd.f32 %v1054, %v1304
        %v1391 = vadd.f32 %v1056, %v1306
        %v1392 = vadd.f32 %v1060, %v1310
        %v1393 = vadd.f32 %v1062, %v1312
        %v1394 = vadd.f32 %v1066, %v1316
        %v1395 = vadd.f32 %v1068, %v1318
        %v1396 = vadd.f32 %v1072, %v1322
        %v1397 = vadd.f32 %v1074, %v1324
        %v1398 = vadd.f32 %v1078, %v1328
        %v1399 = vadd.f32 %v1080, %v1330
        %v1400 = vadd.f32 %v1084, %v1334
        %v1401 = vadd.f32 %v1086, %v1336
        %v1402 = vadd.f32 %v1090, %v1340
        %v1403 = vadd.f32 %v1092, %v1342
        %v1404 = vadd.f32 %v1096, %v1346
        %v1405 = vadd.f32 %v1098, %v1348
        %v1406 = vadd.f32 %v1102, %v1352
        %v1407 = vadd.f32 %v1104, %v1354
        %v1408 = vadd.f32 %v1108, %v1358
        %v1409 = vadd.f32 %v1110, %v1360
        %v1410 = vadd.f32 %v1114, %v1364
        %v1411 = vadd.f32 %v1116, %v1366
        %v1412 = vadd.f32 %v1120, %v1370
        %v1413 = vadd.f32 %v1122, %v1372
        %v1414 = vadd.f32 %v1126, %v1376
        %v1415 = vadd.f32 %v1128, %v1378
        %v1416 = vadd.f32 %v1132, %v1382
        %v1417 = vadd.f32 %v1134, %v1384
        %v1418 = vld [vmem:[#allocation2 + $0x3] sm:$0xff]
        %v1419 = vld [vmem:[#allocation2 + $0xb] sm:$0xff]
        %v1420 = vld [vmem:[#allocation2 + $0x13] sm:$0xff]
        %v1421 = vld [vmem:[#allocation2 + $0x1b] sm:$0xff]
        %v1422 = vld [vmem:[#allocation2 + $0x23] sm:$0xff]
        %v1423 = vld [vmem:[#allocation2 + $0x2b] sm:$0xff]
        %v1424 = vld [vmem:[#allocation2 + $0x33] sm:$0xff]
        %v1425 = vld [vmem:[#allocation2 + $0x3b] sm:$0xff]
        %v1426 = vld [vmem:[#allocation2 + $0x43] sm:$0xff]
        %v1427 = vld [vmem:[#allocation2 + $0x4b] sm:$0xff]
        %v1428 = vld [vmem:[#allocation2 + $0x53] sm:$0xff]
        %v1429 = vld [vmem:[#allocation2 + $0x5b] sm:$0xff]
        %v1430 = vld [vmem:[#allocation2 + $0x63] sm:$0xff]
        %v1431 = vld [vmem:[#allocation2 + $0x6b] sm:$0xff]
        %v1432 = vld [vmem:[#allocation2 + $0x73] sm:$0xff]
        %v1433 = vld [vmem:[#allocation2 + $0x7b] sm:$0xff]
        %s1434 = scalar_lea.vmem %s1, 576
        %v1435 = vld [vmem:[%s1434] sm:$0xff]
        %v1436 = vld [vmem:[%s1434 + $0x8] sm:$0xff]
        %v1437 = vld [vmem:[%s1434 + $0x10] sm:$0xff]
        %v1438 = vld [vmem:[%s1434 + $0x18] sm:$0xff]
        %v1439 = vld [vmem:[%s1434 + $0x20] sm:$0xff]
        %v1440 = vld [vmem:[%s1434 + $0x28] sm:$0xff]
        %v1441 = vld [vmem:[%s1434 + $0x30] sm:$0xff]
        %v1442 = vld [vmem:[%s1434 + $0x38] sm:$0xff]
        %v1443 = vld [vmem:[%s1434 + $0x40] sm:$0xff]
        %v1444 = vld [vmem:[%s1434 + $0x48] sm:$0xff]
        %v1445 = vld [vmem:[%s1434 + $0x50] sm:$0xff]
        %v1446 = vld [vmem:[%s1434 + $0x58] sm:$0xff]
        %v1447 = vld [vmem:[%s1434 + $0x60] sm:$0xff]
        %v1448 = vld [vmem:[%s1434 + $0x68] sm:$0xff]
        %v1449 = vld [vmem:[%s1434 + $0x70] sm:$0xff]
        %v1450 = vld [vmem:[%s1434 + $0x78] sm:$0xff]
        %v1451 = vld [vmem:[%s1434 + $0x80] sm:$0xff]
        %v1452 = vld [vmem:[%s1434 + $0x88] sm:$0xff]
        %v1453 = vld [vmem:[%s1434 + $0x90] sm:$0xff]
        %v1454 = vld [vmem:[%s1434 + $0x98] sm:$0xff]
        %v1455 = vld [vmem:[%s1434 + $0xa0] sm:$0xff]
        %v1456 = vld [vmem:[%s1434 + $0xa8] sm:$0xff]
        %v1457 = vld [vmem:[%s1434 + $0xb0] sm:$0xff]
        %v1458 = vld [vmem:[%s1434 + $0xb8] sm:$0xff]
        %v1460 = vsel %vm619, %v1418, 0
        %v1463 = vsel %vm619, %v1419, 0
        %v1466 = vsel %vm619, %v1420, 0
        %v1469 = vsel %vm619, %v1421, 0
        %v1472 = vsel %vm619, %v1422, 0
        %v1475 = vsel %vm619, %v1423, 0
        %v1478 = vsel %vm619, %v1424, 0
        %v1481 = vsel %vm619, %v1425, 0
        %v1484 = vsel %vm619, %v1426, 0
        %v1487 = vsel %vm619, %v1427, 0
        %v1490 = vsel %vm619, %v1428, 0
        %v1493 = vsel %vm619, %v1429, 0
        %v1496 = vsel %vm619, %v1430, 0
        %v1499 = vsel %vm619, %v1431, 0
        %v1502 = vsel %vm619, %v1432, 0
        %v1505 = vsel %vm619, %v1433, 0
        %1507 = vmatprep.subr.mxu0 0.0
        %1508 = vmatpush1.msra.mxu0 0.0
        %1509 = vmatprep.subr.mxu0 0.0
        %1510 = vmatpush1.msra.mxu0 0.0
        %1511 = vmatprep.subr.mxu0 0.0
        %1512 = vmatpush1.msra.mxu0 0.0
        %1513 = vmatprep.subr.mxu0 0.0
        %1514 = vmatpush1.msra.mxu0 0.0
        %1515 = vmatprep.subr.mxu0 %v1458
        %1516 = vmatpush1.msra.mxu0 %v1457
        %1517 = vmatprep.subr.mxu0 %v1456
        %1518 = vmatpush1.msra.mxu0 %v1455
        %1519 = vmatprep.subr.mxu0 %v1454
        %1520 = vmatpush1.msra.mxu0 %v1453
        %1521 = vmatprep.subr.mxu0 %v1452
        %1522 = vmatpush1.msra.mxu0 %v1451
        %1523 = vmatprep.subr.mxu0 %v1450
        %1524 = vmatpush1.msra.mxu0 %v1449
        %1525 = vmatprep.subr.mxu0 %v1448
        %1526 = vmatpush1.msra.mxu0 %v1447
        %1527 = vmatprep.subr.mxu0 %v1446
        %1528 = vmatpush1.msra.mxu0 %v1445
        %1529 = vmatprep.subr.mxu0 %v1444
        %1530 = vmatpush1.msra.mxu0 %v1443
        %1531 = vmatprep.subr.mxu0 %v1442
        %1532 = vmatpush1.msra.mxu0 %v1441
        %1533 = vmatprep.subr.mxu0 %v1440
        %1534 = vmatpush1.msra.mxu0 %v1439
        %1535 = vmatprep.subr.mxu0 %v1438
        %1536 = vmatpush1.msra.mxu0 %v1437
        %1537 = vmatprep.subr.mxu0 %v1436
        %1538 = vmatpush1.msra.mxu0 %v1435
        %1539 = vmatprep.subr.mxu0 0.0
        %1540 = vmatpush2.msra.mxu0 0.0
        %1541 = vmatprep.subr.mxu0 0.0
        %1542 = vmatpush2.msra.mxu0 0.0
        %1543 = vmatprep.subr.mxu0 0.0
        %1544 = vmatpush2.msra.mxu0 0.0
        %1545 = vmatprep.subr.mxu0 0.0
        %1546 = vmatpush2.msra.mxu0 0.0
        %1547 = vmatprep.subr.mxu0 0.0
        %1548 = vmatpush2.msra.mxu0 0.0
        %1549 = vmatprep.subr.mxu0 0.0
        %1550 = vmatpush2.msra.mxu0 0.0
        %1551 = vmatprep.subr.mxu0 0.0
        %1552 = vmatpush2.msra.mxu0 0.0
        %1553 = vmatprep.subr.mxu0 0.0
        %1554 = vmatpush2.msra.mxu0 0.0
        %1555 = vmatprep.subr.mxu0 0.0
        %1556 = vmatpush2.msra.mxu0 0.0
        %1557 = vmatprep.subr.mxu0 0.0
        %1558 = vmatpush2.msra.mxu0 0.0
        %1559 = vmatprep.subr.mxu0 0.0
        %1560 = vmatpush2.msra.mxu0 0.0
        %1561 = vmatprep.subr.mxu0 0.0
        %1562 = vmatpush2.msra.mxu0 0.0
        %1563 = vmatprep.subr.mxu0 0.0
        %1564 = vmatpush2.msra.mxu0 0.0
        %1565 = vmatprep.subr.mxu0 0.0
        %1566 = vmatpush2.msra.mxu0 0.0
        %1567 = vmatprep.subr.mxu0 0.0
        %1568 = vmatpush2.msra.mxu0 0.0
        %1569 = vmatprep.subr.mxu0 0.0
        %1570 = vmatpush2.msra.mxu0 0.0
        %1571 = vmatprep.mubr.f32.mxu0 0.0
        %1572 = vmatmul.mubr.f32.gmra.mxu0 %v1460
        %v1573 = vpop.f32.mrf.mxu0
        %v1574 = vadd.f32 0.0, %v1573
        %v1575 = vpop.f32.mrf.mxu0
        %v1576 = vadd.f32 0.0, %v1575
        %1577 = vmatprep.mubr.f32.mxu0 0.0
        %1578 = vmatmul.mubr.f32.gmra.mxu0 %v1463
        %v1579 = vpop.f32.mrf.mxu0
        %v1580 = vadd.f32 0.0, %v1579
        %v1581 = vpop.f32.mrf.mxu0
        %v1582 = vadd.f32 0.0, %v1581
        %1583 = vmatprep.mubr.f32.mxu0 0.0
        %1584 = vmatmul.mubr.f32.gmra.mxu0 %v1466
        %v1585 = vpop.f32.mrf.mxu0
        %v1586 = vadd.f32 0.0, %v1585
        %v1587 = vpop.f32.mrf.mxu0
        %v1588 = vadd.f32 0.0, %v1587
        %1589 = vmatprep.mubr.f32.mxu0 0.0
        %1590 = vmatmul.mubr.f32.gmra.mxu0 %v1469
        %v1591 = vpop.f32.mrf.mxu0
        %v1592 = vadd.f32 0.0, %v1591
        %v1593 = vpop.f32.mrf.mxu0
        %v1594 = vadd.f32 0.0, %v1593
        %1595 = vmatprep.mubr.f32.mxu0 0.0
        %1596 = vmatmul.mubr.f32.gmra.mxu0 %v1472
        %v1597 = vpop.f32.mrf.mxu0
        %v1598 = vadd.f32 0.0, %v1597
        %v1599 = vpop.f32.mrf.mxu0
        %v1600 = vadd.f32 0.0, %v1599
        %1601 = vmatprep.mubr.f32.mxu0 0.0
        %1602 = vmatmul.mubr.f32.gmra.mxu0 %v1475
        %v1603 = vpop.f32.mrf.mxu0
        %v1604 = vadd.f32 0.0, %v1603
        %v1605 = vpop.f32.mrf.mxu0
        %v1606 = vadd.f32 0.0, %v1605
        %1607 = vmatprep.mubr.f32.mxu0 0.0
        %1608 = vmatmul.mubr.f32.gmra.mxu0 %v1478
        %v1609 = vpop.f32.mrf.mxu0
        %v1610 = vadd.f32 0.0, %v1609
        %v1611 = vpop.f32.mrf.mxu0
        %v1612 = vadd.f32 0.0, %v1611
        %1613 = vmatprep.mubr.f32.mxu0 0.0
        %1614 = vmatmul.mubr.f32.gmra.mxu0 %v1481
        %v1615 = vpop.f32.mrf.mxu0
        %v1616 = vadd.f32 0.0, %v1615
        %v1617 = vpop.f32.mrf.mxu0
        %v1618 = vadd.f32 0.0, %v1617
        %1619 = vmatprep.mubr.f32.mxu0 0.0
        %1620 = vmatmul.mubr.f32.gmra.mxu0 %v1484
        %v1621 = vpop.f32.mrf.mxu0
        %v1622 = vadd.f32 0.0, %v1621
        %v1623 = vpop.f32.mrf.mxu0
        %v1624 = vadd.f32 0.0, %v1623
        %1625 = vmatprep.mubr.f32.mxu0 0.0
        %1626 = vmatmul.mubr.f32.gmra.mxu0 %v1487
        %v1627 = vpop.f32.mrf.mxu0
        %v1628 = vadd.f32 0.0, %v1627
        %v1629 = vpop.f32.mrf.mxu0
        %v1630 = vadd.f32 0.0, %v1629
        %1631 = vmatprep.mubr.f32.mxu0 0.0
        %1632 = vmatmul.mubr.f32.gmra.mxu0 %v1490
        %v1633 = vpop.f32.mrf.mxu0
        %v1634 = vadd.f32 0.0, %v1633
        %v1635 = vpop.f32.mrf.mxu0
        %v1636 = vadd.f32 0.0, %v1635
        %1637 = vmatprep.mubr.f32.mxu0 0.0
        %1638 = vmatmul.mubr.f32.gmra.mxu0 %v1493
        %v1639 = vpop.f32.mrf.mxu0
        %v1640 = vadd.f32 0.0, %v1639
        %v1641 = vpop.f32.mrf.mxu0
        %v1642 = vadd.f32 0.0, %v1641
        %1643 = vmatprep.mubr.f32.mxu0 0.0
        %1644 = vmatmul.mubr.f32.gmra.mxu0 %v1496
        %v1645 = vpop.f32.mrf.mxu0
        %v1646 = vadd.f32 0.0, %v1645
        %v1647 = vpop.f32.mrf.mxu0
        %v1648 = vadd.f32 0.0, %v1647
        %1649 = vmatprep.mubr.f32.mxu0 0.0
        %1650 = vmatmul.mubr.f32.gmra.mxu0 %v1499
        %v1651 = vpop.f32.mrf.mxu0
        %v1652 = vadd.f32 0.0, %v1651
        %v1653 = vpop.f32.mrf.mxu0
        %v1654 = vadd.f32 0.0, %v1653
        %1655 = vmatprep.mubr.f32.mxu0 0.0
        %1656 = vmatmul.mubr.f32.gmra.mxu0 %v1502
        %v1657 = vpop.f32.mrf.mxu0
        %v1658 = vadd.f32 0.0, %v1657
        %v1659 = vpop.f32.mrf.mxu0
        %v1660 = vadd.f32 0.0, %v1659
        %1661 = vmatprep.mubr.f32.mxu0 0.0
        %1662 = vmatmul.mubr.f32.gmra.mxu0 %v1505
        %v1663 = vpop.f32.mrf.mxu0
        %v1664 = vadd.f32 0.0, %v1663
        %v1665 = vpop.f32.mrf.mxu0
        %v1666 = vadd.f32 0.0, %v1665
        %1667 = vdwg.mxu0
        %v1668 = vadd.f32 %v1386, %v1574
        %v1669 = vadd.f32 %v1387, %v1576
        %v1670 = vadd.f32 %v1388, %v1580
        %v1671 = vadd.f32 %v1389, %v1582
        %v1672 = vadd.f32 %v1390, %v1586
        %v1673 = vadd.f32 %v1391, %v1588
        %v1674 = vadd.f32 %v1392, %v1592
        %v1675 = vadd.f32 %v1393, %v1594
        %v1676 = vadd.f32 %v1394, %v1598
        %v1677 = vadd.f32 %v1395, %v1600
        %v1678 = vadd.f32 %v1396, %v1604
        %v1679 = vadd.f32 %v1397, %v1606
        %v1680 = vadd.f32 %v1398, %v1610
        %v1681 = vadd.f32 %v1399, %v1612
        %v1682 = vadd.f32 %v1400, %v1616
        %v1683 = vadd.f32 %v1401, %v1618
        %v1684 = vadd.f32 %v1402, %v1622
        %v1685 = vadd.f32 %v1403, %v1624
        %v1686 = vadd.f32 %v1404, %v1628
        %v1687 = vadd.f32 %v1405, %v1630
        %v1688 = vadd.f32 %v1406, %v1634
        %v1689 = vadd.f32 %v1407, %v1636
        %v1690 = vadd.f32 %v1408, %v1640
        %v1691 = vadd.f32 %v1409, %v1642
        %v1692 = vadd.f32 %v1410, %v1646
        %v1693 = vadd.f32 %v1411, %v1648
        %v1694 = vadd.f32 %v1412, %v1652
        %v1695 = vadd.f32 %v1413, %v1654
        %v1696 = vadd.f32 %v1414, %v1658
        %v1697 = vadd.f32 %v1415, %v1660
        %v1698 = vadd.f32 %v1416, %v1664
        %v1699 = vadd.f32 %v1417, %v1666
        %v1700 = vld [vmem:[#allocation2 + $0x4] sm:$0xff]
        %v1701 = vld [vmem:[#allocation2 + $0xc] sm:$0xff]
        %v1702 = vld [vmem:[#allocation2 + $0x14] sm:$0xff]
        %v1703 = vld [vmem:[#allocation2 + $0x1c] sm:$0xff]
        %v1704 = vld [vmem:[#allocation2 + $0x24] sm:$0xff]
        %v1705 = vld [vmem:[#allocation2 + $0x2c] sm:$0xff]
        %v1706 = vld [vmem:[#allocation2 + $0x34] sm:$0xff]
        %v1707 = vld [vmem:[#allocation2 + $0x3c] sm:$0xff]
        %v1708 = vld [vmem:[#allocation2 + $0x44] sm:$0xff]
        %v1709 = vld [vmem:[#allocation2 + $0x4c] sm:$0xff]
        %v1710 = vld [vmem:[#allocation2 + $0x54] sm:$0xff]
        %v1711 = vld [vmem:[#allocation2 + $0x5c] sm:$0xff]
        %v1712 = vld [vmem:[#allocation2 + $0x64] sm:$0xff]
        %v1713 = vld [vmem:[#allocation2 + $0x6c] sm:$0xff]
        %v1714 = vld [vmem:[#allocation2 + $0x74] sm:$0xff]
        %v1715 = vld [vmem:[#allocation2 + $0x7c] sm:$0xff]
        %s1716 = scalar_lea.vmem %s1, 768
        %v1717 = vld [vmem:[%s1716] sm:$0xff]
        %v1718 = vld [vmem:[%s1716 + $0x8] sm:$0xff]
        %v1719 = vld [vmem:[%s1716 + $0x10] sm:$0xff]
        %v1720 = vld [vmem:[%s1716 + $0x18] sm:$0xff]
        %v1721 = vld [vmem:[%s1716 + $0x20] sm:$0xff]
        %v1722 = vld [vmem:[%s1716 + $0x28] sm:$0xff]
        %v1723 = vld [vmem:[%s1716 + $0x30] sm:$0xff]
        %v1724 = vld [vmem:[%s1716 + $0x38] sm:$0xff]
        %v1725 = vld [vmem:[%s1716 + $0x40] sm:$0xff]
        %v1726 = vld [vmem:[%s1716 + $0x48] sm:$0xff]
        %v1727 = vld [vmem:[%s1716 + $0x50] sm:$0xff]
        %v1728 = vld [vmem:[%s1716 + $0x58] sm:$0xff]
        %v1729 = vld [vmem:[%s1716 + $0x60] sm:$0xff]
        %v1730 = vld [vmem:[%s1716 + $0x68] sm:$0xff]
        %v1731 = vld [vmem:[%s1716 + $0x70] sm:$0xff]
        %v1732 = vld [vmem:[%s1716 + $0x78] sm:$0xff]
        %v1733 = vld [vmem:[%s1716 + $0x80] sm:$0xff]
        %v1734 = vld [vmem:[%s1716 + $0x88] sm:$0xff]
        %v1735 = vld [vmem:[%s1716 + $0x90] sm:$0xff]
        %v1736 = vld [vmem:[%s1716 + $0x98] sm:$0xff]
        %v1737 = vld [vmem:[%s1716 + $0xa0] sm:$0xff]
        %v1738 = vld [vmem:[%s1716 + $0xa8] sm:$0xff]
        %v1739 = vld [vmem:[%s1716 + $0xb0] sm:$0xff]
        %v1740 = vld [vmem:[%s1716 + $0xb8] sm:$0xff]
        %v1742 = vsel %vm619, %v1700, 0
        %v1745 = vsel %vm619, %v1701, 0
        %v1748 = vsel %vm619, %v1702, 0
        %v1751 = vsel %vm619, %v1703, 0
        %v1754 = vsel %vm619, %v1704, 0
        %v1757 = vsel %vm619, %v1705, 0
        %v1760 = vsel %vm619, %v1706, 0
        %v1763 = vsel %vm619, %v1707, 0
        %v1766 = vsel %vm619, %v1708, 0
        %v1769 = vsel %vm619, %v1709, 0
        %v1772 = vsel %vm619, %v1710, 0
        %v1775 = vsel %vm619, %v1711, 0
        %v1778 = vsel %vm619, %v1712, 0
        %v1781 = vsel %vm619, %v1713, 0
        %v1784 = vsel %vm619, %v1714, 0
        %v1787 = vsel %vm619, %v1715, 0
        %1789 = vmatprep.subr.mxu0 0.0
        %1790 = vmatpush1.msra.mxu0 0.0
        %1791 = vmatprep.subr.mxu0 0.0
        %1792 = vmatpush1.msra.mxu0 0.0
        %1793 = vmatprep.subr.mxu0 0.0
        %1794 = vmatpush1.msra.mxu0 0.0
        %1795 = vmatprep.subr.mxu0 0.0
        %1796 = vmatpush1.msra.mxu0 0.0
        %1797 = vmatprep.subr.mxu0 %v1740
        %1798 = vmatpush1.msra.mxu0 %v1739
        %1799 = vmatprep.subr.mxu0 %v1738
        %1800 = vmatpush1.msra.mxu0 %v1737
        %1801 = vmatprep.subr.mxu0 %v1736
        %1802 = vmatpush1.msra.mxu0 %v1735
        %1803 = vmatprep.subr.mxu0 %v1734
        %1804 = vmatpush1.msra.mxu0 %v1733
        %1805 = vmatprep.subr.mxu0 %v1732
        %1806 = vmatpush1.msra.mxu0 %v1731
        %1807 = vmatprep.subr.mxu0 %v1730
        %1808 = vmatpush1.msra.mxu0 %v1729
        %1809 = vmatprep.subr.mxu0 %v1728
        %1810 = vmatpush1.msra.mxu0 %v1727
        %1811 = vmatprep.subr.mxu0 %v1726
        %1812 = vmatpush1.msra.mxu0 %v1725
        %1813 = vmatprep.subr.mxu0 %v1724
        %1814 = vmatpush1.msra.mxu0 %v1723
        %1815 = vmatprep.subr.mxu0 %v1722
        %1816 = vmatpush1.msra.mxu0 %v1721
        %1817 = vmatprep.subr.mxu0 %v1720
        %1818 = vmatpush1.msra.mxu0 %v1719
        %1819 = vmatprep.subr.mxu0 %v1718
        %1820 = vmatpush1.msra.mxu0 %v1717
        %1821 = vmatprep.subr.mxu0 0.0
        %1822 = vmatpush2.msra.mxu0 0.0
        %1823 = vmatprep.subr.mxu0 0.0
        %1824 = vmatpush2.msra.mxu0 0.0
        %1825 = vmatprep.subr.mxu0 0.0
        %1826 = vmatpush2.msra.mxu0 0.0
        %1827 = vmatprep.subr.mxu0 0.0
        %1828 = vmatpush2.msra.mxu0 0.0
        %1829 = vmatprep.subr.mxu0 0.0
        %1830 = vmatpush2.msra.mxu0 0.0
        %1831 = vmatprep.subr.mxu0 0.0
        %1832 = vmatpush2.msra.mxu0 0.0
        %1833 = vmatprep.subr.mxu0 0.0
        %1834 = vmatpush2.msra.mxu0 0.0
        %1835 = vmatprep.subr.mxu0 0.0
        %1836 = vmatpush2.msra.mxu0 0.0
        %1837 = vmatprep.subr.mxu0 0.0
        %1838 = vmatpush2.msra.mxu0 0.0
        %1839 = vmatprep.subr.mxu0 0.0
        %1840 = vmatpush2.msra.mxu0 0.0
        %1841 = vmatprep.subr.mxu0 0.0
        %1842 = vmatpush2.msra.mxu0 0.0
        %1843 = vmatprep.subr.mxu0 0.0
        %1844 = vmatpush2.msra.mxu0 0.0
        %1845 = vmatprep.subr.mxu0 0.0
        %1846 = vmatpush2.msra.mxu0 0.0
        %1847 = vmatprep.subr.mxu0 0.0
        %1848 = vmatpush2.msra.mxu0 0.0
        %1849 = vmatprep.subr.mxu0 0.0
        %1850 = vmatpush2.msra.mxu0 0.0
        %1851 = vmatprep.subr.mxu0 0.0
        %1852 = vmatpush2.msra.mxu0 0.0
        %1853 = vmatprep.mubr.f32.mxu0 0.0
        %1854 = vmatmul.mubr.f32.gmra.mxu0 %v1742
        %v1855 = vpop.f32.mrf.mxu0
        %v1856 = vadd.f32 0.0, %v1855
        %v1857 = vpop.f32.mrf.mxu0
        %v1858 = vadd.f32 0.0, %v1857
        %1859 = vmatprep.mubr.f32.mxu0 0.0
        %1860 = vmatmul.mubr.f32.gmra.mxu0 %v1745
        %v1861 = vpop.f32.mrf.mxu0
        %v1862 = vadd.f32 0.0, %v1861
        %v1863 = vpop.f32.mrf.mxu0
        %v1864 = vadd.f32 0.0, %v1863
        %1865 = vmatprep.mubr.f32.mxu0 0.0
        %1866 = vmatmul.mubr.f32.gmra.mxu0 %v1748
        %v1867 = vpop.f32.mrf.mxu0
        %v1868 = vadd.f32 0.0, %v1867
        %v1869 = vpop.f32.mrf.mxu0
        %v1870 = vadd.f32 0.0, %v1869
        %1871 = vmatprep.mubr.f32.mxu0 0.0
        %1872 = vmatmul.mubr.f32.gmra.mxu0 %v1751
        %v1873 = vpop.f32.mrf.mxu0
        %v1874 = vadd.f32 0.0, %v1873
        %v1875 = vpop.f32.mrf.mxu0
        %v1876 = vadd.f32 0.0, %v1875
        %1877 = vmatprep.mubr.f32.mxu0 0.0
        %1878 = vmatmul.mubr.f32.gmra.mxu0 %v1754
        %v1879 = vpop.f32.mrf.mxu0
        %v1880 = vadd.f32 0.0, %v1879
        %v1881 = vpop.f32.mrf.mxu0
        %v1882 = vadd.f32 0.0, %v1881
        %1883 = vmatprep.mubr.f32.mxu0 0.0
        %1884 = vmatmul.mubr.f32.gmra.mxu0 %v1757
        %v1885 = vpop.f32.mrf.mxu0
        %v1886 = vadd.f32 0.0, %v1885
        %v1887 = vpop.f32.mrf.mxu0
        %v1888 = vadd.f32 0.0, %v1887
        %1889 = vmatprep.mubr.f32.mxu0 0.0
        %1890 = vmatmul.mubr.f32.gmra.mxu0 %v1760
        %v1891 = vpop.f32.mrf.mxu0
        %v1892 = vadd.f32 0.0, %v1891
        %v1893 = vpop.f32.mrf.mxu0
        %v1894 = vadd.f32 0.0, %v1893
        %1895 = vmatprep.mubr.f32.mxu0 0.0
        %1896 = vmatmul.mubr.f32.gmra.mxu0 %v1763
        %v1897 = vpop.f32.mrf.mxu0
        %v1898 = vadd.f32 0.0, %v1897
        %v1899 = vpop.f32.mrf.mxu0
        %v1900 = vadd.f32 0.0, %v1899
        %1901 = vmatprep.mubr.f32.mxu0 0.0
        %1902 = vmatmul.mubr.f32.gmra.mxu0 %v1766
        %v1903 = vpop.f32.mrf.mxu0
        %v1904 = vadd.f32 0.0, %v1903
        %v1905 = vpop.f32.mrf.mxu0
        %v1906 = vadd.f32 0.0, %v1905
        %1907 = vmatprep.mubr.f32.mxu0 0.0
        %1908 = vmatmul.mubr.f32.gmra.mxu0 %v1769
        %v1909 = vpop.f32.mrf.mxu0
        %v1910 = vadd.f32 0.0, %v1909
        %v1911 = vpop.f32.mrf.mxu0
        %v1912 = vadd.f32 0.0, %v1911
        %1913 = vmatprep.mubr.f32.mxu0 0.0
        %1914 = vmatmul.mubr.f32.gmra.mxu0 %v1772
        %v1915 = vpop.f32.mrf.mxu0
        %v1916 = vadd.f32 0.0, %v1915
        %v1917 = vpop.f32.mrf.mxu0
        %v1918 = vadd.f32 0.0, %v1917
        %1919 = vmatprep.mubr.f32.mxu0 0.0
        %1920 = vmatmul.mubr.f32.gmra.mxu0 %v1775
        %v1921 = vpop.f32.mrf.mxu0
        %v1922 = vadd.f32 0.0, %v1921
        %v1923 = vpop.f32.mrf.mxu0
        %v1924 = vadd.f32 0.0, %v1923
        %1925 = vmatprep.mubr.f32.mxu0 0.0
        %1926 = vmatmul.mubr.f32.gmra.mxu0 %v1778
        %v1927 = vpop.f32.mrf.mxu0
        %v1928 = vadd.f32 0.0, %v1927
        %v1929 = vpop.f32.mrf.mxu0
        %v1930 = vadd.f32 0.0, %v1929
        %1931 = vmatprep.mubr.f32.mxu0 0.0
        %1932 = vmatmul.mubr.f32.gmra.mxu0 %v1781
        %v1933 = vpop.f32.mrf.mxu0
        %v1934 = vadd.f32 0.0, %v1933
        %v1935 = vpop.f32.mrf.mxu0
        %v1936 = vadd.f32 0.0, %v1935
        %1937 = vmatprep.mubr.f32.mxu0 0.0
        %1938 = vmatmul.mubr.f32.gmra.mxu0 %v1784
        %v1939 = vpop.f32.mrf.mxu0
        %v1940 = vadd.f32 0.0, %v1939
        %v1941 = vpop.f32.mrf.mxu0
        %v1942 = vadd.f32 0.0, %v1941
        %1943 = vmatprep.mubr.f32.mxu0 0.0
        %1944 = vmatmul.mubr.f32.gmra.mxu0 %v1787
        %v1945 = vpop.f32.mrf.mxu0
        %v1946 = vadd.f32 0.0, %v1945
        %v1947 = vpop.f32.mrf.mxu0
        %v1948 = vadd.f32 0.0, %v1947
        %1949 = vdwg.mxu0
        %v1950 = vadd.f32 %v1668, %v1856
        %v1951 = vadd.f32 %v1669, %v1858
        %v1952 = vadd.f32 %v1670, %v1862
        %v1953 = vadd.f32 %v1671, %v1864
        %v1954 = vadd.f32 %v1672, %v1868
        %v1955 = vadd.f32 %v1673, %v1870
        %v1956 = vadd.f32 %v1674, %v1874
        %v1957 = vadd.f32 %v1675, %v1876
        %v1958 = vadd.f32 %v1676, %v1880
        %v1959 = vadd.f32 %v1677, %v1882
        %v1960 = vadd.f32 %v1678, %v1886
        %v1961 = vadd.f32 %v1679, %v1888
        %v1962 = vadd.f32 %v1680, %v1892
        %v1963 = vadd.f32 %v1681, %v1894
        %v1964 = vadd.f32 %v1682, %v1898
        %v1965 = vadd.f32 %v1683, %v1900
        %v1966 = vadd.f32 %v1684, %v1904
        %v1967 = vadd.f32 %v1685, %v1906
        %v1968 = vadd.f32 %v1686, %v1910
        %v1969 = vadd.f32 %v1687, %v1912
        %v1970 = vadd.f32 %v1688, %v1916
        %v1971 = vadd.f32 %v1689, %v1918
        %v1972 = vadd.f32 %v1690, %v1922
        %v1973 = vadd.f32 %v1691, %v1924
        %v1974 = vadd.f32 %v1692, %v1928
        %v1975 = vadd.f32 %v1693, %v1930
        %v1976 = vadd.f32 %v1694, %v1934
        %v1977 = vadd.f32 %v1695, %v1936
        %v1978 = vadd.f32 %v1696, %v1940
        %v1979 = vadd.f32 %v1697, %v1942
        %v1980 = vadd.f32 %v1698, %v1946
        %v1981 = vadd.f32 %v1699, %v1948
        %v1982 = vld [vmem:[%s2] sm:$0x3]
        %v1984 = vlaneseq
        %v1985 = vshrl.u32 %v1984, 7
        %v1986 = vsub.s32 0, %v1985
        %v1987 = vrot.slane %v1982, %v1986
        %v1988 = vlaneseq
        %v1989 = vshrl.u32 %v1988, 7
        %v1990 = vsub.s32 1, %v1989
        %v1991 = vrot.slane %v1982, %v1990
        %v1994 = vadd.f32 %v1950, %v1987
        %v1995 = vadd.f32 %v1951, %v1991
        %v1996 = vadd.f32 %v1952, %v1987
        %v1997 = vadd.f32 %v1953, %v1991
        %v1998 = vadd.f32 %v1954, %v1987
        %v1999 = vadd.f32 %v1955, %v1991
        %v2000 = vadd.f32 %v1956, %v1987
        %v2001 = vadd.f32 %v1957, %v1991
        %v2002 = vadd.f32 %v1958, %v1987
        %v2003 = vadd.f32 %v1959, %v1991
        %v2004 = vadd.f32 %v1960, %v1987
        %v2005 = vadd.f32 %v1961, %v1991
        %v2006 = vadd.f32 %v1962, %v1987
        %v2007 = vadd.f32 %v1963, %v1991
        %v2008 = vadd.f32 %v1964, %v1987
        %v2009 = vadd.f32 %v1965, %v1991
        %v2010 = vadd.f32 %v1966, %v1987
        %v2011 = vadd.f32 %v1967, %v1991
        %v2012 = vadd.f32 %v1968, %v1987
        %v2013 = vadd.f32 %v1969, %v1991
        %v2014 = vadd.f32 %v1970, %v1987
        %v2015 = vadd.f32 %v1971, %v1991
        %v2016 = vadd.f32 %v1972, %v1987
        %v2017 = vadd.f32 %v1973, %v1991
        %v2018 = vadd.f32 %v1974, %v1987
        %v2019 = vadd.f32 %v1975, %v1991
        %v2020 = vadd.f32 %v1976, %v1987
        %v2021 = vadd.f32 %v1977, %v1991
        %v2022 = vadd.f32 %v1978, %v1987
        %v2023 = vadd.f32 %v1979, %v1991
        %v2024 = vadd.f32 %v1980, %v1987
        %v2025 = vadd.f32 %v1981, %v1991
        %v2026 = vmax.f32 %v1994, 0.0
        %v2027 = vmax.f32 %v1995, 0.0
        %v2028 = vmax.f32 %v1996, 0.0
        %v2029 = vmax.f32 %v1997, 0.0
        %v2030 = vmax.f32 %v1998, 0.0
        %v2031 = vmax.f32 %v1999, 0.0
        %v2032 = vmax.f32 %v2000, 0.0
        %v2033 = vmax.f32 %v2001, 0.0
        %v2034 = vmax.f32 %v2002, 0.0
        %v2035 = vmax.f32 %v2003, 0.0
        %v2036 = vmax.f32 %v2004, 0.0
        %v2037 = vmax.f32 %v2005, 0.0
        %v2038 = vmax.f32 %v2006, 0.0
        %v2039 = vmax.f32 %v2007, 0.0
        %v2040 = vmax.f32 %v2008, 0.0
        %v2041 = vmax.f32 %v2009, 0.0
        %v2042 = vmax.f32 %v2010, 0.0
        %v2043 = vmax.f32 %v2011, 0.0
        %v2044 = vmax.f32 %v2012, 0.0
        %v2045 = vmax.f32 %v2013, 0.0
        %v2046 = vmax.f32 %v2014, 0.0
        %v2047 = vmax.f32 %v2015, 0.0
        %v2048 = vmax.f32 %v2016, 0.0
        %v2049 = vmax.f32 %v2017, 0.0
        %v2050 = vmax.f32 %v2018, 0.0
        %v2051 = vmax.f32 %v2019, 0.0
        %v2052 = vmax.f32 %v2020, 0.0
        %v2053 = vmax.f32 %v2021, 0.0
        %v2054 = vmax.f32 %v2022, 0.0
        %v2055 = vmax.f32 %v2023, 0.0
        %v2056 = vmax.f32 %v2024, 0.0
        %v2057 = vmax.f32 %v2025, 0.0
        %v2058 = vld [vmem:[%s3] sm:$0xff]
        %v2059 = vld [vmem:[%s3 + $0x8] sm:$0xff]
        %v2060 = vld [vmem:[%s3 + $0x10] sm:$0xff]
        %v2061 = vld [vmem:[%s3 + $0x18] sm:$0xff]
        %v2062 = vld [vmem:[%s3 + $0x20] sm:$0xff]
        %v2063 = vld [vmem:[%s3 + $0x28] sm:$0xff]
        %v2064 = vld [vmem:[%s3 + $0x30] sm:$0xff]
        %2065 = vmatprep.subr.mxu0 %v2057
        %2066 = vmatpush1.msra.mxu0 %v2056
        %2067 = vmatprep.subr.mxu0 %v2055
        %2068 = vmatpush1.msra.mxu0 %v2054
        %2069 = vmatprep.subr.mxu0 %v2053
        %2070 = vmatpush1.msra.mxu0 %v2052
        %2071 = vmatprep.subr.mxu0 %v2051
        %2072 = vmatpush1.msra.mxu0 %v2050
        %2073 = vmatprep.subr.mxu0 %v2049
        %2074 = vmatpush1.msra.mxu0 %v2048
        %2075 = vmatprep.subr.mxu0 %v2047
        %2076 = vmatpush1.msra.mxu0 %v2046
        %2077 = vmatprep.subr.mxu0 %v2045
        %2078 = vmatpush1.msra.mxu0 %v2044
        %2079 = vmatprep.subr.mxu0 %v2043
        %2080 = vmatpush1.msra.mxu0 %v2042
        %2081 = vmatprep.subr.mxu0 %v2041
        %2082 = vmatpush1.msra.mxu0 %v2040
        %2083 = vmatprep.subr.mxu0 %v2039
        %2084 = vmatpush1.msra.mxu0 %v2038
        %2085 = vmatprep.subr.mxu0 %v2037
        %2086 = vmatpush1.msra.mxu0 %v2036
        %2087 = vmatprep.subr.mxu0 %v2035
        %2088 = vmatpush1.msra.mxu0 %v2034
        %2089 = vmatprep.subr.mxu0 %v2033
        %2090 = vmatpush1.msra.mxu0 %v2032
        %2091 = vmatprep.subr.mxu0 %v2031
        %2092 = vmatpush1.msra.mxu0 %v2030
        %2093 = vmatprep.subr.mxu0 %v2029
        %2094 = vmatpush1.msra.mxu0 %v2028
        %2095 = vmatprep.subr.mxu0 %v2027
        %2096 = vmatpush1.msra.mxu0 %v2026
        %2097 = vmatprep.subr.mxu0 0.0
        %2098 = vmatpush2.msra.mxu0 0.0
        %2099 = vmatprep.subr.mxu0 0.0
        %2100 = vmatpush2.msra.mxu0 0.0
        %2101 = vmatprep.subr.mxu0 0.0
        %2102 = vmatpush2.msra.mxu0 0.0
        %2103 = vmatprep.subr.mxu0 0.0
        %2104 = vmatpush2.msra.mxu0 0.0
        %2105 = vmatprep.subr.mxu0 0.0
        %2106 = vmatpush2.msra.mxu0 0.0
        %2107 = vmatprep.subr.mxu0 0.0
        %2108 = vmatpush2.msra.mxu0 0.0
        %2109 = vmatprep.subr.mxu0 0.0
        %2110 = vmatpush2.msra.mxu0 0.0
        %2111 = vmatprep.subr.mxu0 0.0
        %2112 = vmatpush2.msra.mxu0 0.0
        %2113 = vmatprep.subr.mxu0 0.0
        %2114 = vmatpush2.msra.mxu0 0.0
        %2115 = vmatprep.subr.mxu0 0.0
        %2116 = vmatpush2.msra.mxu0 0.0
        %2117 = vmatprep.subr.mxu0 0.0
        %2118 = vmatpush2.msra.mxu0 0.0
        %2119 = vmatprep.subr.mxu0 0.0
        %2120 = vmatpush2.msra.mxu0 0.0
        %2121 = vmatprep.subr.mxu0 0.0
        %2122 = vmatpush2.msra.mxu0 0.0
        %2123 = vmatprep.subr.mxu0 0.0
        %2124 = vmatpush2.msra.mxu0 0.0
        %2125 = vmatprep.subr.mxu0 0.0
        %2126 = vmatpush2.msra.mxu0 0.0
        %2127 = vmatprep.subr.mxu0 0.0
        %2128 = vmatpush2.msra.mxu0 0.0
        %2129 = vmatprep.mubr.f32.mxu0 0.0
        %2130 = vmatmul.mubr.f32.gmra.mxu0 %v2058
        %v2131 = vpop.f32.mrf.mxu0
        %v2132 = vadd.f32 0.0, %v2131
        %v2133 = vpop.f32.mrf.mxu0
        %v2134 = vadd.f32 0.0, %v2133
        %2135 = vmatprep.mubr.f32.mxu0 0.0
        %2136 = vmatmul.mubr.f32.gmra.mxu0 %v2059
        %v2137 = vpop.f32.mrf.mxu0
        %v2138 = vadd.f32 0.0, %v2137
        %v2139 = vpop.f32.mrf.mxu0
        %v2140 = vadd.f32 0.0, %v2139
        %2141 = vmatprep.mubr.f32.mxu0 0.0
        %2142 = vmatmul.mubr.f32.gmra.mxu0 %v2060
        %v2143 = vpop.f32.mrf.mxu0
        %v2144 = vadd.f32 0.0, %v2143
        %v2145 = vpop.f32.mrf.mxu0
        %v2146 = vadd.f32 0.0, %v2145
        %2147 = vmatprep.mubr.f32.mxu0 0.0
        %2148 = vmatmul.mubr.f32.gmra.mxu0 %v2061
        %v2149 = vpop.f32.mrf.mxu0
        %v2150 = vadd.f32 0.0, %v2149
        %v2151 = vpop.f32.mrf.mxu0
        %v2152 = vadd.f32 0.0, %v2151
        %2153 = vmatprep.mubr.f32.mxu0 0.0
        %2154 = vmatmul.mubr.f32.gmra.mxu0 %v2062
        %v2155 = vpop.f32.mrf.mxu0
        %v2156 = vadd.f32 0.0, %v2155
        %v2157 = vpop.f32.mrf.mxu0
        %v2158 = vadd.f32 0.0, %v2157
        %2159 = vmatprep.mubr.f32.mxu0 0.0
        %2160 = vmatmul.mubr.f32.gmra.mxu0 %v2063
        %v2161 = vpop.f32.mrf.mxu0
        %v2162 = vadd.f32 0.0, %v2161
        %v2163 = vpop.f32.mrf.mxu0
        %v2164 = vadd.f32 0.0, %v2163
        %2165 = vmatprep.mubr.f32.mxu0 0.0
        %2166 = vmatmul.mubr.f32.gmra.mxu0 %v2064
        %v2167 = vpop.f32.mrf.mxu0
        %v2168 = vadd.f32 0.0, %v2167
        %v2169 = vpop.f32.mrf.mxu0
        %v2170 = vadd.f32 0.0, %v2169
        %2171 = vdwg.mxu0
        %v2172 = vld [vmem:[%s4] sm:$0xff]
        %v2173 = vld [vmem:[%s4 + $0x8] sm:$0xff]
        %v2174 = vld [vmem:[%s4 + $0x10] sm:$0xff]
        %v2175 = vld [vmem:[%s4 + $0x18] sm:$0xff]
        %v2176 = vld [vmem:[%s4 + $0x20] sm:$0xff]
        %v2177 = vld [vmem:[%s4 + $0x28] sm:$0xff]
        %v2178 = vld [vmem:[%s4 + $0x30] sm:$0xff]
        %2179 = vmatprep.subr.mxu0 %v2057
        %2180 = vmatpush1.msra.mxu0 %v2056
        %2181 = vmatprep.subr.mxu0 %v2055
        %2182 = vmatpush1.msra.mxu0 %v2054
        %2183 = vmatprep.subr.mxu0 %v2053
        %2184 = vmatpush1.msra.mxu0 %v2052
        %2185 = vmatprep.subr.mxu0 %v2051
        %2186 = vmatpush1.msra.mxu0 %v2050
        %2187 = vmatprep.subr.mxu0 %v2049
        %2188 = vmatpush1.msra.mxu0 %v2048
        %2189 = vmatprep.subr.mxu0 %v2047
        %2190 = vmatpush1.msra.mxu0 %v2046
        %2191 = vmatprep.subr.mxu0 %v2045
        %2192 = vmatpush1.msra.mxu0 %v2044
        %2193 = vmatprep.subr.mxu0 %v2043
        %2194 = vmatpush1.msra.mxu0 %v2042
        %2195 = vmatprep.subr.mxu0 %v2041
        %2196 = vmatpush1.msra.mxu0 %v2040
        %2197 = vmatprep.subr.mxu0 %v2039
        %2198 = vmatpush1.msra.mxu0 %v2038
        %2199 = vmatprep.subr.mxu0 %v2037
        %2200 = vmatpush1.msra.mxu0 %v2036
        %2201 = vmatprep.subr.mxu0 %v2035
        %2202 = vmatpush1.msra.mxu0 %v2034
        %2203 = vmatprep.subr.mxu0 %v2033
        %2204 = vmatpush1.msra.mxu0 %v2032
        %2205 = vmatprep.subr.mxu0 %v2031
        %2206 = vmatpush1.msra.mxu0 %v2030
        %2207 = vmatprep.subr.mxu0 %v2029
        %2208 = vmatpush1.msra.mxu0 %v2028
        %2209 = vmatprep.subr.mxu0 %v2027
        %2210 = vmatpush1.msra.mxu0 %v2026
        %2211 = vmatprep.subr.mxu0 0.0
        %2212 = vmatpush2.msra.mxu0 0.0
        %2213 = vmatprep.subr.mxu0 0.0
        %2214 = vmatpush2.msra.mxu0 0.0
        %2215 = vmatprep.subr.mxu0 0.0
        %2216 = vmatpush2.msra.mxu0 0.0
        %2217 = vmatprep.subr.mxu0 0.0
        %2218 = vmatpush2.msra.mxu0 0.0
        %2219 = vmatprep.subr.mxu0 0.0
        %2220 = vmatpush2.msra.mxu0 0.0
        %2221 = vmatprep.subr.mxu0 0.0
        %2222 = vmatpush2.msra.mxu0 0.0
        %2223 = vmatprep.subr.mxu0 0.0
        %2224 = vmatpush2.msra.mxu0 0.0
        %2225 = vmatprep.subr.mxu0 0.0
        %2226 = vmatpush2.msra.mxu0 0.0
        %2227 = vmatprep.subr.mxu0 0.0
        %2228 = vmatpush2.msra.mxu0 0.0
        %2229 = vmatprep.subr.mxu0 0.0
        %2230 = vmatpush2.msra.mxu0 0.0
        %2231 = vmatprep.subr.mxu0 0.0
        %2232 = vmatpush2.msra.mxu0 0.0
        %2233 = vmatprep.subr.mxu0 0.0
        %2234 = vmatpush2.msra.mxu0 0.0
        %2235 = vmatprep.subr.mxu0 0.0
        %2236 = vmatpush2.msra.mxu0 0.0
        %2237 = vmatprep.subr.mxu0 0.0
        %2238 = vmatpush2.msra.mxu0 0.0
        %2239 = vmatprep.subr.mxu0 0.0
        %2240 = vmatpush2.msra.mxu0 0.0
        %2241 = vmatprep.subr.mxu0 0.0
        %2242 = vmatpush2.msra.mxu0 0.0
        %2243 = vmatprep.mubr.f32.mxu0 0.0
        %2244 = vmatmul.mubr.f32.gmra.mxu0 %v2172
        %v2245 = vpop.f32.mrf.mxu0
        %v2246 = vadd.f32 0.0, %v2245
        %v2247 = vpop.f32.mrf.mxu0
        %v2248 = vadd.f32 0.0, %v2247
        %2249 = vmatprep.mubr.f32.mxu0 0.0
        %2250 = vmatmul.mubr.f32.gmra.mxu0 %v2173
        %v2251 = vpop.f32.mrf.mxu0
        %v2252 = vadd.f32 0.0, %v2251
        %v2253 = vpop.f32.mrf.mxu0
        %v2254 = vadd.f32 0.0, %v2253
        %2255 = vmatprep.mubr.f32.mxu0 0.0
        %2256 = vmatmul.mubr.f32.gmra.mxu0 %v2174
        %v2257 = vpop.f32.mrf.mxu0
        %v2258 = vadd.f32 0.0, %v2257
        %v2259 = vpop.f32.mrf.mxu0
        %v2260 = vadd.f32 0.0, %v2259
        %2261 = vmatprep.mubr.f32.mxu0 0.0
        %2262 = vmatmul.mubr.f32.gmra.mxu0 %v2175
        %v2263 = vpop.f32.mrf.mxu0
        %v2264 = vadd.f32 0.0, %v2263
        %v2265 = vpop.f32.mrf.mxu0
        %v2266 = vadd.f32 0.0, %v2265
        %2267 = vmatprep.mubr.f32.mxu0 0.0
        %2268 = vmatmul.mubr.f32.gmra.mxu0 %v2176
        %v2269 = vpop.f32.mrf.mxu0
        %v2270 = vadd.f32 0.0, %v2269
        %v2271 = vpop.f32.mrf.mxu0
        %v2272 = vadd.f32 0.0, %v2271
        %2273 = vmatprep.mubr.f32.mxu0 0.0
        %2274 = vmatmul.mubr.f32.gmra.mxu0 %v2177
        %v2275 = vpop.f32.mrf.mxu0
        %v2276 = vadd.f32 0.0, %v2275
        %v2277 = vpop.f32.mrf.mxu0
        %v2278 = vadd.f32 0.0, %v2277
        %2279 = vmatprep.mubr.f32.mxu0 0.0
        %2280 = vmatmul.mubr.f32.gmra.mxu0 %v2178
        %v2281 = vpop.f32.mrf.mxu0
        %v2282 = vadd.f32 0.0, %v2281
        %v2283 = vpop.f32.mrf.mxu0
        %v2284 = vadd.f32 0.0, %v2283
        %2285 = vdwg.mxu0
        %v2286 = vmax.f32 %v2132, %v2246
        %v2287 = vmax.f32 %v2134, %v2248
        %v2288 = vmax.f32 %v2138, %v2252
        %v2289 = vmax.f32 %v2140, %v2254
        %v2290 = vmax.f32 %v2144, %v2258
        %v2291 = vmax.f32 %v2146, %v2260
        %v2292 = vmax.f32 %v2150, %v2264
        %v2293 = vmax.f32 %v2152, %v2266
        %v2294 = vmax.f32 %v2156, %v2270
        %v2295 = vmax.f32 %v2158, %v2272
        %v2296 = vmax.f32 %v2162, %v2276
        %v2297 = vmax.f32 %v2164, %v2278
        %v2298 = vmax.f32 %v2168, %v2282
        %v2299 = vmax.f32 %v2170, %v2284
        %v2300 = vld [vmem:[%s5] sm:$0xff]
        %v2301 = vld [vmem:[%s5 + $0x8] sm:$0xff]
        %v2302 = vld [vmem:[%s5 + $0x10] sm:$0xff]
        %v2303 = vld [vmem:[%s5 + $0x18] sm:$0xff]
        %v2304 = vld [vmem:[%s5 + $0x20] sm:$0xff]
        %v2305 = vld [vmem:[%s5 + $0x28] sm:$0xff]
        %v2306 = vld [vmem:[%s5 + $0x30] sm:$0xff]
        %v2307 = vld [vmem:[%s5 + $0x38] sm:$0xff]
        %v2308 = vld [vmem:[%s5 + $0x40] sm:$0xff]
        %v2309 = vld [vmem:[%s5 + $0x48] sm:$0xff]
        %v2310 = vld [vmem:[%s5 + $0x50] sm:$0xff]
        %v2311 = vld [vmem:[%s5 + $0x58] sm:$0xff]
        %v2312 = vld [vmem:[%s5 + $0x60] sm:$0xff]
        %v2313 = vld [vmem:[%s5 + $0x68] sm:$0xff]
        %v2314 = vld [vmem:[%s5 + $0x70] sm:$0xff]
        %v2315 = vld [vmem:[%s5 + $0x78] sm:$0xff]
        %v2316 = vld [vmem:[%s5 + $0x80] sm:$0xff]
        %v2317 = vld [vmem:[%s5 + $0x88] sm:$0xff]
        %v2318 = vld [vmem:[%s5 + $0x90] sm:$0xff]
        %v2319 = vld [vmem:[%s5 + $0x98] sm:$0xff]
        %v2320 = vld [vmem:[%s5 + $0xa0] sm:$0xff]
        %vm2321 = vcmask 326656
        %v2323 = vsel %vm2321, %v2287, 0
        %v2326 = vsel %vm2321, %v2289, 0
        %v2329 = vsel %vm2321, %v2291, 0
        %v2332 = vsel %vm2321, %v2293, 0
        %v2335 = vsel %vm2321, %v2295, 0
        %v2338 = vsel %vm2321, %v2297, 0
        %v2341 = vsel %vm2321, %v2299, 0
        %2343 = vmatprep.subr.mxu0 0.0
        %2344 = vmatpush1.msra.mxu0 %v2315
        %2345 = vmatprep.subr.mxu0 0.0
        %2346 = vmatpush1.msra.mxu0 %v2314
        %2347 = vmatprep.subr.mxu0 0.0
        %2348 = vmatpush1.msra.mxu0 %v2313
        %2349 = vmatprep.subr.mxu0 0.0
        %2350 = vmatpush1.msra.mxu0 %v2312
        %2351 = vmatprep.subr.mxu0 0.0
        %2352 = vmatpush1.msra.mxu0 %v2311
        %2353 = vmatprep.subr.mxu0 0.0
        %2354 = vmatpush1.msra.mxu0 %v2310
        %2355 = vmatprep.subr.mxu0 0.0
        %2356 = vmatpush1.msra.mxu0 %v2309
        %2357 = vmatprep.subr.mxu0 0.0
        %2358 = vmatpush1.msra.mxu0 %v2308
        %2359 = vmatprep.subr.mxu0 0.0
        %2360 = vmatpush1.msra.mxu0 %v2307
        %2361 = vmatprep.subr.mxu0 0.0
        %2362 = vmatpush1.msra.mxu0 %v2306
        %2363 = vmatprep.subr.mxu0 0.0
        %2364 = vmatpush1.msra.mxu0 %v2305
        %2365 = vmatprep.subr.mxu0 0.0
        %2366 = vmatpush1.msra.mxu0 %v2304
        %2367 = vmatprep.subr.mxu0 0.0
        %2368 = vmatpush1.msra.mxu0 %v2303
        %2369 = vmatprep.subr.mxu0 0.0
        %2370 = vmatpush1.msra.mxu0 %v2302
        %2371 = vmatprep.subr.mxu0 0.0
        %2372 = vmatpush1.msra.mxu0 %v2301
        %2373 = vmatprep.subr.mxu0 0.0
        %2374 = vmatpush1.msra.mxu0 %v2300
        %2375 = vmatprep.subr.mxu0 0.0
        %2376 = vmatpush2.msra.mxu0 0.0
        %2377 = vmatprep.subr.mxu0 0.0
        %2378 = vmatpush2.msra.mxu0 0.0
        %2379 = vmatprep.subr.mxu0 0.0
        %2380 = vmatpush2.msra.mxu0 0.0
        %2381 = vmatprep.subr.mxu0 0.0
        %2382 = vmatpush2.msra.mxu0 0.0
        %2383 = vmatprep.subr.mxu0 0.0
        %2384 = vmatpush2.msra.mxu0 0.0
        %2385 = vmatprep.subr.mxu0 0.0
        %2386 = vmatpush2.msra.mxu0 0.0
        %2387 = vmatprep.subr.mxu0 0.0
        %2388 = vmatpush2.msra.mxu0 0.0
        %2389 = vmatprep.subr.mxu0 0.0
        %2390 = vmatpush2.msra.mxu0 0.0
        %2391 = vmatprep.subr.mxu0 0.0
        %2392 = vmatpush2.msra.mxu0 0.0
        %2393 = vmatprep.subr.mxu0 0.0
        %2394 = vmatpush2.msra.mxu0 0.0
        %2395 = vmatprep.subr.mxu0 0.0
        %2396 = vmatpush2.msra.mxu0 0.0
        %2397 = vmatprep.subr.mxu0 0.0
        %2398 = vmatpush2.msra.mxu0 %v2320
        %2399 = vmatprep.subr.mxu0 0.0
        %2400 = vmatpush2.msra.mxu0 %v2319
        %2401 = vmatprep.subr.mxu0 0.0
        %2402 = vmatpush2.msra.mxu0 %v2318
        %2403 = vmatprep.subr.mxu0 0.0
        %2404 = vmatpush2.msra.mxu0 %v2317
        %2405 = vmatprep.subr.mxu0 0.0
        %2406 = vmatpush2.msra.mxu0 %v2316
        %2407 = vmatprep.mubr.f32.mxu0 %v2323
        %2408 = vmatmul.mubr.f32.gmra.mxu0 %v2286
        %v2409 = vpop.f32.mrf.mxu0
        %v2410 = vadd.f32 0.0, %v2409
        %v2411 = vpop.f32.mrf.mxu0
        %2412 = vmatprep.mubr.f32.mxu0 %v2326
        %2413 = vmatmul.mubr.f32.gmra.mxu0 %v2288
        %v2414 = vpop.f32.mrf.mxu0
        %v2415 = vadd.f32 0.0, %v2414
        %v2416 = vpop.f32.mrf.mxu0
        %2417 = vmatprep.mubr.f32.mxu0 %v2329
        %2418 = vmatmul.mubr.f32.gmra.mxu0 %v2290
        %v2419 = vpop.f32.mrf.mxu0
        %v2420 = vadd.f32 0.0, %v2419
        %v2421 = vpop.f32.mrf.mxu0
        %2422 = vmatprep.mubr.f32.mxu0 %v2332
        %2423 = vmatmul.mubr.f32.gmra.mxu0 %v2292
        %v2424 = vpop.f32.mrf.mxu0
        %v2425 = vadd.f32 0.0, %v2424
        %v2426 = vpop.f32.mrf.mxu0
        %2427 = vmatprep.mubr.f32.mxu0 %v2335
        %2428 = vmatmul.mubr.f32.gmra.mxu0 %v2294
        %v2429 = vpop.f32.mrf.mxu0
        %v2430 = vadd.f32 0.0, %v2429
        %v2431 = vpop.f32.mrf.mxu0
        %2432 = vmatprep.mubr.f32.mxu0 %v2338
        %2433 = vmatmul.mubr.f32.gmra.mxu0 %v2296
        %v2434 = vpop.f32.mrf.mxu0
        %v2435 = vadd.f32 0.0, %v2434
        %v2436 = vpop.f32.mrf.mxu0
        %2437 = vmatprep.mubr.f32.mxu0 %v2341
        %2438 = vmatmul.mubr.f32.gmra.mxu0 %v2298
        %v2439 = vpop.f32.mrf.mxu0
        %v2440 = vadd.f32 0.0, %v2439
        %v2441 = vpop.f32.mrf.mxu0
        %2442 = vdwg.mxu0
        %v2443 = vld [vmem:[%s6] sm:$0xff]
        %v2444 = vld [vmem:[%s6 + $0x8] sm:$0xff]
        %v2445 = vld [vmem:[%s6 + $0x10] sm:$0xff]
        %v2446 = vld [vmem:[%s6 + $0x18] sm:$0xff]
        %v2447 = vld [vmem:[%s6 + $0x20] sm:$0xff]
        %v2448 = vld [vmem:[%s6 + $0x28] sm:$0xff]
        %v2449 = vld [vmem:[%s6 + $0x30] sm:$0xff]
        %v2450 = vld [vmem:[%s6 + $0x38] sm:$0xff]
        %v2451 = vld [vmem:[%s6 + $0x40] sm:$0xff]
        %v2452 = vld [vmem:[%s6 + $0x48] sm:$0xff]
        %v2453 = vld [vmem:[%s6 + $0x50] sm:$0xff]
        %v2454 = vld [vmem:[%s6 + $0x58] sm:$0xff]
        %v2455 = vld [vmem:[%s6 + $0x60] sm:$0xff]
        %v2456 = vld [vmem:[%s6 + $0x68] sm:$0xff]
        %v2457 = vld [vmem:[%s6 + $0x70] sm:$0xff]
        %v2458 = vld [vmem:[%s6 + $0x78] sm:$0xff]
        %v2459 = vld [vmem:[%s6 + $0x80] sm:$0xff]
        %v2460 = vld [vmem:[%s6 + $0x88] sm:$0xff]
        %v2461 = vld [vmem:[%s6 + $0x90] sm:$0xff]
        %v2462 = vld [vmem:[%s6 + $0x98] sm:$0xff]
        %v2463 = vld [vmem:[%s6 + $0xa0] sm:$0xff]
        %2464 = vmatprep.subr.mxu0 0.0
        %2465 = vmatpush1.msra.mxu0 %v2458
        %2466 = vmatprep.subr.mxu0 0.0
        %2467 = vmatpush1.msra.mxu0 %v2457
        %2468 = vmatprep.subr.mxu0 0.0
        %2469 = vmatpush1.msra.mxu0 %v2456
        %2470 = vmatprep.subr.mxu0 0.0
        %2471 = vmatpush1.msra.mxu0 %v2455
        %2472 = vmatprep.subr.mxu0 0.0
        %2473 = vmatpush1.msra.mxu0 %v2454
        %2474 = vmatprep.subr.mxu0 0.0
        %2475 = vmatpush1.msra.mxu0 %v2453
        %2476 = vmatprep.subr.mxu0 0.0
        %2477 = vmatpush1.msra.mxu0 %v2452
        %2478 = vmatprep.subr.mxu0 0.0
        %2479 = vmatpush1.msra.mxu0 %v2451
        %2480 = vmatprep.subr.mxu0 0.0
        %2481 = vmatpush1.msra.mxu0 %v2450
        %2482 = vmatprep.subr.mxu0 0.0
        %2483 = vmatpush1.msra.mxu0 %v2449
        %2484 = vmatprep.subr.mxu0 0.0
        %2485 = vmatpush1.msra.mxu0 %v2448
        %2486 = vmatprep.subr.mxu0 0.0
        %2487 = vmatpush1.msra.mxu0 %v2447
        %2488 = vmatprep.subr.mxu0 0.0
        %2489 = vmatpush1.msra.mxu0 %v2446
        %2490 = vmatprep.subr.mxu0 0.0
        %2491 = vmatpush1.msra.mxu0 %v2445
        %2492 = vmatprep.subr.mxu0 0.0
        %2493 = vmatpush1.msra.mxu0 %v2444
        %2494 = vmatprep.subr.mxu0 0.0
        %2495 = vmatpush1.msra.mxu0 %v2443
        %2496 = vmatprep.subr.mxu0 0.0
        %2497 = vmatpush2.msra.mxu0 0.0
        %2498 = vmatprep.subr.mxu0 0.0
        %2499 = vmatpush2.msra.mxu0 0.0
        %2500 = vmatprep.subr.mxu0 0.0
        %2501 = vmatpush2.msra.mxu0 0.0
        %2502 = vmatprep.subr.mxu0 0.0
        %2503 = vmatpush2.msra.mxu0 0.0
        %2504 = vmatprep.subr.mxu0 0.0
        %2505 = vmatpush2.msra.mxu0 0.0
        %2506 = vmatprep.subr.mxu0 0.0
        %2507 = vmatpush2.msra.mxu0 0.0
        %2508 = vmatprep.subr.mxu0 0.0
        %2509 = vmatpush2.msra.mxu0 0.0
        %2510 = vmatprep.subr.mxu0 0.0
        %2511 = vmatpush2.msra.mxu0 0.0
        %2512 = vmatprep.subr.mxu0 0.0
        %2513 = vmatpush2.msra.mxu0 0.0
        %2514 = vmatprep.subr.mxu0 0.0
        %2515 = vmatpush2.msra.mxu0 0.0
        %2516 = vmatprep.subr.mxu0 0.0
        %2517 = vmatpush2.msra.mxu0 0.0
        %2518 = vmatprep.subr.mxu0 0.0
        %2519 = vmatpush2.msra.mxu0 %v2463
        %2520 = vmatprep.subr.mxu0 0.0
        %2521 = vmatpush2.msra.mxu0 %v2462
        %2522 = vmatprep.subr.mxu0 0.0
        %2523 = vmatpush2.msra.mxu0 %v2461
        %2524 = vmatprep.subr.mxu0 0.0
        %2525 = vmatpush2.msra.mxu0 %v2460
        %2526 = vmatprep.subr.mxu0 0.0
        %2527 = vmatpush2.msra.mxu0 %v2459
        %2528 = vmatprep.mubr.f32.mxu0 %v2323
        %2529 = vmatmul.mubr.f32.gmra.mxu0 %v2286
        %v2530 = vpop.f32.mrf.mxu0
        %v2531 = vadd.f32 0.0, %v2530
        %v2532 = vpop.f32.mrf.mxu0
        %2533 = vmatprep.mubr.f32.mxu0 %v2326
        %2534 = vmatmul.mubr.f32.gmra.mxu0 %v2288
        %v2535 = vpop.f32.mrf.mxu0
        %v2536 = vadd.f32 0.0, %v2535
        %v2537 = vpop.f32.mrf.mxu0
        %2538 = vmatprep.mubr.f32.mxu0 %v2329
        %2539 = vmatmul.mubr.f32.gmra.mxu0 %v2290
        %v2540 = vpop.f32.mrf.mxu0
        %v2541 = vadd.f32 0.0, %v2540
        %v2542 = vpop.f32.mrf.mxu0
        %2543 = vmatprep.mubr.f32.mxu0 %v2332
        %2544 = vmatmul.mubr.f32.gmra.mxu0 %v2292
        %v2545 = vpop.f32.mrf.mxu0
        %v2546 = vadd.f32 0.0, %v2545
        %v2547 = vpop.f32.mrf.mxu0
        %2548 = vmatprep.mubr.f32.mxu0 %v2335
        %2549 = vmatmul.mubr.f32.gmra.mxu0 %v2294
        %v2550 = vpop.f32.mrf.mxu0
        %v2551 = vadd.f32 0.0, %v2550
        %v2552 = vpop.f32.mrf.mxu0
        %2553 = vmatprep.mubr.f32.mxu0 %v2338
        %2554 = vmatmul.mubr.f32.gmra.mxu0 %v2296
        %v2555 = vpop.f32.mrf.mxu0
        %v2556 = vadd.f32 0.0, %v2555
        %v2557 = vpop.f32.mrf.mxu0
        %2558 = vmatprep.mubr.f32.mxu0 %v2341
        %2559 = vmatmul.mubr.f32.gmra.mxu0 %v2298
        %v2560 = vpop.f32.mrf.mxu0
        %v2561 = vadd.f32 0.0, %v2560
        %v2562 = vpop.f32.mrf.mxu0
        %2563 = vdwg.mxu0
        %v2564 = vmax.f32 %v2410, %v2531
        %v2565 = vmax.f32 %v2415, %v2536
        %v2566 = vmax.f32 %v2420, %v2541
        %v2567 = vmax.f32 %v2425, %v2546
        %v2568 = vmax.f32 %v2430, %v2551
        %v2569 = vmax.f32 %v2435, %v2556
        %v2570 = vmax.f32 %v2440, %v2561
        %vm2571 = vcmask 687104
        %2572 = vst.msk [vmem:[#allocation3] sm:$0xff] %vm2571, %v2564
        %2573 = vst.msk [vmem:[#allocation3 + $0x8] sm:$0xff] %vm2571, %v2565
        %2574 = vst.msk [vmem:[#allocation3 + $0x10] sm:$0xff] %vm2571, %v2566
        %2575 = vst.msk [vmem:[#allocation3 + $0x18] sm:$0xff] %vm2571, %v2567
        %2576 = vst.msk [vmem:[#allocation3 + $0x20] sm:$0xff] %vm2571, %v2568
        %2577 = vst.msk [vmem:[#allocation3 + $0x28] sm:$0xff] %vm2571, %v2569
        %2578 = vst.msk [vmem:[#allocation3 + $0x30] sm:$0xff] %vm2571, %v2570
        %2579 = vst.msk [vmem:[#allocation3 + $0x38] sm:$0xff] %vm2571, 0.0
        %v2580 = vld [vmem:[#allocation3] sm:$0xff]
        %v2581 = vld [vmem:[#allocation3 + $0x8] sm:$0xff]
        %v2582 = vld [vmem:[#allocation3 + $0x10] sm:$0xff]
        %v2583 = vld [vmem:[#allocation3 + $0x18] sm:$0xff]
        %v2584 = vld [vmem:[#allocation3 + $0x20] sm:$0xff]
        %v2585 = vld [vmem:[#allocation3 + $0x28] sm:$0xff]
        %v2586 = vld [vmem:[#allocation3 + $0x30] sm:$0xff]
        %v2587 = vld [vmem:[%s7] sm:$0xff]
        %v2588 = vld [vmem:[%s7 + $0x8] sm:$0xff]
        %v2589 = vld [vmem:[%s7 + $0x10] sm:$0xff]
        %v2590 = vld [vmem:[%s7 + $0x18] sm:$0xff]
        %v2591 = vld [vmem:[%s7 + $0x20] sm:$0xff]
        %v2592 = vld [vmem:[%s7 + $0x28] sm:$0xff]
        %v2593 = vld [vmem:[%s7 + $0x30] sm:$0xff]
        %v2594 = vld [vmem:[%s7 + $0x38] sm:$0xff]
        %v2595 = vld [vmem:[%s7 + $0x40] sm:$0xff]
        %v2596 = vld [vmem:[%s7 + $0x48] sm:$0xff]
        %v2597 = vld [vmem:[%s7 + $0x50] sm:$0xff]
        %v2598 = vld [vmem:[%s7 + $0x58] sm:$0xff]
        %v2599 = vld [vmem:[%s7 + $0x60] sm:$0xff]
        %v2600 = vld [vmem:[%s7 + $0x68] sm:$0xff]
        %v2601 = vld [vmem:[%s7 + $0x70] sm:$0xff]
        %v2602 = vld [vmem:[%s7 + $0x78] sm:$0xff]
        %v2603 = vld [vmem:[%s7 + $0x80] sm:$0xff]
        %v2604 = vld [vmem:[%s7 + $0x88] sm:$0xff]
        %v2605 = vld [vmem:[%s7 + $0x90] sm:$0xff]
        %v2606 = vld [vmem:[%s7 + $0x98] sm:$0xff]
        %v2607 = vld [vmem:[%s7 + $0xa0] sm:$0xf]
        %v2608 = vld [vmem:[%s7 + $0xa8] sm:$0xf]
        %v2609 = vld [vmem:[#allocation3 + $0x1] sm:$0xff]
        %v2610 = vld [vmem:[#allocation3 + $0x9] sm:$0xff]
        %v2611 = vld [vmem:[#allocation3 + $0x11] sm:$0xff]
        %v2612 = vld [vmem:[#allocation3 + $0x19] sm:$0xff]
        %v2613 = vld [vmem:[#allocation3 + $0x21] sm:$0xff]
        %v2614 = vld [vmem:[#allocation3 + $0x29] sm:$0xff]
        %v2615 = vld [vmem:[#allocation3 + $0x31] sm:$0xff]
        %s2616 = scalar_lea.vmem %s7, 176
        %v2617 = vld [vmem:[%s2616] sm:$0xff]
        %v2618 = vld [vmem:[%s2616 + $0x8] sm:$0xff]
        %v2619 = vld [vmem:[%s2616 + $0x10] sm:$0xff]
        %v2620 = vld [vmem:[%s2616 + $0x18] sm:$0xff]
        %v2621 = vld [vmem:[%s2616 + $0x20] sm:$0xff]
        %v2622 = vld [vmem:[%s2616 + $0x28] sm:$0xff]
        %v2623 = vld [vmem:[%s2616 + $0x30] sm:$0xff]
        %v2624 = vld [vmem:[%s2616 + $0x38] sm:$0xff]
        %v2625 = vld [vmem:[%s2616 + $0x40] sm:$0xff]
        %v2626 = vld [vmem:[%s2616 + $0x48] sm:$0xff]
        %v2627 = vld [vmem:[%s2616 + $0x50] sm:$0xff]
        %v2628 = vld [vmem:[%s2616 + $0x58] sm:$0xff]
        %v2629 = vld [vmem:[%s2616 + $0x60] sm:$0xff]
        %v2630 = vld [vmem:[%s2616 + $0x68] sm:$0xff]
        %v2631 = vld [vmem:[%s2616 + $0x70] sm:$0xff]
        %v2632 = vld [vmem:[%s2616 + $0x78] sm:$0xff]
        %v2633 = vld [vmem:[%s2616 + $0x80] sm:$0xff]
        %v2634 = vld [vmem:[%s2616 + $0x88] sm:$0xff]
        %v2635 = vld [vmem:[%s2616 + $0x90] sm:$0xff]
        %v2636 = vld [vmem:[%s2616 + $0x98] sm:$0xff]
        %v2637 = vld [vmem:[%s2616 + $0xa0] sm:$0xf]
        %v2638 = vld [vmem:[%s2616 + $0xa8] sm:$0xf]
        %v2640 = vsel %vm2571, %v2609, 0
        %v2643 = vsel %vm2571, %v2610, 0
        %v2646 = vsel %vm2571, %v2611, 0
        %v2649 = vsel %vm2571, %v2612, 0
        %v2652 = vsel %vm2571, %v2613, 0
        %v2655 = vsel %vm2571, %v2614, 0
        %v2658 = vsel %vm2571, %v2615, 0
        %vm2660 = vcmask 1043456
        %v2662 = vsel %vm2660, %v2637, 0
        %v2665 = vsel %vm2660, %v2638, 0
        %2667 = vmatprep.subr.mxu0 0.0
        %2668 = vmatpush1.msra.mxu0 0.0
        %2669 = vmatprep.subr.mxu0 0.0
        %2670 = vmatpush1.msra.mxu0 0.0
        %2671 = vmatprep.subr.mxu0 0.0
        %2672 = vmatpush1.msra.mxu0 0.0
        %2673 = vmatprep.subr.mxu0 0.0
        %2674 = vmatpush1.msra.mxu0 0.0
        %2675 = vmatprep.subr.mxu0 0.0
        %2676 = vmatpush1.msra.mxu0 0.0
        %2677 = vmatprep.subr.mxu0 %v2665
        %2678 = vmatpush1.msra.mxu0 %v2662
        %2679 = vmatprep.subr.mxu0 %v2636
        %2680 = vmatpush1.msra.mxu0 %v2635
        %2681 = vmatprep.subr.mxu0 %v2634
        %2682 = vmatpush1.msra.mxu0 %v2633
        %2683 = vmatprep.subr.mxu0 %v2632
        %2684 = vmatpush1.msra.mxu0 %v2631
        %2685 = vmatprep.subr.mxu0 %v2630
        %2686 = vmatpush1.msra.mxu0 %v2629
        %2687 = vmatprep.subr.mxu0 %v2628
        %2688 = vmatpush1.msra.mxu0 %v2627
        %2689 = vmatprep.subr.mxu0 %v2626
        %2690 = vmatpush1.msra.mxu0 %v2625
        %2691 = vmatprep.subr.mxu0 %v2624
        %2692 = vmatpush1.msra.mxu0 %v2623
        %2693 = vmatprep.subr.mxu0 %v2622
        %2694 = vmatpush1.msra.mxu0 %v2621
        %2695 = vmatprep.subr.mxu0 %v2620
        %2696 = vmatpush1.msra.mxu0 %v2619
        %2697 = vmatprep.subr.mxu0 %v2618
        %2698 = vmatpush1.msra.mxu0 %v2617
        %2699 = vmatprep.subr.mxu0 0.0
        %2700 = vmatpush2.msra.mxu0 0.0
        %2701 = vmatprep.subr.mxu0 0.0
        %2702 = vmatpush2.msra.mxu0 0.0
        %2703 = vmatprep.subr.mxu0 0.0
        %2704 = vmatpush2.msra.mxu0 0.0
        %2705 = vmatprep.subr.mxu0 0.0
        %2706 = vmatpush2.msra.mxu0 0.0
        %2707 = vmatprep.subr.mxu0 0.0
        %2708 = vmatpush2.msra.mxu0 0.0
        %2709 = vmatprep.subr.mxu0 0.0
        %2710 = vmatpush2.msra.mxu0 0.0
        %2711 = vmatprep.subr.mxu0 0.0
        %2712 = vmatpush2.msra.mxu0 0.0
        %2713 = vmatprep.subr.mxu0 0.0
        %2714 = vmatpush2.msra.mxu0 0.0
        %2715 = vmatprep.subr.mxu0 0.0
        %2716 = vmatpush2.msra.mxu0 0.0
        %2717 = vmatprep.subr.mxu0 0.0
        %2718 = vmatpush2.msra.mxu0 0.0
        %2719 = vmatprep.subr.mxu0 0.0
        %2720 = vmatpush2.msra.mxu0 0.0
        %2721 = vmatprep.subr.mxu0 0.0
        %2722 = vmatpush2.msra.mxu0 0.0
        %2723 = vmatprep.subr.mxu0 0.0
        %2724 = vmatpush2.msra.mxu0 0.0
        %2725 = vmatprep.subr.mxu0 0.0
        %2726 = vmatpush2.msra.mxu0 0.0
        %2727 = vmatprep.subr.mxu0 0.0
        %2728 = vmatpush2.msra.mxu0 0.0
        %2729 = vmatprep.subr.mxu0 0.0
        %2730 = vmatpush2.msra.mxu0 0.0
        %2731 = vmatprep.mubr.f32.mxu0 0.0
        %2732 = vmatmul.mubr.f32.gmra.mxu0 %v2640
        %v2733 = vpop.f32.mrf.mxu0
        %v2734 = vadd.f32 0.0, %v2733
        %v2735 = vpop.f32.mrf.mxu0
        %v2736 = vadd.f32 0.0, %v2735
        %2737 = vmatprep.mubr.f32.mxu0 0.0
        %2738 = vmatmul.mubr.f32.gmra.mxu0 %v2643
        %v2739 = vpop.f32.mrf.mxu0
        %v2740 = vadd.f32 0.0, %v2739
        %v2741 = vpop.f32.mrf.mxu0
        %v2742 = vadd.f32 0.0, %v2741
        %2743 = vmatprep.mubr.f32.mxu0 0.0
        %2744 = vmatmul.mubr.f32.gmra.mxu0 %v2646
        %v2745 = vpop.f32.mrf.mxu0
        %v2746 = vadd.f32 0.0, %v2745
        %v2747 = vpop.f32.mrf.mxu0
        %v2748 = vadd.f32 0.0, %v2747
        %2749 = vmatprep.mubr.f32.mxu0 0.0
        %2750 = vmatmul.mubr.f32.gmra.mxu0 %v2649
        %v2751 = vpop.f32.mrf.mxu0
        %v2752 = vadd.f32 0.0, %v2751
        %v2753 = vpop.f32.mrf.mxu0
        %v2754 = vadd.f32 0.0, %v2753
        %2755 = vmatprep.mubr.f32.mxu0 0.0
        %2756 = vmatmul.mubr.f32.gmra.mxu0 %v2652
        %v2757 = vpop.f32.mrf.mxu0
        %v2758 = vadd.f32 0.0, %v2757
        %v2759 = vpop.f32.mrf.mxu0
        %v2760 = vadd.f32 0.0, %v2759
        %2761 = vmatprep.mubr.f32.mxu0 0.0
        %2762 = vmatmul.mubr.f32.gmra.mxu0 %v2655
        %v2763 = vpop.f32.mrf.mxu0
        %v2764 = vadd.f32 0.0, %v2763
        %v2765 = vpop.f32.mrf.mxu0
        %v2766 = vadd.f32 0.0, %v2765
        %2767 = vmatprep.mubr.f32.mxu0 0.0
        %2768 = vmatmul.mubr.f32.gmra.mxu0 %v2658
        %v2769 = vpop.f32.mrf.mxu0
        %v2770 = vadd.f32 0.0, %v2769
        %v2771 = vpop.f32.mrf.mxu0
        %v2772 = vadd.f32 0.0, %v2771
        %2773 = vdwg.mxu0
        %v2775 = vsel %vm2571, %v2580, 0
        %v2778 = vsel %vm2571, %v2581, 0
        %v2781 = vsel %vm2571, %v2582, 0
        %v2784 = vsel %vm2571, %v2583, 0
        %v2787 = vsel %vm2571, %v2584, 0
        %v2790 = vsel %vm2571, %v2585, 0
        %v2793 = vsel %vm2571, %v2586, 0
        %v2796 = vsel %vm2660, %v2607, 0
        %v2799 = vsel %vm2660, %v2608, 0
        %2801 = vmatprep.subr.mxu0 0.0
        %2802 = vmatpush1.msra.mxu0 0.0
        %2803 = vmatprep.subr.mxu0 0.0
        %2804 = vmatpush1.msra.mxu0 0.0
        %2805 = vmatprep.subr.mxu0 0.0
        %2806 = vmatpush1.msra.mxu0 0.0
        %2807 = vmatprep.subr.mxu0 0.0
        %2808 = vmatpush1.msra.mxu0 0.0
        %2809 = vmatprep.subr.mxu0 0.0
        %2810 = vmatpush1.msra.mxu0 0.0
        %2811 = vmatprep.subr.mxu0 %v2799
        %2812 = vmatpush1.msra.mxu0 %v2796
        %2813 = vmatprep.subr.mxu0 %v2606
        %2814 = vmatpush1.msra.mxu0 %v2605
        %2815 = vmatprep.subr.mxu0 %v2604
        %2816 = vmatpush1.msra.mxu0 %v2603
        %2817 = vmatprep.subr.mxu0 %v2602
        %2818 = vmatpush1.msra.mxu0 %v2601
        %2819 = vmatprep.subr.mxu0 %v2600
        %2820 = vmatpush1.msra.mxu0 %v2599
        %2821 = vmatprep.subr.mxu0 %v2598
        %2822 = vmatpush1.msra.mxu0 %v2597
        %2823 = vmatprep.subr.mxu0 %v2596
        %2824 = vmatpush1.msra.mxu0 %v2595
        %2825 = vmatprep.subr.mxu0 %v2594
        %2826 = vmatpush1.msra.mxu0 %v2593
        %2827 = vmatprep.subr.mxu0 %v2592
        %2828 = vmatpush1.msra.mxu0 %v2591
        %2829 = vmatprep.subr.mxu0 %v2590
        %2830 = vmatpush1.msra.mxu0 %v2589
        %2831 = vmatprep.subr.mxu0 %v2588
        %2832 = vmatpush1.msra.mxu0 %v2587
        %2833 = vmatprep.subr.mxu0 0.0
        %2834 = vmatpush2.msra.mxu0 0.0
        %2835 = vmatprep.subr.mxu0 0.0
        %2836 = vmatpush2.msra.mxu0 0.0
        %2837 = vmatprep.subr.mxu0 0.0
        %2838 = vmatpush2.msra.mxu0 0.0
        %2839 = vmatprep.subr.mxu0 0.0
        %2840 = vmatpush2.msra.mxu0 0.0
        %2841 = vmatprep.subr.mxu0 0.0
        %2842 = vmatpush2.msra.mxu0 0.0
        %2843 = vmatprep.subr.mxu0 0.0
        %2844 = vmatpush2.msra.mxu0 0.0
        %2845 = vmatprep.subr.mxu0 0.0
        %2846 = vmatpush2.msra.mxu0 0.0
        %2847 = vmatprep.subr.mxu0 0.0
        %2848 = vmatpush2.msra.mxu0 0.0
        %2849 = vmatprep.subr.mxu0 0.0
        %2850 = vmatpush2.msra.mxu0 0.0
        %2851 = vmatprep.subr.mxu0 0.0
        %2852 = vmatpush2.msra.mxu0 0.0
        %2853 = vmatprep.subr.mxu0 0.0
        %2854 = vmatpush2.msra.mxu0 0.0
        %2855 = vmatprep.subr.mxu0 0.0
        %2856 = vmatpush2.msra.mxu0 0.0
        %2857 = vmatprep.subr.mxu0 0.0
        %2858 = vmatpush2.msra.mxu0 0.0
        %2859 = vmatprep.subr.mxu0 0.0
        %2860 = vmatpush2.msra.mxu0 0.0
        %2861 = vmatprep.subr.mxu0 0.0
        %2862 = vmatpush2.msra.mxu0 0.0
        %2863 = vmatprep.subr.mxu0 0.0
        %2864 = vmatpush2.msra.mxu0 0.0
        %2865 = vmatprep.mubr.f32.mxu0 0.0
        %2866 = vmatmul.mubr.f32.gmra.mxu0 %v2775
        %v2867 = vpop.f32.mrf.mxu0
        %v2868 = vadd.f32 %v2734, %v2867
        %v2869 = vpop.f32.mrf.mxu0
        %v2870 = vadd.f32 %v2736, %v2869
        %2871 = vmatprep.mubr.f32.mxu0 0.0
        %2872 = vmatmul.mubr.f32.gmra.mxu0 %v2778
        %v2873 = vpop.f32.mrf.mxu0
        %v2874 = vadd.f32 %v2740, %v2873
        %v2875 = vpop.f32.mrf.mxu0
        %v2876 = vadd.f32 %v2742, %v2875
        %2877 = vmatprep.mubr.f32.mxu0 0.0
        %2878 = vmatmul.mubr.f32.gmra.mxu0 %v2781
        %v2879 = vpop.f32.mrf.mxu0
        %v2880 = vadd.f32 %v2746, %v2879
        %v2881 = vpop.f32.mrf.mxu0
        %v2882 = vadd.f32 %v2748, %v2881
        %2883 = vmatprep.mubr.f32.mxu0 0.0
        %2884 = vmatmul.mubr.f32.gmra.mxu0 %v2784
        %v2885 = vpop.f32.mrf.mxu0
        %v2886 = vadd.f32 %v2752, %v2885
        %v2887 = vpop.f32.mrf.mxu0
        %v2888 = vadd.f32 %v2754, %v2887
        %2889 = vmatprep.mubr.f32.mxu0 0.0
        %2890 = vmatmul.mubr.f32.gmra.mxu0 %v2787
        %v2891 = vpop.f32.mrf.mxu0
        %v2892 = vadd.f32 %v2758, %v2891
        %v2893 = vpop.f32.mrf.mxu0
        %v2894 = vadd.f32 %v2760, %v2893
        %2895 = vmatprep.mubr.f32.mxu0 0.0
        %2896 = vmatmul.mubr.f32.gmra.mxu0 %v2790
        %v2897 = vpop.f32.mrf.mxu0
        %v2898 = vadd.f32 %v2764, %v2897
        %v2899 = vpop.f32.mrf.mxu0
        %v2900 = vadd.f32 %v2766, %v2899
        %2901 = vmatprep.mubr.f32.mxu0 0.0
        %2902 = vmatmul.mubr.f32.gmra.mxu0 %v2793
        %v2903 = vpop.f32.mrf.mxu0
        %v2904 = vadd.f32 %v2770, %v2903
        %v2905 = vpop.f32.mrf.mxu0
        %v2906 = vadd.f32 %v2772, %v2905
        %2907 = vdwg.mxu0
        %v2908 = vld [vmem:[#allocation3 + $0x2] sm:$0xff]
        %v2909 = vld [vmem:[#allocation3 + $0xa] sm:$0xff]
        %v2910 = vld [vmem:[#allocation3 + $0x12] sm:$0xff]
        %v2911 = vld [vmem:[#allocation3 + $0x1a] sm:$0xff]
        %v2912 = vld [vmem:[#allocation3 + $0x22] sm:$0xff]
        %v2913 = vld [vmem:[#allocation3 + $0x2a] sm:$0xff]
        %v2914 = vld [vmem:[#allocation3 + $0x32] sm:$0xff]
        %s2915 = scalar_lea.vmem %s7, 352
        %v2916 = vld [vmem:[%s2915] sm:$0xff]
        %v2917 = vld [vmem:[%s2915 + $0x8] sm:$0xff]
        %v2918 = vld [vmem:[%s2915 + $0x10] sm:$0xff]
        %v2919 = vld [vmem:[%s2915 + $0x18] sm:$0xff]
        %v2920 = vld [vmem:[%s2915 + $0x20] sm:$0xff]
        %v2921 = vld [vmem:[%s2915 + $0x28] sm:$0xff]
        %v2922 = vld [vmem:[%s2915 + $0x30] sm:$0xff]
        %v2923 = vld [vmem:[%s2915 + $0x38] sm:$0xff]
        %v2924 = vld [vmem:[%s2915 + $0x40] sm:$0xff]
        %v2925 = vld [vmem:[%s2915 + $0x48] sm:$0xff]
        %v2926 = vld [vmem:[%s2915 + $0x50] sm:$0xff]
        %v2927 = vld [vmem:[%s2915 + $0x58] sm:$0xff]
        %v2928 = vld [vmem:[%s2915 + $0x60] sm:$0xff]
        %v2929 = vld [vmem:[%s2915 + $0x68] sm:$0xff]
        %v2930 = vld [vmem:[%s2915 + $0x70] sm:$0xff]
        %v2931 = vld [vmem:[%s2915 + $0x78] sm:$0xff]
        %v2932 = vld [vmem:[%s2915 + $0x80] sm:$0xff]
        %v2933 = vld [vmem:[%s2915 + $0x88] sm:$0xff]
        %v2934 = vld [vmem:[%s2915 + $0x90] sm:$0xff]
        %v2935 = vld [vmem:[%s2915 + $0x98] sm:$0xff]
        %v2936 = vld [vmem:[%s2915 + $0xa0] sm:$0xf]
        %v2937 = vld [vmem:[%s2915 + $0xa8] sm:$0xf]
        %v2939 = vsel %vm2571, %v2908, 0
        %v2942 = vsel %vm2571, %v2909, 0
        %v2945 = vsel %vm2571, %v2910, 0
        %v2948 = vsel %vm2571, %v2911, 0
        %v2951 = vsel %vm2571, %v2912, 0
        %v2954 = vsel %vm2571, %v2913, 0
        %v2957 = vsel %vm2571, %v2914, 0
        %v2960 = vsel %vm2660, %v2936, 0
        %v2963 = vsel %vm2660, %v2937, 0
        %2965 = vmatprep.subr.mxu0 0.0
        %2966 = vmatpush1.msra.mxu0 0.0
        %2967 = vmatprep.subr.mxu0 0.0
        %2968 = vmatpush1.msra.mxu0 0.0
        %2969 = vmatprep.subr.mxu0 0.0
        %2970 = vmatpush1.msra.mxu0 0.0
        %2971 = vmatprep.subr.mxu0 0.0
        %2972 = vmatpush1.msra.mxu0 0.0
        %2973 = vmatprep.subr.mxu0 0.0
        %2974 = vmatpush1.msra.mxu0 0.0
        %2975 = vmatprep.subr.mxu0 %v2963
        %2976 = vmatpush1.msra.mxu0 %v2960
        %2977 = vmatprep.subr.mxu0 %v2935
        %2978 = vmatpush1.msra.mxu0 %v2934
        %2979 = vmatprep.subr.mxu0 %v2933
        %2980 = vmatpush1.msra.mxu0 %v2932
        %2981 = vmatprep.subr.mxu0 %v2931
        %2982 = vmatpush1.msra.mxu0 %v2930
        %2983 = vmatprep.subr.mxu0 %v2929
        %2984 = vmatpush1.msra.mxu0 %v2928
        %2985 = vmatprep.subr.mxu0 %v2927
        %2986 = vmatpush1.msra.mxu0 %v2926
        %2987 = vmatprep.subr.mxu0 %v2925
        %2988 = vmatpush1.msra.mxu0 %v2924
        %2989 = vmatprep.subr.mxu0 %v2923
        %2990 = vmatpush1.msra.mxu0 %v2922
        %2991 = vmatprep.subr.mxu0 %v2921
        %2992 = vmatpush1.msra.mxu0 %v2920
        %2993 = vmatprep.subr.mxu0 %v2919
        %2994 = vmatpush1.msra.mxu0 %v2918
        %2995 = vmatprep.subr.mxu0 %v2917
        %2996 = vmatpush1.msra.mxu0 %v2916
        %2997 = vmatprep.subr.mxu0 0.0
        %2998 = vmatpush2.msra.mxu0 0.0
        %2999 = vmatprep.subr.mxu0 0.0
        %3000 = vmatpush2.msra.mxu0 0.0
        %3001 = vmatprep.subr.mxu0 0.0
        %3002 = vmatpush2.msra.mxu0 0.0
        %3003 = vmatprep.subr.mxu0 0.0
        %3004 = vmatpush2.msra.mxu0 0.0
        %3005 = vmatprep.subr.mxu0 0.0
        %3006 = vmatpush2.msra.mxu0 0.0
        %3007 = vmatprep.subr.mxu0 0.0
        %3008 = vmatpush2.msra.mxu0 0.0
        %3009 = vmatprep.subr.mxu0 0.0
        %3010 = vmatpush2.msra.mxu0 0.0
        %3011 = vmatprep.subr.mxu0 0.0
        %3012 = vmatpush2.msra.mxu0 0.0
        %3013 = vmatprep.subr.mxu0 0.0
        %3014 = vmatpush2.msra.mxu0 0.0
        %3015 = vmatprep.subr.mxu0 0.0
        %3016 = vmatpush2.msra.mxu0 0.0
        %3017 = vmatprep.subr.mxu0 0.0
        %3018 = vmatpush2.msra.mxu0 0.0
        %3019 = vmatprep.subr.mxu0 0.0
        %3020 = vmatpush2.msra.mxu0 0.0
        %3021 = vmatprep.subr.mxu0 0.0
        %3022 = vmatpush2.msra.mxu0 0.0
        %3023 = vmatprep.subr.mxu0 0.0
        %3024 = vmatpush2.msra.mxu0 0.0
        %3025 = vmatprep.subr.mxu0 0.0
        %3026 = vmatpush2.msra.mxu0 0.0
        %3027 = vmatprep.subr.mxu0 0.0
        %3028 = vmatpush2.msra.mxu0 0.0
        %3029 = vmatprep.mubr.f32.mxu0 0.0
        %3030 = vmatmul.mubr.f32.gmra.mxu0 %v2939
        %v3031 = vpop.f32.mrf.mxu0
        %v3032 = vadd.f32 0.0, %v3031
        %v3033 = vpop.f32.mrf.mxu0
        %v3034 = vadd.f32 0.0, %v3033
        %3035 = vmatprep.mubr.f32.mxu0 0.0
        %3036 = vmatmul.mubr.f32.gmra.mxu0 %v2942
        %v3037 = vpop.f32.mrf.mxu0
        %v3038 = vadd.f32 0.0, %v3037
        %v3039 = vpop.f32.mrf.mxu0
        %v3040 = vadd.f32 0.0, %v3039
        %3041 = vmatprep.mubr.f32.mxu0 0.0
        %3042 = vmatmul.mubr.f32.gmra.mxu0 %v2945
        %v3043 = vpop.f32.mrf.mxu0
        %v3044 = vadd.f32 0.0, %v3043
        %v3045 = vpop.f32.mrf.mxu0
        %v3046 = vadd.f32 0.0, %v3045
        %3047 = vmatprep.mubr.f32.mxu0 0.0
        %3048 = vmatmul.mubr.f32.gmra.mxu0 %v2948
        %v3049 = vpop.f32.mrf.mxu0
        %v3050 = vadd.f32 0.0, %v3049
        %v3051 = vpop.f32.mrf.mxu0
        %v3052 = vadd.f32 0.0, %v3051
        %3053 = vmatprep.mubr.f32.mxu0 0.0
        %3054 = vmatmul.mubr.f32.gmra.mxu0 %v2951
        %v3055 = vpop.f32.mrf.mxu0
        %v3056 = vadd.f32 0.0, %v3055
        %v3057 = vpop.f32.mrf.mxu0
        %v3058 = vadd.f32 0.0, %v3057
        %3059 = vmatprep.mubr.f32.mxu0 0.0
        %3060 = vmatmul.mubr.f32.gmra.mxu0 %v2954
        %v3061 = vpop.f32.mrf.mxu0
        %v3062 = vadd.f32 0.0, %v3061
        %v3063 = vpop.f32.mrf.mxu0
        %v3064 = vadd.f32 0.0, %v3063
        %3065 = vmatprep.mubr.f32.mxu0 0.0
        %3066 = vmatmul.mubr.f32.gmra.mxu0 %v2957
        %v3067 = vpop.f32.mrf.mxu0
        %v3068 = vadd.f32 0.0, %v3067
        %v3069 = vpop.f32.mrf.mxu0
        %v3070 = vadd.f32 0.0, %v3069
        %3071 = vdwg.mxu0
        %v3072 = vadd.f32 %v2868, %v3032
        %v3073 = vadd.f32 %v2870, %v3034
        %v3074 = vadd.f32 %v2874, %v3038
        %v3075 = vadd.f32 %v2876, %v3040
        %v3076 = vadd.f32 %v2880, %v3044
        %v3077 = vadd.f32 %v2882, %v3046
        %v3078 = vadd.f32 %v2886, %v3050
        %v3079 = vadd.f32 %v2888, %v3052
        %v3080 = vadd.f32 %v2892, %v3056
        %v3081 = vadd.f32 %v2894, %v3058
        %v3082 = vadd.f32 %v2898, %v3062
        %v3083 = vadd.f32 %v2900, %v3064
        %v3084 = vadd.f32 %v2904, %v3068
        %v3085 = vadd.f32 %v2906, %v3070
        %v3086 = vld [vmem:[#allocation3 + $0x3] sm:$0xff]
        %v3087 = vld [vmem:[#allocation3 + $0xb] sm:$0xff]
        %v3088 = vld [vmem:[#allocation3 + $0x13] sm:$0xff]
        %v3089 = vld [vmem:[#allocation3 + $0x1b] sm:$0xff]
        %v3090 = vld [vmem:[#allocation3 + $0x23] sm:$0xff]
        %v3091 = vld [vmem:[#allocation3 + $0x2b] sm:$0xff]
        %v3092 = vld [vmem:[#allocation3 + $0x33] sm:$0xff]
        %s3093 = scalar_lea.vmem %s7, 528
        %v3094 = vld [vmem:[%s3093] sm:$0xff]
        %v3095 = vld [vmem:[%s3093 + $0x8] sm:$0xff]
        %v3096 = vld [vmem:[%s3093 + $0x10] sm:$0xff]
        %v3097 = vld [vmem:[%s3093 + $0x18] sm:$0xff]
        %v3098 = vld [vmem:[%s3093 + $0x20] sm:$0xff]
        %v3099 = vld [vmem:[%s3093 + $0x28] sm:$0xff]
        %v3100 = vld [vmem:[%s3093 + $0x30] sm:$0xff]
        %v3101 = vld [vmem:[%s3093 + $0x38] sm:$0xff]
        %v3102 = vld [vmem:[%s3093 + $0x40] sm:$0xff]
        %v3103 = vld [vmem:[%s3093 + $0x48] sm:$0xff]
        %v3104 = vld [vmem:[%s3093 + $0x50] sm:$0xff]
        %v3105 = vld [vmem:[%s3093 + $0x58] sm:$0xff]
        %v3106 = vld [vmem:[%s3093 + $0x60] sm:$0xff]
        %v3107 = vld [vmem:[%s3093 + $0x68] sm:$0xff]
        %v3108 = vld [vmem:[%s3093 + $0x70] sm:$0xff]
        %v3109 = vld [vmem:[%s3093 + $0x78] sm:$0xff]
        %v3110 = vld [vmem:[%s3093 + $0x80] sm:$0xff]
        %v3111 = vld [vmem:[%s3093 + $0x88] sm:$0xff]
        %v3112 = vld [vmem:[%s3093 + $0x90] sm:$0xff]
        %v3113 = vld [vmem:[%s3093 + $0x98] sm:$0xff]
        %v3114 = vld [vmem:[%s3093 + $0xa0] sm:$0xf]
        %v3115 = vld [vmem:[%s3093 + $0xa8] sm:$0xf]
        %v3117 = vsel %vm2571, %v3086, 0
        %v3120 = vsel %vm2571, %v3087, 0
        %v3123 = vsel %vm2571, %v3088, 0
        %v3126 = vsel %vm2571, %v3089, 0
        %v3129 = vsel %vm2571, %v3090, 0
        %v3132 = vsel %vm2571, %v3091, 0
        %v3135 = vsel %vm2571, %v3092, 0
        %v3138 = vsel %vm2660, %v3114, 0
        %v3141 = vsel %vm2660, %v3115, 0
        %3143 = vmatprep.subr.mxu0 0.0
        %3144 = vmatpush1.msra.mxu0 0.0
        %3145 = vmatprep.subr.mxu0 0.0
        %3146 = vmatpush1.msra.mxu0 0.0
        %3147 = vmatprep.subr.mxu0 0.0
        %3148 = vmatpush1.msra.mxu0 0.0
        %3149 = vmatprep.subr.mxu0 0.0
        %3150 = vmatpush1.msra.mxu0 0.0
        %3151 = vmatprep.subr.mxu0 0.0
        %3152 = vmatpush1.msra.mxu0 0.0
        %3153 = vmatprep.subr.mxu0 %v3141
        %3154 = vmatpush1.msra.mxu0 %v3138
        %3155 = vmatprep.subr.mxu0 %v3113
        %3156 = vmatpush1.msra.mxu0 %v3112
        %3157 = vmatprep.subr.mxu0 %v3111
        %3158 = vmatpush1.msra.mxu0 %v3110
        %3159 = vmatprep.subr.mxu0 %v3109
        %3160 = vmatpush1.msra.mxu0 %v3108
        %3161 = vmatprep.subr.mxu0 %v3107
        %3162 = vmatpush1.msra.mxu0 %v3106
        %3163 = vmatprep.subr.mxu0 %v3105
        %3164 = vmatpush1.msra.mxu0 %v3104
        %3165 = vmatprep.subr.mxu0 %v3103
        %3166 = vmatpush1.msra.mxu0 %v3102
        %3167 = vmatprep.subr.mxu0 %v3101
        %3168 = vmatpush1.msra.mxu0 %v3100
        %3169 = vmatprep.subr.mxu0 %v3099
        %3170 = vmatpush1.msra.mxu0 %v3098
        %3171 = vmatprep.subr.mxu0 %v3097
        %3172 = vmatpush1.msra.mxu0 %v3096
        %3173 = vmatprep.subr.mxu0 %v3095
        %3174 = vmatpush1.msra.mxu0 %v3094
        %3175 = vmatprep.subr.mxu0 0.0
        %3176 = vmatpush2.msra.mxu0 0.0
        %3177 = vmatprep.subr.mxu0 0.0
        %3178 = vmatpush2.msra.mxu0 0.0
        %3179 = vmatprep.subr.mxu0 0.0
        %3180 = vmatpush2.msra.mxu0 0.0
        %3181 = vmatprep.subr.mxu0 0.0
        %3182 = vmatpush2.msra.mxu0 0.0
        %3183 = vmatprep.subr.mxu0 0.0
        %3184 = vmatpush2.msra.mxu0 0.0
        %3185 = vmatprep.subr.mxu0 0.0
        %3186 = vmatpush2.msra.mxu0 0.0
        %3187 = vmatprep.subr.mxu0 0.0
        %3188 = vmatpush2.msra.mxu0 0.0
        %3189 = vmatprep.subr.mxu0 0.0
        %3190 = vmatpush2.msra.mxu0 0.0
        %3191 = vmatprep.subr.mxu0 0.0
        %3192 = vmatpush2.msra.mxu0 0.0
        %3193 = vmatprep.subr.mxu0 0.0
        %3194 = vmatpush2.msra.mxu0 0.0
        %3195 = vmatprep.subr.mxu0 0.0
        %3196 = vmatpush2.msra.mxu0 0.0
        %3197 = vmatprep.subr.mxu0 0.0
        %3198 = vmatpush2.msra.mxu0 0.0
        %3199 = vmatprep.subr.mxu0 0.0
        %3200 = vmatpush2.msra.mxu0 0.0
        %3201 = vmatprep.subr.mxu0 0.0
        %3202 = vmatpush2.msra.mxu0 0.0
        %3203 = vmatprep.subr.mxu0 0.0
        %3204 = vmatpush2.msra.mxu0 0.0
        %3205 = vmatprep.subr.mxu0 0.0
        %3206 = vmatpush2.msra.mxu0 0.0
        %3207 = vmatprep.mubr.f32.mxu0 0.0
        %3208 = vmatmul.mubr.f32.gmra.mxu0 %v3117
        %v3209 = vpop.f32.mrf.mxu0
        %v3210 = vadd.f32 0.0, %v3209
        %v3211 = vpop.f32.mrf.mxu0
        %v3212 = vadd.f32 0.0, %v3211
        %3213 = vmatprep.mubr.f32.mxu0 0.0
        %3214 = vmatmul.mubr.f32.gmra.mxu0 %v3120
        %v3215 = vpop.f32.mrf.mxu0
        %v3216 = vadd.f32 0.0, %v3215
        %v3217 = vpop.f32.mrf.mxu0
        %v3218 = vadd.f32 0.0, %v3217
        %3219 = vmatprep.mubr.f32.mxu0 0.0
        %3220 = vmatmul.mubr.f32.gmra.mxu0 %v3123
        %v3221 = vpop.f32.mrf.mxu0
        %v3222 = vadd.f32 0.0, %v3221
        %v3223 = vpop.f32.mrf.mxu0
        %v3224 = vadd.f32 0.0, %v3223
        %3225 = vmatprep.mubr.f32.mxu0 0.0
        %3226 = vmatmul.mubr.f32.gmra.mxu0 %v3126
        %v3227 = vpop.f32.mrf.mxu0
        %v3228 = vadd.f32 0.0, %v3227
        %v3229 = vpop.f32.mrf.mxu0
        %v3230 = vadd.f32 0.0, %v3229
        %3231 = vmatprep.mubr.f32.mxu0 0.0
        %3232 = vmatmul.mubr.f32.gmra.mxu0 %v3129
        %v3233 = vpop.f32.mrf.mxu0
        %v3234 = vadd.f32 0.0, %v3233
        %v3235 = vpop.f32.mrf.mxu0
        %v3236 = vadd.f32 0.0, %v3235
        %3237 = vmatprep.mubr.f32.mxu0 0.0
        %3238 = vmatmul.mubr.f32.gmra.mxu0 %v3132
        %v3239 = vpop.f32.mrf.mxu0
        %v3240 = vadd.f32 0.0, %v3239
        %v3241 = vpop.f32.mrf.mxu0
        %v3242 = vadd.f32 0.0, %v3241
        %3243 = vmatprep.mubr.f32.mxu0 0.0
        %3244 = vmatmul.mubr.f32.gmra.mxu0 %v3135
        %v3245 = vpop.f32.mrf.mxu0
        %v3246 = vadd.f32 0.0, %v3245
        %v3247 = vpop.f32.mrf.mxu0
        %v3248 = vadd.f32 0.0, %v3247
        %3249 = vdwg.mxu0
        %v3250 = vadd.f32 %v3072, %v3210
        %v3251 = vadd.f32 %v3073, %v3212
        %v3252 = vadd.f32 %v3074, %v3216
        %v3253 = vadd.f32 %v3075, %v3218
        %v3254 = vadd.f32 %v3076, %v3222
        %v3255 = vadd.f32 %v3077, %v3224
        %v3256 = vadd.f32 %v3078, %v3228
        %v3257 = vadd.f32 %v3079, %v3230
        %v3258 = vadd.f32 %v3080, %v3234
        %v3259 = vadd.f32 %v3081, %v3236
        %v3260 = vadd.f32 %v3082, %v3240
        %v3261 = vadd.f32 %v3083, %v3242
        %v3262 = vadd.f32 %v3084, %v3246
        %v3263 = vadd.f32 %v3085, %v3248
        %v3264 = vld [vmem:[#allocation3 + $0x4] sm:$0xff]
        %v3265 = vld [vmem:[#allocation3 + $0xc] sm:$0xff]
        %v3266 = vld [vmem:[#allocation3 + $0x14] sm:$0xff]
        %v3267 = vld [vmem:[#allocation3 + $0x1c] sm:$0xff]
        %v3268 = vld [vmem:[#allocation3 + $0x24] sm:$0xff]
        %v3269 = vld [vmem:[#allocation3 + $0x2c] sm:$0xff]
        %v3270 = vld [vmem:[#allocation3 + $0x34] sm:$0xff]
        %s3271 = scalar_lea.vmem %s7, 704
        %v3272 = vld [vmem:[%s3271] sm:$0xff]
        %v3273 = vld [vmem:[%s3271 + $0x8] sm:$0xff]
        %v3274 = vld [vmem:[%s3271 + $0x10] sm:$0xff]
        %v3275 = vld [vmem:[%s3271 + $0x18] sm:$0xff]
        %v3276 = vld [vmem:[%s3271 + $0x20] sm:$0xff]
        %v3277 = vld [vmem:[%s3271 + $0x28] sm:$0xff]
        %v3278 = vld [vmem:[%s3271 + $0x30] sm:$0xff]
        %v3279 = vld [vmem:[%s3271 + $0x38] sm:$0xff]
        %v3280 = vld [vmem:[%s3271 + $0x40] sm:$0xff]
        %v3281 = vld [vmem:[%s3271 + $0x48] sm:$0xff]
        %v3282 = vld [vmem:[%s3271 + $0x50] sm:$0xff]
        %v3283 = vld [vmem:[%s3271 + $0x58] sm:$0xff]
        %v3284 = vld [vmem:[%s3271 + $0x60] sm:$0xff]
        %v3285 = vld [vmem:[%s3271 + $0x68] sm:$0xff]
        %v3286 = vld [vmem:[%s3271 + $0x70] sm:$0xff]
        %v3287 = vld [vmem:[%s3271 + $0x78] sm:$0xff]
        %v3288 = vld [vmem:[%s3271 + $0x80] sm:$0xff]
        %v3289 = vld [vmem:[%s3271 + $0x88] sm:$0xff]
        %v3290 = vld [vmem:[%s3271 + $0x90] sm:$0xff]
        %v3291 = vld [vmem:[%s3271 + $0x98] sm:$0xff]
        %v3292 = vld [vmem:[%s3271 + $0xa0] sm:$0xf]
        %v3293 = vld [vmem:[%s3271 + $0xa8] sm:$0xf]
        %v3295 = vsel %vm2571, %v3264, 0
        %v3298 = vsel %vm2571, %v3265, 0
        %v3301 = vsel %vm2571, %v3266, 0
        %v3304 = vsel %vm2571, %v3267, 0
        %v3307 = vsel %vm2571, %v3268, 0
        %v3310 = vsel %vm2571, %v3269, 0
        %v3313 = vsel %vm2571, %v3270, 0
        %v3316 = vsel %vm2660, %v3292, 0
        %v3319 = vsel %vm2660, %v3293, 0
        %3321 = vmatprep.subr.mxu0 0.0
        %3322 = vmatpush1.msra.mxu0 0.0
        %3323 = vmatprep.subr.mxu0 0.0
        %3324 = vmatpush1.msra.mxu0 0.0
        %3325 = vmatprep.subr.mxu0 0.0
        %3326 = vmatpush1.msra.mxu0 0.0
        %3327 = vmatprep.subr.mxu0 0.0
        %3328 = vmatpush1.msra.mxu0 0.0
        %3329 = vmatprep.subr.mxu0 0.0
        %3330 = vmatpush1.msra.mxu0 0.0
        %3331 = vmatprep.subr.mxu0 %v3319
        %3332 = vmatpush1.msra.mxu0 %v3316
        %3333 = vmatprep.subr.mxu0 %v3291
        %3334 = vmatpush1.msra.mxu0 %v3290
        %3335 = vmatprep.subr.mxu0 %v3289
        %3336 = vmatpush1.msra.mxu0 %v3288
        %3337 = vmatprep.subr.mxu0 %v3287
        %3338 = vmatpush1.msra.mxu0 %v3286
        %3339 = vmatprep.subr.mxu0 %v3285
        %3340 = vmatpush1.msra.mxu0 %v3284
        %3341 = vmatprep.subr.mxu0 %v3283
        %3342 = vmatpush1.msra.mxu0 %v3282
        %3343 = vmatprep.subr.mxu0 %v3281
        %3344 = vmatpush1.msra.mxu0 %v3280
        %3345 = vmatprep.subr.mxu0 %v3279
        %3346 = vmatpush1.msra.mxu0 %v3278
        %3347 = vmatprep.subr.mxu0 %v3277
        %3348 = vmatpush1.msra.mxu0 %v3276
        %3349 = vmatprep.subr.mxu0 %v3275
        %3350 = vmatpush1.msra.mxu0 %v3274
        %3351 = vmatprep.subr.mxu0 %v3273
        %3352 = vmatpush1.msra.mxu0 %v3272
        %3353 = vmatprep.subr.mxu0 0.0
        %3354 = vmatpush2.msra.mxu0 0.0
        %3355 = vmatprep.subr.mxu0 0.0
        %3356 = vmatpush2.msra.mxu0 0.0
        %3357 = vmatprep.subr.mxu0 0.0
        %3358 = vmatpush2.msra.mxu0 0.0
        %3359 = vmatprep.subr.mxu0 0.0
        %3360 = vmatpush2.msra.mxu0 0.0
        %3361 = vmatprep.subr.mxu0 0.0
        %3362 = vmatpush2.msra.mxu0 0.0
        %3363 = vmatprep.subr.mxu0 0.0
        %3364 = vmatpush2.msra.mxu0 0.0
        %3365 = vmatprep.subr.mxu0 0.0
        %3366 = vmatpush2.msra.mxu0 0.0
        %3367 = vmatprep.subr.mxu0 0.0
        %3368 = vmatpush2.msra.mxu0 0.0
        %3369 = vmatprep.subr.mxu0 0.0
        %3370 = vmatpush2.msra.mxu0 0.0
        %3371 = vmatprep.subr.mxu0 0.0
        %3372 = vmatpush2.msra.mxu0 0.0
        %3373 = vmatprep.subr.mxu0 0.0
        %3374 = vmatpush2.msra.mxu0 0.0
        %3375 = vmatprep.subr.mxu0 0.0
        %3376 = vmatpush2.msra.mxu0 0.0
        %3377 = vmatprep.subr.mxu0 0.0
        %3378 = vmatpush2.msra.mxu0 0.0
        %3379 = vmatprep.subr.mxu0 0.0
        %3380 = vmatpush2.msra.mxu0 0.0
        %3381 = vmatprep.subr.mxu0 0.0
        %3382 = vmatpush2.msra.mxu0 0.0
        %3383 = vmatprep.subr.mxu0 0.0
        %3384 = vmatpush2.msra.mxu0 0.0
        %3385 = vmatprep.mubr.f32.mxu0 0.0
        %3386 = vmatmul.mubr.f32.gmra.mxu0 %v3295
        %v3387 = vpop.f32.mrf.mxu0
        %v3388 = vadd.f32 0.0, %v3387
        %v3389 = vpop.f32.mrf.mxu0
        %v3390 = vadd.f32 0.0, %v3389
        %3391 = vmatprep.mubr.f32.mxu0 0.0
        %3392 = vmatmul.mubr.f32.gmra.mxu0 %v3298
        %v3393 = vpop.f32.mrf.mxu0
        %v3394 = vadd.f32 0.0, %v3393
        %v3395 = vpop.f32.mrf.mxu0
        %v3396 = vadd.f32 0.0, %v3395
        %3397 = vmatprep.mubr.f32.mxu0 0.0
        %3398 = vmatmul.mubr.f32.gmra.mxu0 %v3301
        %v3399 = vpop.f32.mrf.mxu0
        %v3400 = vadd.f32 0.0, %v3399
        %v3401 = vpop.f32.mrf.mxu0
        %v3402 = vadd.f32 0.0, %v3401
        %3403 = vmatprep.mubr.f32.mxu0 0.0
        %3404 = vmatmul.mubr.f32.gmra.mxu0 %v3304
        %v3405 = vpop.f32.mrf.mxu0
        %v3406 = vadd.f32 0.0, %v3405
        %v3407 = vpop.f32.mrf.mxu0
        %v3408 = vadd.f32 0.0, %v3407
        %3409 = vmatprep.mubr.f32.mxu0 0.0
        %3410 = vmatmul.mubr.f32.gmra.mxu0 %v3307
        %v3411 = vpop.f32.mrf.mxu0
        %v3412 = vadd.f32 0.0, %v3411
        %v3413 = vpop.f32.mrf.mxu0
        %v3414 = vadd.f32 0.0, %v3413
        %3415 = vmatprep.mubr.f32.mxu0 0.0
        %3416 = vmatmul.mubr.f32.gmra.mxu0 %v3310
        %v3417 = vpop.f32.mrf.mxu0
        %v3418 = vadd.f32 0.0, %v3417
        %v3419 = vpop.f32.mrf.mxu0
        %v3420 = vadd.f32 0.0, %v3419
        %3421 = vmatprep.mubr.f32.mxu0 0.0
        %3422 = vmatmul.mubr.f32.gmra.mxu0 %v3313
        %v3423 = vpop.f32.mrf.mxu0
        %v3424 = vadd.f32 0.0, %v3423
        %v3425 = vpop.f32.mrf.mxu0
        %v3426 = vadd.f32 0.0, %v3425
        %3427 = vdwg.mxu0
        %v3428 = vadd.f32 %v3250, %v3388
        %v3429 = vadd.f32 %v3251, %v3390
        %v3430 = vadd.f32 %v3252, %v3394
        %v3431 = vadd.f32 %v3253, %v3396
        %v3432 = vadd.f32 %v3254, %v3400
        %v3433 = vadd.f32 %v3255, %v3402
        %v3434 = vadd.f32 %v3256, %v3406
        %v3435 = vadd.f32 %v3257, %v3408
        %v3436 = vadd.f32 %v3258, %v3412
        %v3437 = vadd.f32 %v3259, %v3414
        %v3438 = vadd.f32 %v3260, %v3418
        %v3439 = vadd.f32 %v3261, %v3420
        %v3440 = vadd.f32 %v3262, %v3424
        %v3441 = vadd.f32 %v3263, %v3426
        %v3442 = vld [vmem:[%s8] sm:$0x3]
        %v3444 = vlaneseq
        %v3445 = vshrl.u32 %v3444, 7
        %v3446 = vsub.s32 0, %v3445
        %v3447 = vrot.slane %v3442, %v3446
        %v3448 = vlaneseq
        %v3449 = vshrl.u32 %v3448, 7
        %v3450 = vsub.s32 1, %v3449
        %v3451 = vrot.slane %v3442, %v3450
        %v3454 = vadd.f32 %v3428, %v3447
        %v3455 = vadd.f32 %v3429, %v3451
        %v3456 = vadd.f32 %v3430, %v3447
        %v3457 = vadd.f32 %v3431, %v3451
        %v3458 = vadd.f32 %v3432, %v3447
        %v3459 = vadd.f32 %v3433, %v3451
        %v3460 = vadd.f32 %v3434, %v3447
        %v3461 = vadd.f32 %v3435, %v3451
        %v3462 = vadd.f32 %v3436, %v3447
        %v3463 = vadd.f32 %v3437, %v3451
        %v3464 = vadd.f32 %v3438, %v3447
        %v3465 = vadd.f32 %v3439, %v3451
        %v3466 = vadd.f32 %v3440, %v3447
        %v3467 = vadd.f32 %v3441, %v3451
        %v3468 = vmax.f32 %v3454, 0.0
        %v3469 = vmax.f32 %v3455, 0.0
        %v3470 = vmax.f32 %v3456, 0.0
        %v3471 = vmax.f32 %v3457, 0.0
        %v3472 = vmax.f32 %v3458, 0.0
        %v3473 = vmax.f32 %v3459, 0.0
        %v3474 = vmax.f32 %v3460, 0.0
        %v3475 = vmax.f32 %v3461, 0.0
        %v3476 = vmax.f32 %v3462, 0.0
        %v3477 = vmax.f32 %v3463, 0.0
        %v3478 = vmax.f32 %v3464, 0.0
        %v3479 = vmax.f32 %v3465, 0.0
        %v3480 = vmax.f32 %v3466, 0.0
        %v3481 = vmax.f32 %v3467, 0.0
        %v3482 = vld [vmem:[%s9] sm:$0xff]
        %v3483 = vld [vmem:[%s9 + $0x8] sm:$0xff]
        %v3484 = vld [vmem:[%s9 + $0x10] sm:$0xf]
        %vm3485 = vcmask 457728
        %v3487 = vsel %vm3485, %v3482, 0
        %v3490 = vsel %vm3485, %v3483, 0
        %v3493 = vsel %vm3485, %v3484, 0
        %3495 = vmatprep.subr.mxu0 0.0
        %3496 = vmatpush1.msra.mxu0 0.0
        %3497 = vmatprep.subr.mxu0 0.0
        %3498 = vmatpush1.msra.mxu0 0.0
        %3499 = vmatprep.subr.mxu0 0.0
        %3500 = vmatpush1.msra.mxu0 0.0
        %3501 = vmatprep.subr.mxu0 0.0
        %3502 = vmatpush1.msra.mxu0 0.0
        %3503 = vmatprep.subr.mxu0 0.0
        %3504 = vmatpush1.msra.mxu0 0.0
        %3505 = vmatprep.subr.mxu0 0.0
        %3506 = vmatpush1.msra.mxu0 0.0
        %3507 = vmatprep.subr.mxu0 0.0
        %3508 = vmatpush1.msra.mxu0 0.0
        %3509 = vmatprep.subr.mxu0 0.0
        %3510 = vmatpush1.msra.mxu0 0.0
        %3511 = vmatprep.subr.mxu0 0.0
        %3512 = vmatpush1.msra.mxu0 0.0
        %3513 = vmatprep.subr.mxu0 %v3481
        %3514 = vmatpush1.msra.mxu0 %v3480
        %3515 = vmatprep.subr.mxu0 %v3479
        %3516 = vmatpush1.msra.mxu0 %v3478
        %3517 = vmatprep.subr.mxu0 %v3477
        %3518 = vmatpush1.msra.mxu0 %v3476
        %3519 = vmatprep.subr.mxu0 %v3475
        %3520 = vmatpush1.msra.mxu0 %v3474
        %3521 = vmatprep.subr.mxu0 %v3473
        %3522 = vmatpush1.msra.mxu0 %v3472
        %3523 = vmatprep.subr.mxu0 %v3471
        %3524 = vmatpush1.msra.mxu0 %v3470
        %3525 = vmatprep.subr.mxu0 %v3469
        %3526 = vmatpush1.msra.mxu0 %v3468
        %3527 = vmatprep.subr.mxu0 0.0
        %3528 = vmatpush2.msra.mxu0 0.0
        %3529 = vmatprep.subr.mxu0 0.0
        %3530 = vmatpush2.msra.mxu0 0.0
        %3531 = vmatprep.subr.mxu0 0.0
        %3532 = vmatpush2.msra.mxu0 0.0
        %3533 = vmatprep.subr.mxu0 0.0
        %3534 = vmatpush2.msra.mxu0 0.0
        %3535 = vmatprep.subr.mxu0 0.0
        %3536 = vmatpush2.msra.mxu0 0.0
        %3537 = vmatprep.subr.mxu0 0.0
        %3538 = vmatpush2.msra.mxu0 0.0
        %3539 = vmatprep.subr.mxu0 0.0
        %3540 = vmatpush2.msra.mxu0 0.0
        %3541 = vmatprep.subr.mxu0 0.0
        %3542 = vmatpush2.msra.mxu0 0.0
        %3543 = vmatprep.subr.mxu0 0.0
        %3544 = vmatpush2.msra.mxu0 0.0
        %3545 = vmatprep.subr.mxu0 0.0
        %3546 = vmatpush2.msra.mxu0 0.0
        %3547 = vmatprep.subr.mxu0 0.0
        %3548 = vmatpush2.msra.mxu0 0.0
        %3549 = vmatprep.subr.mxu0 0.0
        %3550 = vmatpush2.msra.mxu0 0.0
        %3551 = vmatprep.subr.mxu0 0.0
        %3552 = vmatpush2.msra.mxu0 0.0
        %3553 = vmatprep.subr.mxu0 0.0
        %3554 = vmatpush2.msra.mxu0 0.0
        %3555 = vmatprep.subr.mxu0 0.0
        %3556 = vmatpush2.msra.mxu0 0.0
        %3557 = vmatprep.subr.mxu0 0.0
        %3558 = vmatpush2.msra.mxu0 0.0
        %3559 = vmatprep.mubr.f32.mxu0 0.0
        %3560 = vmatmul.mubr.f32.gmra.mxu0 %v3487
        %v3561 = vpop.f32.mrf.mxu0
        %v3562 = vadd.f32 0.0, %v3561
        %v3563 = vpop.f32.mrf.mxu0
        %v3564 = vadd.f32 0.0, %v3563
        %3565 = vmatprep.mubr.f32.mxu0 0.0
        %3566 = vmatmul.mubr.f32.gmra.mxu0 %v3490
        %v3567 = vpop.f32.mrf.mxu0
        %v3568 = vadd.f32 0.0, %v3567
        %v3569 = vpop.f32.mrf.mxu0
        %v3570 = vadd.f32 0.0, %v3569
        %3571 = vmatprep.mubr.f32.mxu0 0.0
        %3572 = vmatmul.mubr.f32.gmra.mxu0 %v3493
        %v3573 = vpop.f32.mrf.mxu0
        %v3574 = vadd.f32 0.0, %v3573
        %v3575 = vpop.f32.mrf.mxu0
        %v3576 = vadd.f32 0.0, %v3575
        %3577 = vdwg.mxu0
        %v3578 = vld [vmem:[%s10] sm:$0xff]
        %v3579 = vld [vmem:[%s10 + $0x8] sm:$0xff]
        %v3580 = vld [vmem:[%s10 + $0x10] sm:$0xf]
        %v3582 = vsel %vm3485, %v3578, 0
        %v3585 = vsel %vm3485, %v3579, 0
        %v3588 = vsel %vm3485, %v3580, 0
        %3590 = vmatprep.subr.mxu0 0.0
        %3591 = vmatpush1.msra.mxu0 0.0
        %3592 = vmatprep.subr.mxu0 0.0
        %3593 = vmatpush1.msra.mxu0 0.0
        %3594 = vmatprep.subr.mxu0 0.0
        %3595 = vmatpush1.msra.mxu0 0.0
        %3596 = vmatprep.subr.mxu0 0.0
        %3597 = vmatpush1.msra.mxu0 0.0
        %3598 = vmatprep.subr.mxu0 0.0
        %3599 = vmatpush1.msra.mxu0 0.0
        %3600 = vmatprep.subr.mxu0 0.0
        %3601 = vmatpush1.msra.mxu0 0.0
        %3602 = vmatprep.subr.mxu0 0.0
        %3603 = vmatpush1.msra.mxu0 0.0
        %3604 = vmatprep.subr.mxu0 0.0
        %3605 = vmatpush1.msra.mxu0 0.0
        %3606 = vmatprep.subr.mxu0 0.0
        %3607 = vmatpush1.msra.mxu0 0.0
        %3608 = vmatprep.subr.mxu0 %v3481
        %3609 = vmatpush1.msra.mxu0 %v3480
        %3610 = vmatprep.subr.mxu0 %v3479
        %3611 = vmatpush1.msra.mxu0 %v3478
        %3612 = vmatprep.subr.mxu0 %v3477
        %3613 = vmatpush1.msra.mxu0 %v3476
        %3614 = vmatprep.subr.mxu0 %v3475
        %3615 = vmatpush1.msra.mxu0 %v3474
        %3616 = vmatprep.subr.mxu0 %v3473
        %3617 = vmatpush1.msra.mxu0 %v3472
        %3618 = vmatprep.subr.mxu0 %v3471
        %3619 = vmatpush1.msra.mxu0 %v3470
        %3620 = vmatprep.subr.mxu0 %v3469
        %3621 = vmatpush1.msra.mxu0 %v3468
        %3622 = vmatprep.subr.mxu0 0.0
        %3623 = vmatpush2.msra.mxu0 0.0
        %3624 = vmatprep.subr.mxu0 0.0
        %3625 = vmatpush2.msra.mxu0 0.0
        %3626 = vmatprep.subr.mxu0 0.0
        %3627 = vmatpush2.msra.mxu0 0.0
        %3628 = vmatprep.subr.mxu0 0.0
        %3629 = vmatpush2.msra.mxu0 0.0
        %3630 = vmatprep.subr.mxu0 0.0
        %3631 = vmatpush2.msra.mxu0 0.0
        %3632 = vmatprep.subr.mxu0 0.0
        %3633 = vmatpush2.msra.mxu0 0.0
        %3634 = vmatprep.subr.mxu0 0.0
        %3635 = vmatpush2.msra.mxu0 0.0
        %3636 = vmatprep.subr.mxu0 0.0
        %3637 = vmatpush2.msra.mxu0 0.0
        %3638 = vmatprep.subr.mxu0 0.0
        %3639 = vmatpush2.msra.mxu0 0.0
        %3640 = vmatprep.subr.mxu0 0.0
        %3641 = vmatpush2.msra.mxu0 0.0
        %3642 = vmatprep.subr.mxu0 0.0
        %3643 = vmatpush2.msra.mxu0 0.0
        %3644 = vmatprep.subr.mxu0 0.0
        %3645 = vmatpush2.msra.mxu0 0.0
        %3646 = vmatprep.subr.mxu0 0.0
        %3647 = vmatpush2.msra.mxu0 0.0
        %3648 = vmatprep.subr.mxu0 0.0
        %3649 = vmatpush2.msra.mxu0 0.0
        %3650 = vmatprep.subr.mxu0 0.0
        %3651 = vmatpush2.msra.mxu0 0.0
        %3652 = vmatprep.subr.mxu0 0.0
        %3653 = vmatpush2.msra.mxu0 0.0
        %3654 = vmatprep.mubr.f32.mxu0 0.0
        %3655 = vmatmul.mubr.f32.gmra.mxu0 %v3582
        %v3656 = vpop.f32.mrf.mxu0
        %v3657 = vadd.f32 0.0, %v3656
        %v3658 = vpop.f32.mrf.mxu0
        %v3659 = vadd.f32 0.0, %v3658
        %3660 = vmatprep.mubr.f32.mxu0 0.0
        %3661 = vmatmul.mubr.f32.gmra.mxu0 %v3585
        %v3662 = vpop.f32.mrf.mxu0
        %v3663 = vadd.f32 0.0, %v3662
        %v3664 = vpop.f32.mrf.mxu0
        %v3665 = vadd.f32 0.0, %v3664
        %3666 = vmatprep.mubr.f32.mxu0 0.0
        %3667 = vmatmul.mubr.f32.gmra.mxu0 %v3588
        %v3668 = vpop.f32.mrf.mxu0
        %v3669 = vadd.f32 0.0, %v3668
        %v3670 = vpop.f32.mrf.mxu0
        %v3671 = vadd.f32 0.0, %v3670
        %3672 = vdwg.mxu0
        %v3673 = vmax.f32 %v3562, %v3657
        %v3674 = vmax.f32 %v3564, %v3659
        %v3675 = vmax.f32 %v3568, %v3663
        %v3676 = vmax.f32 %v3570, %v3665
        %v3677 = vmax.f32 %v3574, %v3669
        %v3678 = vmax.f32 %v3576, %v3671
        %v3679 = vld [vmem:[%s11] sm:$0xff]
        %v3680 = vld [vmem:[%s11 + $0x8] sm:$0xff]
        %v3681 = vld [vmem:[%s11 + $0x10] sm:$0xff]
        %v3682 = vld [vmem:[%s11 + $0x18] sm:$0xff]
        %v3683 = vld [vmem:[%s11 + $0x20] sm:$0xff]
        %v3684 = vld [vmem:[%s11 + $0x28] sm:$0xff]
        %v3685 = vld [vmem:[%s11 + $0x30] sm:$0xff]
        %v3686 = vld [vmem:[%s11 + $0x38] sm:$0xff]
        %v3687 = vld [vmem:[%s11 + $0x40] sm:$0xff]
        %v3688 = vld [vmem:[%s11 + $0x48] sm:$0xff]
        %v3689 = vld [vmem:[%s11 + $0x50] sm:$0xff]
        %v3690 = vld [vmem:[%s11 + $0x58] sm:$0xff]
        %v3691 = vld [vmem:[%s11 + $0x60] sm:$0xff]
        %v3692 = vld [vmem:[%s11 + $0x68] sm:$0xff]
        %v3693 = vld [vmem:[%s11 + $0x70] sm:$0xff]
        %v3694 = vld [vmem:[%s11 + $0x78] sm:$0xff]
        %v3695 = vld [vmem:[%s11 + $0x80] sm:$0xff]
        %v3696 = vld [vmem:[%s11 + $0x88] sm:$0xff]
        %v3697 = vld [vmem:[%s11 + $0x90] sm:$0xff]
        %v3698 = vld [vmem:[%s11 + $0x98] sm:$0xff]
        %vm3699 = vcmask 261120
        %v3701 = vsel %vm3699, %v3674, 0
        %v3704 = vsel %vm3699, %v3676, 0
        %v3707 = vsel %vm3699, %v3678, 0
        %3709 = vmatprep.subr.mxu0 0.0
        %3710 = vmatpush1.msra.mxu0 %v3694
        %3711 = vmatprep.subr.mxu0 0.0
        %3712 = vmatpush1.msra.mxu0 %v3693
        %3713 = vmatprep.subr.mxu0 0.0
        %3714 = vmatpush1.msra.mxu0 %v3692
        %3715 = vmatprep.subr.mxu0 0.0
        %3716 = vmatpush1.msra.mxu0 %v3691
        %3717 = vmatprep.subr.mxu0 0.0
        %3718 = vmatpush1.msra.mxu0 %v3690
        %3719 = vmatprep.subr.mxu0 0.0
        %3720 = vmatpush1.msra.mxu0 %v3689
        %3721 = vmatprep.subr.mxu0 0.0
        %3722 = vmatpush1.msra.mxu0 %v3688
        %3723 = vmatprep.subr.mxu0 0.0
        %3724 = vmatpush1.msra.mxu0 %v3687
        %3725 = vmatprep.subr.mxu0 0.0
        %3726 = vmatpush1.msra.mxu0 %v3686
        %3727 = vmatprep.subr.mxu0 0.0
        %3728 = vmatpush1.msra.mxu0 %v3685
        %3729 = vmatprep.subr.mxu0 0.0
        %3730 = vmatpush1.msra.mxu0 %v3684
        %3731 = vmatprep.subr.mxu0 0.0
        %3732 = vmatpush1.msra.mxu0 %v3683
        %3733 = vmatprep.subr.mxu0 0.0
        %3734 = vmatpush1.msra.mxu0 %v3682
        %3735 = vmatprep.subr.mxu0 0.0
        %3736 = vmatpush1.msra.mxu0 %v3681
        %3737 = vmatprep.subr.mxu0 0.0
        %3738 = vmatpush1.msra.mxu0 %v3680
        %3739 = vmatprep.subr.mxu0 0.0
        %3740 = vmatpush1.msra.mxu0 %v3679
        %3741 = vmatprep.subr.mxu0 0.0
        %3742 = vmatpush2.msra.mxu0 0.0
        %3743 = vmatprep.subr.mxu0 0.0
        %3744 = vmatpush2.msra.mxu0 0.0
        %3745 = vmatprep.subr.mxu0 0.0
        %3746 = vmatpush2.msra.mxu0 0.0
        %3747 = vmatprep.subr.mxu0 0.0
        %3748 = vmatpush2.msra.mxu0 0.0
        %3749 = vmatprep.subr.mxu0 0.0
        %3750 = vmatpush2.msra.mxu0 0.0
        %3751 = vmatprep.subr.mxu0 0.0
        %3752 = vmatpush2.msra.mxu0 0.0
        %3753 = vmatprep.subr.mxu0 0.0
        %3754 = vmatpush2.msra.mxu0 0.0
        %3755 = vmatprep.subr.mxu0 0.0
        %3756 = vmatpush2.msra.mxu0 0.0
        %3757 = vmatprep.subr.mxu0 0.0
        %3758 = vmatpush2.msra.mxu0 0.0
        %3759 = vmatprep.subr.mxu0 0.0
        %3760 = vmatpush2.msra.mxu0 0.0
        %3761 = vmatprep.subr.mxu0 0.0
        %3762 = vmatpush2.msra.mxu0 0.0
        %3763 = vmatprep.subr.mxu0 0.0
        %3764 = vmatpush2.msra.mxu0 0.0
        %3765 = vmatprep.subr.mxu0 0.0
        %3766 = vmatpush2.msra.mxu0 %v3698
        %3767 = vmatprep.subr.mxu0 0.0
        %3768 = vmatpush2.msra.mxu0 %v3697
        %3769 = vmatprep.subr.mxu0 0.0
        %3770 = vmatpush2.msra.mxu0 %v3696
        %3771 = vmatprep.subr.mxu0 0.0
        %3772 = vmatpush2.msra.mxu0 %v3695
        %3773 = vmatprep.mubr.f32.mxu0 %v3701
        %3774 = vmatmul.mubr.f32.gmra.mxu0 %v3673
        %v3775 = vpop.f32.mrf.mxu0
        %v3776 = vadd.f32 0.0, %v3775
        %v3777 = vpop.f32.mrf.mxu0
        %3778 = vmatprep.mubr.f32.mxu0 %v3704
        %3779 = vmatmul.mubr.f32.gmra.mxu0 %v3675
        %v3780 = vpop.f32.mrf.mxu0
        %v3781 = vadd.f32 0.0, %v3780
        %v3782 = vpop.f32.mrf.mxu0
        %3783 = vmatprep.mubr.f32.mxu0 %v3707
        %3784 = vmatmul.mubr.f32.gmra.mxu0 %v3677
        %v3785 = vpop.f32.mrf.mxu0
        %v3786 = vadd.f32 0.0, %v3785
        %v3787 = vpop.f32.mrf.mxu0
        %3788 = vdwg.mxu0
        %v3789 = vld [vmem:[%s12] sm:$0xff]
        %v3790 = vld [vmem:[%s12 + $0x8] sm:$0xff]
        %v3791 = vld [vmem:[%s12 + $0x10] sm:$0xff]
        %v3792 = vld [vmem:[%s12 + $0x18] sm:$0xff]
        %v3793 = vld [vmem:[%s12 + $0x20] sm:$0xff]
        %v3794 = vld [vmem:[%s12 + $0x28] sm:$0xff]
        %v3795 = vld [vmem:[%s12 + $0x30] sm:$0xff]
        %v3796 = vld [vmem:[%s12 + $0x38] sm:$0xff]
        %v3797 = vld [vmem:[%s12 + $0x40] sm:$0xff]
        %v3798 = vld [vmem:[%s12 + $0x48] sm:$0xff]
        %v3799 = vld [vmem:[%s12 + $0x50] sm:$0xff]
        %v3800 = vld [vmem:[%s12 + $0x58] sm:$0xff]
        %v3801 = vld [vmem:[%s12 + $0x60] sm:$0xff]
        %v3802 = vld [vmem:[%s12 + $0x68] sm:$0xff]
        %v3803 = vld [vmem:[%s12 + $0x70] sm:$0xff]
        %v3804 = vld [vmem:[%s12 + $0x78] sm:$0xff]
        %v3805 = vld [vmem:[%s12 + $0x80] sm:$0xff]
        %v3806 = vld [vmem:[%s12 + $0x88] sm:$0xff]
        %v3807 = vld [vmem:[%s12 + $0x90] sm:$0xff]
        %v3808 = vld [vmem:[%s12 + $0x98] sm:$0xff]
        %3809 = vmatprep.subr.mxu0 0.0
        %3810 = vmatpush1.msra.mxu0 %v3804
        %3811 = vmatprep.subr.mxu0 0.0
        %3812 = vmatpush1.msra.mxu0 %v3803
        %3813 = vmatprep.subr.mxu0 0.0
        %3814 = vmatpush1.msra.mxu0 %v3802
        %3815 = vmatprep.subr.mxu0 0.0
        %3816 = vmatpush1.msra.mxu0 %v3801
        %3817 = vmatprep.subr.mxu0 0.0
        %3818 = vmatpush1.msra.mxu0 %v3800
        %3819 = vmatprep.subr.mxu0 0.0
        %3820 = vmatpush1.msra.mxu0 %v3799
        %3821 = vmatprep.subr.mxu0 0.0
        %3822 = vmatpush1.msra.mxu0 %v3798
        %3823 = vmatprep.subr.mxu0 0.0
        %3824 = vmatpush1.msra.mxu0 %v3797
        %3825 = vmatprep.subr.mxu0 0.0
        %3826 = vmatpush1.msra.mxu0 %v3796
        %3827 = vmatprep.subr.mxu0 0.0
        %3828 = vmatpush1.msra.mxu0 %v3795
        %3829 = vmatprep.subr.mxu0 0.0
        %3830 = vmatpush1.msra.mxu0 %v3794
        %3831 = vmatprep.subr.mxu0 0.0
        %3832 = vmatpush1.msra.mxu0 %v3793
        %3833 = vmatprep.subr.mxu0 0.0
        %3834 = vmatpush1.msra.mxu0 %v3792
        %3835 = vmatprep.subr.mxu0 0.0
        %3836 = vmatpush1.msra.mxu0 %v3791
        %3837 = vmatprep.subr.mxu0 0.0
        %3838 = vmatpush1.msra.mxu0 %v3790
        %3839 = vmatprep.subr.mxu0 0.0
        %3840 = vmatpush1.msra.mxu0 %v3789
        %3841 = vmatprep.subr.mxu0 0.0
        %3842 = vmatpush2.msra.mxu0 0.0
        %3843 = vmatprep.subr.mxu0 0.0
        %3844 = vmatpush2.msra.mxu0 0.0
        %3845 = vmatprep.subr.mxu0 0.0
        %3846 = vmatpush2.msra.mxu0 0.0
        %3847 = vmatprep.subr.mxu0 0.0
        %3848 = vmatpush2.msra.mxu0 0.0
        %3849 = vmatprep.subr.mxu0 0.0
        %3850 = vmatpush2.msra.mxu0 0.0
        %3851 = vmatprep.subr.mxu0 0.0
        %3852 = vmatpush2.msra.mxu0 0.0
        %3853 = vmatprep.subr.mxu0 0.0
        %3854 = vmatpush2.msra.mxu0 0.0
        %3855 = vmatprep.subr.mxu0 0.0
        %3856 = vmatpush2.msra.mxu0 0.0
        %3857 = vmatprep.subr.mxu0 0.0
        %3858 = vmatpush2.msra.mxu0 0.0
        %3859 = vmatprep.subr.mxu0 0.0
        %3860 = vmatpush2.msra.mxu0 0.0
        %3861 = vmatprep.subr.mxu0 0.0
        %3862 = vmatpush2.msra.mxu0 0.0
        %3863 = vmatprep.subr.mxu0 0.0
        %3864 = vmatpush2.msra.mxu0 0.0
        %3865 = vmatprep.subr.mxu0 0.0
        %3866 = vmatpush2.msra.mxu0 %v3808
        %3867 = vmatprep.subr.mxu0 0.0
        %3868 = vmatpush2.msra.mxu0 %v3807
        %3869 = vmatprep.subr.mxu0 0.0
        %3870 = vmatpush2.msra.mxu0 %v3806
        %3871 = vmatprep.subr.mxu0 0.0
        %3872 = vmatpush2.msra.mxu0 %v3805
        %3873 = vmatprep.mubr.f32.mxu0 %v3701
        %3874 = vmatmul.mubr.f32.gmra.mxu0 %v3673
        %v3875 = vpop.f32.mrf.mxu0
        %v3876 = vadd.f32 0.0, %v3875
        %v3877 = vpop.f32.mrf.mxu0
        %3878 = vmatprep.mubr.f32.mxu0 %v3704
        %3879 = vmatmul.mubr.f32.gmra.mxu0 %v3675
        %v3880 = vpop.f32.mrf.mxu0
        %v3881 = vadd.f32 0.0, %v3880
        %v3882 = vpop.f32.mrf.mxu0
        %3883 = vmatprep.mubr.f32.mxu0 %v3707
        %3884 = vmatmul.mubr.f32.gmra.mxu0 %v3677
        %v3885 = vpop.f32.mrf.mxu0
        %v3886 = vadd.f32 0.0, %v3885
        %v3887 = vpop.f32.mrf.mxu0
        %3888 = vdwg.mxu0
        %v3889 = vmax.f32 %v3776, %v3876
        %v3890 = vmax.f32 %v3781, %v3881
        %v3891 = vmax.f32 %v3786, %v3886
        %vm3892 = vcmask 654336
        %3893 = vst.msk [vmem:[#allocation4] sm:$0xff] %vm3892, %v3889
        %3894 = vst.msk [vmem:[#allocation4 + $0x8] sm:$0xff] %vm3892, %v3890
        %vm3895 = vcmask 650240
        %3896 = vst.msk [vmem:[#allocation4 + $0x10] sm:$0xf] %vm3895, %v3891
        %v3897 = vld [vmem:[#allocation4] sm:$0xf]
        %v3898 = vld [vmem:[%s13] sm:$0xff]
        %v3899 = vld [vmem:[%s13 + $0x8] sm:$0xff]
        %v3900 = vld [vmem:[%s13 + $0x10] sm:$0xff]
        %v3901 = vld [vmem:[%s13 + $0x18] sm:$0xff]
        %v3902 = vld [vmem:[%s13 + $0x20] sm:$0xff]
        %v3903 = vld [vmem:[%s13 + $0x28] sm:$0xff]
        %v3904 = vld [vmem:[%s13 + $0x30] sm:$0xff]
        %v3905 = vld [vmem:[%s13 + $0x38] sm:$0xff]
        %v3906 = vld [vmem:[%s13 + $0x40] sm:$0xff]
        %v3907 = vld [vmem:[%s13 + $0x48] sm:$0xff]
        %v3908 = vld [vmem:[#allocation4 + $0x4] sm:$0xf]
        %s3909 = scalar_lea.vmem %s13, 80
        %v3910 = vld [vmem:[%s3909] sm:$0xff]
        %v3911 = vld [vmem:[%s3909 + $0x8] sm:$0xff]
        %v3912 = vld [vmem:[%s3909 + $0x10] sm:$0xff]
        %v3913 = vld [vmem:[%s3909 + $0x18] sm:$0xff]
        %v3914 = vld [vmem:[%s3909 + $0x20] sm:$0xff]
        %v3915 = vld [vmem:[%s3909 + $0x28] sm:$0xff]
        %v3916 = vld [vmem:[%s3909 + $0x30] sm:$0xff]
        %v3917 = vld [vmem:[%s3909 + $0x38] sm:$0xff]
        %v3918 = vld [vmem:[%s3909 + $0x40] sm:$0xff]
        %v3919 = vld [vmem:[%s3909 + $0x48] sm:$0xff]
        %v3921 = vsel %vm3892, %v3908, 0
        %3923 = vmatprep.subr.mxu0 0.0
        %3924 = vmatpush1.msra.mxu0 0.0
        %3925 = vmatprep.subr.mxu0 0.0
        %3926 = vmatpush1.msra.mxu0 0.0
        %3927 = vmatprep.subr.mxu0 0.0
        %3928 = vmatpush1.msra.mxu0 0.0
        %3929 = vmatprep.subr.mxu0 0.0
        %3930 = vmatpush1.msra.mxu0 0.0
        %3931 = vmatprep.subr.mxu0 0.0
        %3932 = vmatpush1.msra.mxu0 0.0
        %3933 = vmatprep.subr.mxu0 0.0
        %3934 = vmatpush1.msra.mxu0 0.0
        %3935 = vmatprep.subr.mxu0 0.0
        %3936 = vmatpush1.msra.mxu0 %v3919
        %3937 = vmatprep.subr.mxu0 0.0
        %3938 = vmatpush1.msra.mxu0 %v3918
        %3939 = vmatprep.subr.mxu0 0.0
        %3940 = vmatpush1.msra.mxu0 %v3917
        %3941 = vmatprep.subr.mxu0 0.0
        %3942 = vmatpush1.msra.mxu0 %v3916
        %3943 = vmatprep.subr.mxu0 0.0
        %3944 = vmatpush1.msra.mxu0 %v3915
        %3945 = vmatprep.subr.mxu0 0.0
        %3946 = vmatpush1.msra.mxu0 %v3914
        %3947 = vmatprep.subr.mxu0 0.0
        %3948 = vmatpush1.msra.mxu0 %v3913
        %3949 = vmatprep.subr.mxu0 0.0
        %3950 = vmatpush1.msra.mxu0 %v3912
        %3951 = vmatprep.subr.mxu0 0.0
        %3952 = vmatpush1.msra.mxu0 %v3911
        %3953 = vmatprep.subr.mxu0 0.0
        %3954 = vmatpush1.msra.mxu0 %v3910
        %3955 = vmatprep.subr.mxu0 0.0
        %3956 = vmatpush2.msra.mxu0 0.0
        %3957 = vmatprep.subr.mxu0 0.0
        %3958 = vmatpush2.msra.mxu0 0.0
        %3959 = vmatprep.subr.mxu0 0.0
        %3960 = vmatpush2.msra.mxu0 0.0
        %3961 = vmatprep.subr.mxu0 0.0
        %3962 = vmatpush2.msra.mxu0 0.0
        %3963 = vmatprep.subr.mxu0 0.0
        %3964 = vmatpush2.msra.mxu0 0.0
        %3965 = vmatprep.subr.mxu0 0.0
        %3966 = vmatpush2.msra.mxu0 0.0
        %3967 = vmatprep.subr.mxu0 0.0
        %3968 = vmatpush2.msra.mxu0 0.0
        %3969 = vmatprep.subr.mxu0 0.0
        %3970 = vmatpush2.msra.mxu0 0.0
        %3971 = vmatprep.subr.mxu0 0.0
        %3972 = vmatpush2.msra.mxu0 0.0
        %3973 = vmatprep.subr.mxu0 0.0
        %3974 = vmatpush2.msra.mxu0 0.0
        %3975 = vmatprep.subr.mxu0 0.0
        %3976 = vmatpush2.msra.mxu0 0.0
        %3977 = vmatprep.subr.mxu0 0.0
        %3978 = vmatpush2.msra.mxu0 0.0
        %3979 = vmatprep.subr.mxu0 0.0
        %3980 = vmatpush2.msra.mxu0 0.0
        %3981 = vmatprep.subr.mxu0 0.0
        %3982 = vmatpush2.msra.mxu0 0.0
        %3983 = vmatprep.subr.mxu0 0.0
        %3984 = vmatpush2.msra.mxu0 0.0
        %3985 = vmatprep.subr.mxu0 0.0
        %3986 = vmatpush2.msra.mxu0 0.0
        %3987 = vmatprep.mubr.f32.mxu0 0.0
        %3988 = vmatmul.mubr.f32.gmra.mxu0 %v3921
        %v3989 = vpop.f32.mrf.mxu0
        %v3990 = vadd.f32 0.0, %v3989
        %v3991 = vpop.f32.mrf.mxu0
        %3992 = vdwg.mxu0
        %v3994 = vsel %vm3892, %v3897, 0
        %3996 = vmatprep.subr.mxu0 0.0
        %3997 = vmatpush1.msra.mxu0 0.0
        %3998 = vmatprep.subr.mxu0 0.0
        %3999 = vmatpush1.msra.mxu0 0.0
        %4000 = vmatprep.subr.mxu0 0.0
        %4001 = vmatpush1.msra.mxu0 0.0
        %4002 = vmatprep.subr.mxu0 0.0
        %4003 = vmatpush1.msra.mxu0 0.0
        %4004 = vmatprep.subr.mxu0 0.0
        %4005 = vmatpush1.msra.mxu0 0.0
        %4006 = vmatprep.subr.mxu0 0.0
        %4007 = vmatpush1.msra.mxu0 0.0
        %4008 = vmatprep.subr.mxu0 0.0
        %4009 = vmatpush1.msra.mxu0 %v3907
        %4010 = vmatprep.subr.mxu0 0.0
        %4011 = vmatpush1.msra.mxu0 %v3906
        %4012 = vmatprep.subr.mxu0 0.0
        %4013 = vmatpush1.msra.mxu0 %v3905
        %4014 = vmatprep.subr.mxu0 0.0
        %4015 = vmatpush1.msra.mxu0 %v3904
        %4016 = vmatprep.subr.mxu0 0.0
        %4017 = vmatpush1.msra.mxu0 %v3903
        %4018 = vmatprep.subr.mxu0 0.0
        %4019 = vmatpush1.msra.mxu0 %v3902
        %4020 = vmatprep.subr.mxu0 0.0
        %4021 = vmatpush1.msra.mxu0 %v3901
        %4022 = vmatprep.subr.mxu0 0.0
        %4023 = vmatpush1.msra.mxu0 %v3900
        %4024 = vmatprep.subr.mxu0 0.0
        %4025 = vmatpush1.msra.mxu0 %v3899
        %4026 = vmatprep.subr.mxu0 0.0
        %4027 = vmatpush1.msra.mxu0 %v3898
        %4028 = vmatprep.subr.mxu0 0.0
        %4029 = vmatpush2.msra.mxu0 0.0
        %4030 = vmatprep.subr.mxu0 0.0
        %4031 = vmatpush2.msra.mxu0 0.0
        %4032 = vmatprep.subr.mxu0 0.0
        %4033 = vmatpush2.msra.mxu0 0.0
        %4034 = vmatprep.subr.mxu0 0.0
        %4035 = vmatpush2.msra.mxu0 0.0
        %4036 = vmatprep.subr.mxu0 0.0
        %4037 = vmatpush2.msra.mxu0 0.0
        %4038 = vmatprep.subr.mxu0 0.0
        %4039 = vmatpush2.msra.mxu0 0.0
        %4040 = vmatprep.subr.mxu0 0.0
        %4041 = vmatpush2.msra.mxu0 0.0
        %4042 = vmatprep.subr.mxu0 0.0
        %4043 = vmatpush2.msra.mxu0 0.0
        %4044 = vmatprep.subr.mxu0 0.0
        %4045 = vmatpush2.msra.mxu0 0.0
        %4046 = vmatprep.subr.mxu0 0.0
        %4047 = vmatpush2.msra.mxu0 0.0
        %4048 = vmatprep.subr.mxu0 0.0
        %4049 = vmatpush2.msra.mxu0 0.0
        %4050 = vmatprep.subr.mxu0 0.0
        %4051 = vmatpush2.msra.mxu0 0.0
        %4052 = vmatprep.subr.mxu0 0.0
        %4053 = vmatpush2.msra.mxu0 0.0
        %4054 = vmatprep.subr.mxu0 0.0
        %4055 = vmatpush2.msra.mxu0 0.0
        %4056 = vmatprep.subr.mxu0 0.0
        %4057 = vmatpush2.msra.mxu0 0.0
        %4058 = vmatprep.subr.mxu0 0.0
        %4059 = vmatpush2.msra.mxu0 0.0
        %4060 = vmatprep.mubr.f32.mxu0 0.0
        %4061 = vmatmul.mubr.f32.gmra.mxu0 %v3994
        %v4062 = vpop.f32.mrf.mxu0
        %v4063 = vadd.f32 %v3990, %v4062
        %v4064 = vpop.f32.mrf.mxu0
        %4065 = vdwg.mxu0
        %v4066 = vld [vmem:[#allocation4 + $0x8] sm:$0xf]
        %s4067 = scalar_lea.vmem %s13, 160
        %v4068 = vld [vmem:[%s4067] sm:$0xff]
        %v4069 = vld [vmem:[%s4067 + $0x8] sm:$0xff]
        %v4070 = vld [vmem:[%s4067 + $0x10] sm:$0xff]
        %v4071 = vld [vmem:[%s4067 + $0x18] sm:$0xff]
        %v4072 = vld [vmem:[%s4067 + $0x20] sm:$0xff]
        %v4073 = vld [vmem:[%s4067 + $0x28] sm:$0xff]
        %v4074 = vld [vmem:[%s4067 + $0x30] sm:$0xff]
        %v4075 = vld [vmem:[%s4067 + $0x38] sm:$0xff]
        %v4076 = vld [vmem:[%s4067 + $0x40] sm:$0xff]
        %v4077 = vld [vmem:[%s4067 + $0x48] sm:$0xff]
        %v4079 = vsel %vm3892, %v4066, 0
        %4081 = vmatprep.subr.mxu0 0.0
        %4082 = vmatpush1.msra.mxu0 0.0
        %4083 = vmatprep.subr.mxu0 0.0
        %4084 = vmatpush1.msra.mxu0 0.0
        %4085 = vmatprep.subr.mxu0 0.0
        %4086 = vmatpush1.msra.mxu0 0.0
        %4087 = vmatprep.subr.mxu0 0.0
        %4088 = vmatpush1.msra.mxu0 0.0
        %4089 = vmatprep.subr.mxu0 0.0
        %4090 = vmatpush1.msra.mxu0 0.0
        %4091 = vmatprep.subr.mxu0 0.0
        %4092 = vmatpush1.msra.mxu0 0.0
        %4093 = vmatprep.subr.mxu0 0.0
        %4094 = vmatpush1.msra.mxu0 %v4077
        %4095 = vmatprep.subr.mxu0 0.0
        %4096 = vmatpush1.msra.mxu0 %v4076
        %4097 = vmatprep.subr.mxu0 0.0
        %4098 = vmatpush1.msra.mxu0 %v4075
        %4099 = vmatprep.subr.mxu0 0.0
        %4100 = vmatpush1.msra.mxu0 %v4074
        %4101 = vmatprep.subr.mxu0 0.0
        %4102 = vmatpush1.msra.mxu0 %v4073
        %4103 = vmatprep.subr.mxu0 0.0
        %4104 = vmatpush1.msra.mxu0 %v4072
        %4105 = vmatprep.subr.mxu0 0.0
        %4106 = vmatpush1.msra.mxu0 %v4071
        %4107 = vmatprep.subr.mxu0 0.0
        %4108 = vmatpush1.msra.mxu0 %v4070
        %4109 = vmatprep.subr.mxu0 0.0
        %4110 = vmatpush1.msra.mxu0 %v4069
        %4111 = vmatprep.subr.mxu0 0.0
        %4112 = vmatpush1.msra.mxu0 %v4068
        %4113 = vmatprep.subr.mxu0 0.0
        %4114 = vmatpush2.msra.mxu0 0.0
        %4115 = vmatprep.subr.mxu0 0.0
        %4116 = vmatpush2.msra.mxu0 0.0
        %4117 = vmatprep.subr.mxu0 0.0
        %4118 = vmatpush2.msra.mxu0 0.0
        %4119 = vmatprep.subr.mxu0 0.0
        %4120 = vmatpush2.msra.mxu0 0.0
        %4121 = vmatprep.subr.mxu0 0.0
        %4122 = vmatpush2.msra.mxu0 0.0
        %4123 = vmatprep.subr.mxu0 0.0
        %4124 = vmatpush2.msra.mxu0 0.0
        %4125 = vmatprep.subr.mxu0 0.0
        %4126 = vmatpush2.msra.mxu0 0.0
        %4127 = vmatprep.subr.mxu0 0.0
        %4128 = vmatpush2.msra.mxu0 0.0
        %4129 = vmatprep.subr.mxu0 0.0
        %4130 = vmatpush2.msra.mxu0 0.0
        %4131 = vmatprep.subr.mxu0 0.0
        %4132 = vmatpush2.msra.mxu0 0.0
        %4133 = vmatprep.subr.mxu0 0.0
        %4134 = vmatpush2.msra.mxu0 0.0
        %4135 = vmatprep.subr.mxu0 0.0
        %4136 = vmatpush2.msra.mxu0 0.0
        %4137 = vmatprep.subr.mxu0 0.0
        %4138 = vmatpush2.msra.mxu0 0.0
        %4139 = vmatprep.subr.mxu0 0.0
        %4140 = vmatpush2.msra.mxu0 0.0
        %4141 = vmatprep.subr.mxu0 0.0
        %4142 = vmatpush2.msra.mxu0 0.0
        %4143 = vmatprep.subr.mxu0 0.0
        %4144 = vmatpush2.msra.mxu0 0.0
        %4145 = vmatprep.mubr.f32.mxu0 0.0
        %4146 = vmatmul.mubr.f32.gmra.mxu0 %v4079
        %v4147 = vpop.f32.mrf.mxu0
        %v4148 = vadd.f32 0.0, %v4147
        %v4149 = vpop.f32.mrf.mxu0
        %4150 = vdwg.mxu0
        %v4151 = vadd.f32 %v4063, %v4148
        %v4152 = vld [vmem:[#allocation4 + $0xc] sm:$0xf]
        %s4153 = scalar_lea.vmem %s13, 240
        %v4154 = vld [vmem:[%s4153] sm:$0xff]
        %v4155 = vld [vmem:[%s4153 + $0x8] sm:$0xff]
        %v4156 = vld [vmem:[%s4153 + $0x10] sm:$0xff]
        %v4157 = vld [vmem:[%s4153 + $0x18] sm:$0xff]
        %v4158 = vld [vmem:[%s4153 + $0x20] sm:$0xff]
        %v4159 = vld [vmem:[%s4153 + $0x28] sm:$0xff]
        %v4160 = vld [vmem:[%s4153 + $0x30] sm:$0xff]
        %v4161 = vld [vmem:[%s4153 + $0x38] sm:$0xff]
        %v4162 = vld [vmem:[%s4153 + $0x40] sm:$0xff]
        %v4163 = vld [vmem:[%s4153 + $0x48] sm:$0xff]
        %v4165 = vsel %vm3892, %v4152, 0
        %4167 = vmatprep.subr.mxu0 0.0
        %4168 = vmatpush1.msra.mxu0 0.0
        %4169 = vmatprep.subr.mxu0 0.0
        %4170 = vmatpush1.msra.mxu0 0.0
        %4171 = vmatprep.subr.mxu0 0.0
        %4172 = vmatpush1.msra.mxu0 0.0
        %4173 = vmatprep.subr.mxu0 0.0
        %4174 = vmatpush1.msra.mxu0 0.0
        %4175 = vmatprep.subr.mxu0 0.0
        %4176 = vmatpush1.msra.mxu0 0.0
        %4177 = vmatprep.subr.mxu0 0.0
        %4178 = vmatpush1.msra.mxu0 0.0
        %4179 = vmatprep.subr.mxu0 0.0
        %4180 = vmatpush1.msra.mxu0 %v4163
        %4181 = vmatprep.subr.mxu0 0.0
        %4182 = vmatpush1.msra.mxu0 %v4162
        %4183 = vmatprep.subr.mxu0 0.0
        %4184 = vmatpush1.msra.mxu0 %v4161
        %4185 = vmatprep.subr.mxu0 0.0
        %4186 = vmatpush1.msra.mxu0 %v4160
        %4187 = vmatprep.subr.mxu0 0.0
        %4188 = vmatpush1.msra.mxu0 %v4159
        %4189 = vmatprep.subr.mxu0 0.0
        %4190 = vmatpush1.msra.mxu0 %v4158
        %4191 = vmatprep.subr.mxu0 0.0
        %4192 = vmatpush1.msra.mxu0 %v4157
        %4193 = vmatprep.subr.mxu0 0.0
        %4194 = vmatpush1.msra.mxu0 %v4156
        %4195 = vmatprep.subr.mxu0 0.0
        %4196 = vmatpush1.msra.mxu0 %v4155
        %4197 = vmatprep.subr.mxu0 0.0
        %4198 = vmatpush1.msra.mxu0 %v4154
        %4199 = vmatprep.subr.mxu0 0.0
        %4200 = vmatpush2.msra.mxu0 0.0
        %4201 = vmatprep.subr.mxu0 0.0
        %4202 = vmatpush2.msra.mxu0 0.0
        %4203 = vmatprep.subr.mxu0 0.0
        %4204 = vmatpush2.msra.mxu0 0.0
        %4205 = vmatprep.subr.mxu0 0.0
        %4206 = vmatpush2.msra.mxu0 0.0
        %4207 = vmatprep.subr.mxu0 0.0
        %4208 = vmatpush2.msra.mxu0 0.0
        %4209 = vmatprep.subr.mxu0 0.0
        %4210 = vmatpush2.msra.mxu0 0.0
        %4211 = vmatprep.subr.mxu0 0.0
        %4212 = vmatpush2.msra.mxu0 0.0
        %4213 = vmatprep.subr.mxu0 0.0
        %4214 = vmatpush2.msra.mxu0 0.0
        %4215 = vmatprep.subr.mxu0 0.0
        %4216 = vmatpush2.msra.mxu0 0.0
        %4217 = vmatprep.subr.mxu0 0.0
        %4218 = vmatpush2.msra.mxu0 0.0
        %4219 = vmatprep.subr.mxu0 0.0
        %4220 = vmatpush2.msra.mxu0 0.0
        %4221 = vmatprep.subr.mxu0 0.0
        %4222 = vmatpush2.msra.mxu0 0.0
        %4223 = vmatprep.subr.mxu0 0.0
        %4224 = vmatpush2.msra.mxu0 0.0
        %4225 = vmatprep.subr.mxu0 0.0
        %4226 = vmatpush2.msra.mxu0 0.0
        %4227 = vmatprep.subr.mxu0 0.0
        %4228 = vmatpush2.msra.mxu0 0.0
        %4229 = vmatprep.subr.mxu0 0.0
        %4230 = vmatpush2.msra.mxu0 0.0
        %4231 = vmatprep.mubr.f32.mxu0 0.0
        %4232 = vmatmul.mubr.f32.gmra.mxu0 %v4165
        %v4233 = vpop.f32.mrf.mxu0
        %v4234 = vadd.f32 0.0, %v4233
        %v4235 = vpop.f32.mrf.mxu0
        %4236 = vdwg.mxu0
        %v4237 = vadd.f32 %v4151, %v4234
        %v4238 = vld [vmem:[#allocation4 + $0x10] sm:$0xf]
        %s4239 = scalar_lea.vmem %s13, 320
        %v4240 = vld [vmem:[%s4239] sm:$0xff]
        %v4241 = vld [vmem:[%s4239 + $0x8] sm:$0xff]
        %v4242 = vld [vmem:[%s4239 + $0x10] sm:$0xff]
        %v4243 = vld [vmem:[%s4239 + $0x18] sm:$0xff]
        %v4244 = vld [vmem:[%s4239 + $0x20] sm:$0xff]
        %v4245 = vld [vmem:[%s4239 + $0x28] sm:$0xff]
        %v4246 = vld [vmem:[%s4239 + $0x30] sm:$0xff]
        %v4247 = vld [vmem:[%s4239 + $0x38] sm:$0xff]
        %v4248 = vld [vmem:[%s4239 + $0x40] sm:$0xff]
        %v4249 = vld [vmem:[%s4239 + $0x48] sm:$0xff]
        %v4251 = vsel %vm3892, %v4238, 0
        %4253 = vmatprep.subr.mxu0 0.0
        %4254 = vmatpush1.msra.mxu0 0.0
        %4255 = vmatprep.subr.mxu0 0.0
        %4256 = vmatpush1.msra.mxu0 0.0
        %4257 = vmatprep.subr.mxu0 0.0
        %4258 = vmatpush1.msra.mxu0 0.0
        %4259 = vmatprep.subr.mxu0 0.0
        %4260 = vmatpush1.msra.mxu0 0.0
        %4261 = vmatprep.subr.mxu0 0.0
        %4262 = vmatpush1.msra.mxu0 0.0
        %4263 = vmatprep.subr.mxu0 0.0
        %4264 = vmatpush1.msra.mxu0 0.0
        %4265 = vmatprep.subr.mxu0 0.0
        %4266 = vmatpush1.msra.mxu0 %v4249
        %4267 = vmatprep.subr.mxu0 0.0
        %4268 = vmatpush1.msra.mxu0 %v4248
        %4269 = vmatprep.subr.mxu0 0.0
        %4270 = vmatpush1.msra.mxu0 %v4247
        %4271 = vmatprep.subr.mxu0 0.0
        %4272 = vmatpush1.msra.mxu0 %v4246
        %4273 = vmatprep.subr.mxu0 0.0
        %4274 = vmatpush1.msra.mxu0 %v4245
        %4275 = vmatprep.subr.mxu0 0.0
        %4276 = vmatpush1.msra.mxu0 %v4244
        %4277 = vmatprep.subr.mxu0 0.0
        %4278 = vmatpush1.msra.mxu0 %v4243
        %4279 = vmatprep.subr.mxu0 0.0
        %4280 = vmatpush1.msra.mxu0 %v4242
        %4281 = vmatprep.subr.mxu0 0.0
        %4282 = vmatpush1.msra.mxu0 %v4241
        %4283 = vmatprep.subr.mxu0 0.0
        %4284 = vmatpush1.msra.mxu0 %v4240
        %4285 = vmatprep.subr.mxu0 0.0
        %4286 = vmatpush2.msra.mxu0 0.0
        %4287 = vmatprep.subr.mxu0 0.0
        %4288 = vmatpush2.msra.mxu0 0.0
        %4289 = vmatprep.subr.mxu0 0.0
        %4290 = vmatpush2.msra.mxu0 0.0
        %4291 = vmatprep.subr.mxu0 0.0
        %4292 = vmatpush2.msra.mxu0 0.0
        %4293 = vmatprep.subr.mxu0 0.0
        %4294 = vmatpush2.msra.mxu0 0.0
        %4295 = vmatprep.subr.mxu0 0.0
        %4296 = vmatpush2.msra.mxu0 0.0
        %4297 = vmatprep.subr.mxu0 0.0
        %4298 = vmatpush2.msra.mxu0 0.0
        %4299 = vmatprep.subr.mxu0 0.0
        %4300 = vmatpush2.msra.mxu0 0.0
        %4301 = vmatprep.subr.mxu0 0.0
        %4302 = vmatpush2.msra.mxu0 0.0
        %4303 = vmatprep.subr.mxu0 0.0
        %4304 = vmatpush2.msra.mxu0 0.0
        %4305 = vmatprep.subr.mxu0 0.0
        %4306 = vmatpush2.msra.mxu0 0.0
        %4307 = vmatprep.subr.mxu0 0.0
        %4308 = vmatpush2.msra.mxu0 0.0
        %4309 = vmatprep.subr.mxu0 0.0
        %4310 = vmatpush2.msra.mxu0 0.0
        %4311 = vmatprep.subr.mxu0 0.0
        %4312 = vmatpush2.msra.mxu0 0.0
        %4313 = vmatprep.subr.mxu0 0.0
        %4314 = vmatpush2.msra.mxu0 0.0
        %4315 = vmatprep.subr.mxu0 0.0
        %4316 = vmatpush2.msra.mxu0 0.0
        %4317 = vmatprep.mubr.f32.mxu0 0.0
        %4318 = vmatmul.mubr.f32.gmra.mxu0 %v4251
        %v4319 = vpop.f32.mrf.mxu0
        %v4320 = vadd.f32 0.0, %v4319
        %v4321 = vpop.f32.mrf.mxu0
        %4322 = vdwg.mxu0
        %v4323 = vadd.f32 %v4237, %v4320
        %v4324 = vld [vmem:[%s14] sm:$0x1]
        %v4326 = vlaneseq
        %v4327 = vshrl.u32 %v4326, 7
        %v4328 = vsub.s32 0, %v4327
        %v4329 = vrot.slane %v4324, %v4328
        %v4331 = vadd.f32 %v4323, %v4329
        %v4332 = vmax.f32 %v4331, 0.0
        %v4333 = vld [vmem:[%s15] sm:$0xff]
        %v4334 = vld [vmem:[%s15 + $0x8] sm:$0xff]
        %v4335 = vld [vmem:[%s15 + $0x10] sm:$0xff]
        %v4336 = vld [vmem:[%s15 + $0x18] sm:$0xff]
        %v4337 = vld [vmem:[%s15 + $0x20] sm:$0xff]
        %v4338 = vld [vmem:[%s15 + $0x28] sm:$0xff]
        %v4339 = vld [vmem:[%s15 + $0x30] sm:$0xff]
        %v4340 = vld [vmem:[%s15 + $0x38] sm:$0xff]
        %v4341 = vld [vmem:[%s15 + $0x40] sm:$0xff]
        %v4342 = vld [vmem:[%s15 + $0x48] sm:$0xff]
        %v4343 = vld [vmem:[%s15 + $0x50] sm:$0xff]
        %v4344 = vld [vmem:[%s15 + $0x58] sm:$0xff]
        %v4345 = vld [vmem:[%s15 + $0x60] sm:$0xff]
        %v4346 = vld [vmem:[%s15 + $0x68] sm:$0xff]
        %v4347 = vld [vmem:[%s15 + $0x70] sm:$0xff]
        %v4348 = vld [vmem:[%s16] sm:$0x1]
        %v4350 = vlaneseq
        %v4351 = vshrl.u32 %v4350, 7
        %v4352 = vsub.s32 0, %v4351
        %v4353 = vrot.slane %v4348, %v4352
        %vm4355 = vcmask 982016
        %v4357 = vsel %vm4355, %v4332, 0
        %4359 = vmatprep.subr.mxu0 0.0
        %4360 = vmatpush1.msra.mxu0 0.0
        %4361 = vmatprep.subr.mxu0 0.0
        %4362 = vmatpush1.msra.mxu0 %v4347
        %4363 = vmatprep.subr.mxu0 0.0
        %4364 = vmatpush1.msra.mxu0 %v4346
        %4365 = vmatprep.subr.mxu0 0.0
        %4366 = vmatpush1.msra.mxu0 %v4345
        %4367 = vmatprep.subr.mxu0 0.0
        %4368 = vmatpush1.msra.mxu0 %v4344
        %4369 = vmatprep.subr.mxu0 0.0
        %4370 = vmatpush1.msra.mxu0 %v4343
        %4371 = vmatprep.subr.mxu0 0.0
        %4372 = vmatpush1.msra.mxu0 %v4342
        %4373 = vmatprep.subr.mxu0 0.0
        %4374 = vmatpush1.msra.mxu0 %v4341
        %4375 = vmatprep.subr.mxu0 0.0
        %4376 = vmatpush1.msra.mxu0 %v4340
        %4377 = vmatprep.subr.mxu0 0.0
        %4378 = vmatpush1.msra.mxu0 %v4339
        %4379 = vmatprep.subr.mxu0 0.0
        %4380 = vmatpush1.msra.mxu0 %v4338
        %4381 = vmatprep.subr.mxu0 0.0
        %4382 = vmatpush1.msra.mxu0 %v4337
        %4383 = vmatprep.subr.mxu0 0.0
        %4384 = vmatpush1.msra.mxu0 %v4336
        %4385 = vmatprep.subr.mxu0 0.0
        %4386 = vmatpush1.msra.mxu0 %v4335
        %4387 = vmatprep.subr.mxu0 0.0
        %4388 = vmatpush1.msra.mxu0 %v4334
        %4389 = vmatprep.subr.mxu0 0.0
        %4390 = vmatpush1.msra.mxu0 %v4333
        %4391 = vmatprep.subr.mxu0 0.0
        %4392 = vmatpush2.msra.mxu0 0.0
        %4393 = vmatprep.subr.mxu0 0.0
        %4394 = vmatpush2.msra.mxu0 0.0
        %4395 = vmatprep.subr.mxu0 0.0
        %4396 = vmatpush2.msra.mxu0 0.0
        %4397 = vmatprep.subr.mxu0 0.0
        %4398 = vmatpush2.msra.mxu0 0.0
        %4399 = vmatprep.subr.mxu0 0.0
        %4400 = vmatpush2.msra.mxu0 0.0
        %4401 = vmatprep.subr.mxu0 0.0
        %4402 = vmatpush2.msra.mxu0 0.0
        %4403 = vmatprep.subr.mxu0 0.0
        %4404 = vmatpush2.msra.mxu0 0.0
        %4405 = vmatprep.subr.mxu0 0.0
        %4406 = vmatpush2.msra.mxu0 0.0
        %4407 = vmatprep.subr.mxu0 0.0
        %4408 = vmatpush2.msra.mxu0 0.0
        %4409 = vmatprep.subr.mxu0 0.0
        %4410 = vmatpush2.msra.mxu0 0.0
        %4411 = vmatprep.subr.mxu0 0.0
        %4412 = vmatpush2.msra.mxu0 0.0
        %4413 = vmatprep.subr.mxu0 0.0
        %4414 = vmatpush2.msra.mxu0 0.0
        %4415 = vmatprep.subr.mxu0 0.0
        %4416 = vmatpush2.msra.mxu0 0.0
        %4417 = vmatprep.subr.mxu0 0.0
        %4418 = vmatpush2.msra.mxu0 0.0
        %4419 = vmatprep.subr.mxu0 0.0
        %4420 = vmatpush2.msra.mxu0 0.0
        %4421 = vmatprep.subr.mxu0 0.0
        %4422 = vmatpush2.msra.mxu0 0.0
        %4423 = vmatprep.mubr.f32.mxu0 0.0
        %4424 = vmatmul.mubr.f32.gmra.mxu0 %v4357
        %v4425 = vpop.f32.mrf.mxu0
        %v4426 = vadd.f32 %v4353, %v4425
        %v4427 = vpop.f32.mrf.mxu0
        %4428 = vdwg.mxu0
        %v4429 = vmax.f32 %v4426, 0.0
        %v4430 = vld [vmem:[%s17] sm:$0xff]
        %v4431 = vld [vmem:[%s17 + $0x8] sm:$0xff]
        %v4432 = vld [vmem:[%s17 + $0x10] sm:$0xff]
        %v4433 = vld [vmem:[%s17 + $0x18] sm:$0xff]
        %v4434 = vld [vmem:[%s17 + $0x20] sm:$0xff]
        %v4435 = vld [vmem:[%s17 + $0x28] sm:$0xff]
        %v4436 = vld [vmem:[%s17 + $0x30] sm:$0xff]
        %v4437 = vld [vmem:[%s17 + $0x38] sm:$0xff]
        %v4438 = vld [vmem:[%s17 + $0x40] sm:$0xff]
        %v4439 = vld [vmem:[%s17 + $0x48] sm:$0xff]
        %v4440 = vld [vmem:[%s17 + $0x50] sm:$0xf]
        %v4441 = vld [vmem:[%s18] sm:$0x1]
        %v4443 = vlaneseq
        %v4444 = vshrl.u32 %v4443, 7
        %v4445 = vsub.s32 0, %v4444
        %v4446 = vrot.slane %v4441, %v4445
        %v4449 = vsel %vm2571, %v4429, 0
        %v4452 = vsel %vm2660, %v4440, 0
        %4454 = vmatprep.subr.mxu0 0.0
        %4455 = vmatpush1.msra.mxu0 0.0
        %4456 = vmatprep.subr.mxu0 0.0
        %4457 = vmatpush1.msra.mxu0 0.0
        %4458 = vmatprep.subr.mxu0 0.0
        %4459 = vmatpush1.msra.mxu0 0.0
        %4460 = vmatprep.subr.mxu0 0.0
        %4461 = vmatpush1.msra.mxu0 0.0
        %4462 = vmatprep.subr.mxu0 0.0
        %4463 = vmatpush1.msra.mxu0 0.0
        %4464 = vmatprep.subr.mxu0 0.0
        %4465 = vmatpush1.msra.mxu0 %v4452
        %4466 = vmatprep.subr.mxu0 0.0
        %4467 = vmatpush1.msra.mxu0 %v4439
        %4468 = vmatprep.subr.mxu0 0.0
        %4469 = vmatpush1.msra.mxu0 %v4438
        %4470 = vmatprep.subr.mxu0 0.0
        %4471 = vmatpush1.msra.mxu0 %v4437
        %4472 = vmatprep.subr.mxu0 0.0
        %4473 = vmatpush1.msra.mxu0 %v4436
        %4474 = vmatprep.subr.mxu0 0.0
        %4475 = vmatpush1.msra.mxu0 %v4435
        %4476 = vmatprep.subr.mxu0 0.0
        %4477 = vmatpush1.msra.mxu0 %v4434
        %4478 = vmatprep.subr.mxu0 0.0
        %4479 = vmatpush1.msra.mxu0 %v4433
        %4480 = vmatprep.subr.mxu0 0.0
        %4481 = vmatpush1.msra.mxu0 %v4432
        %4482 = vmatprep.subr.mxu0 0.0
        %4483 = vmatpush1.msra.mxu0 %v4431
        %4484 = vmatprep.subr.mxu0 0.0
        %4485 = vmatpush1.msra.mxu0 %v4430
        %4486 = vmatprep.subr.mxu0 0.0
        %4487 = vmatpush2.msra.mxu0 0.0
        %4488 = vmatprep.subr.mxu0 0.0
        %4489 = vmatpush2.msra.mxu0 0.0
        %4490 = vmatprep.subr.mxu0 0.0
        %4491 = vmatpush2.msra.mxu0 0.0
        %4492 = vmatprep.subr.mxu0 0.0
        %4493 = vmatpush2.msra.mxu0 0.0
        %4494 = vmatprep.subr.mxu0 0.0
        %4495 = vmatpush2.msra.mxu0 0.0
        %4496 = vmatprep.subr.mxu0 0.0
        %4497 = vmatpush2.msra.mxu0 0.0
        %4498 = vmatprep.subr.mxu0 0.0
        %4499 = vmatpush2.msra.mxu0 0.0
        %4500 = vmatprep.subr.mxu0 0.0
        %4501 = vmatpush2.msra.mxu0 0.0
        %4502 = vmatprep.subr.mxu0 0.0
        %4503 = vmatpush2.msra.mxu0 0.0
        %4504 = vmatprep.subr.mxu0 0.0
        %4505 = vmatpush2.msra.mxu0 0.0
        %4506 = vmatprep.subr.mxu0 0.0
        %4507 = vmatpush2.msra.mxu0 0.0
        %4508 = vmatprep.subr.mxu0 0.0
        %4509 = vmatpush2.msra.mxu0 0.0
        %4510 = vmatprep.subr.mxu0 0.0
        %4511 = vmatpush2.msra.mxu0 0.0
        %4512 = vmatprep.subr.mxu0 0.0
        %4513 = vmatpush2.msra.mxu0 0.0
        %4514 = vmatprep.subr.mxu0 0.0
        %4515 = vmatpush2.msra.mxu0 0.0
        %4516 = vmatprep.subr.mxu0 0.0
        %4517 = vmatpush2.msra.mxu0 0.0
        %4518 = vmatprep.mubr.f32.mxu0 0.0
        %4519 = vmatmul.mubr.f32.gmra.mxu0 %v4449
        %v4520 = vpop.f32.mrf.mxu0
        %v4521 = vadd.f32 %v4446, %v4520
        %v4522 = vpop.f32.mrf.mxu0
        %4523 = vdwg.mxu0
        %4524 = vst [vmem:[%s596] sm:$0xf] %v4521
        %s4525 = sand.u32 %s445, 1
        %s4526 = scalar_lea.sflag [#allocation6], %s4525
        %s4527 = sand.u32 %s445, 1
        %s4528 = smul.addr %s4527, 4
        %s4529 = scalar_lea.vmem [#allocation5], %s4528
        // Predicated region
        $region97: #{net_forward_pallas.1} parent=95 // pred_check
          %p4530 = pneg %p455
        $region98: #{net_forward_pallas.1} parent=95 // pred_check_branch
          %4532 = sbr.rel (%p4530) target = $region100
        $region99: #{net_forward_pallas.1} parent=95 // pred_region
          %s4534 = ssub.s32 64, 64
          %4535 = vsyncadd %s4526, %s4534
          %s4536 = smul.addr %s33, 64
          %s4537 = scalar_lea.hbm %s19, %s4536
          %s4539 = sshll.u32 %s4529, 4
          %s4540 = int_to_ptr.vmem [resolvable:$true] %s4539
          %4542 = dma.vmem_to_hbm [thread:$0]  %s4540, 64, %s4537, %s4526
        $region100: #{net_forward_pallas.1} parent=95 // pred_fallthru
          _
      $region96: #{net_forward_pallas.1} parent=5 // pred_fallthru
        _
      %p4543 = scmp.le.s32.totalorder 2, %s28
      // Predicated region
      $region101: #{net_forward_pallas.1} parent=5 // pred_check
        %p4544 = pneg %p4543
      $region102: #{net_forward_pallas.1} parent=5 // pred_check_branch
        %4546 = sbr.rel (%p4544) target = $region104
      $region103: #{net_forward_pallas.1} parent=5 // pred_region
        %s4547 = ssub.s32 %s28, 2
        // Predicated region
        $region105: #{net_forward_pallas.1} parent=103 // pred_check
          %p4548 = pneg %p461
        $region106: #{net_forward_pallas.1} parent=103 // pred_check_branch
          %4550 = sbr.rel (%p4548) target = $region108
        $region107: #{net_forward_pallas.1} parent=103 // pred_region
          %s4551 = sand.u32 %s446, 1
          %s4552 = scalar_lea.sflag [#allocation6], %s4551
          %s4553 = sand.u32 %s446, 1
          %s4554 = smul.addr %s4553, 4
          %s4555 = scalar_lea.vmem [#allocation5], %s4554
          %4556 = dma.done %s4552, 64
        $region108: #{net_forward_pallas.1} parent=103 // pred_fallthru
          _
      $region104: #{net_forward_pallas.1} parent=5 // pred_fallthru
        _
    $region6: #{net_forward_pallas.1} parent=1 // loop_footer
      %s32 = sadd.s32 1, %s28
    $region7: #{net_forward_pallas.1} parent=1 // loop_footer_branch
      %27 = sbr.rel target = $region3
    $region8: #{net_forward_pallas.1} parent=1 // loop_exit
      _
    %4557 = vsyncpa [#allocation6], 1
    %s4558 = scalar_lea.sflag [#allocation6], 1
    %4559 = vsyncpa %s4558, 1

</llo_original>
